<compile_context>
chip_gen: v7x
topology: tpu7x:2x2x1
jax: 0.10.0
libtpu: 0.0.40
codegen_flags: <defaults>
</compile_context>

<pallas_src>
import functools

import jax
import jax.numpy as jnp
from jax.experimental import pallas as pl
from jax.experimental.pallas import tpu as pltpu

LANE = 128                     # pad feature dims to multiples of the lane width
MAX_TN = 512                   # max destination-node tile
MAX_TK = 1024                  # max source-node (reduction) tile
EPS = 0.0                      # GINConv learn_eps=False -> fixed eps = 0
VMEM_LIMIT = 48 * 1024 * 1024  # fits v7x (64 MiB) with headroom; fine on v5e/v6e
FUSED_RESIDENT_BUDGET = 24 * 1024 * 1024  # resident-bytes cap for the fused path


def _round_up(x, m):
    return (x + m - 1) // m * m


def _largest_tile(n, max_tile, unit=LANE):
    """Largest multiple of `unit` that divides n and is <= max_tile."""
    best = unit
    t = unit
    while t <= min(max_tile, n):
        if n % t == 0:
            best = t
        t += unit
    return best


def _pad_to(x, rows, cols):
    r, c = x.shape
    if r == rows and c == cols:
        return x
    return jnp.pad(x, ((0, rows - r), (0, cols - c)))


# ----------------------------------------------------------------------------
# Fused whole-forward kernel (small graphs: h stays resident in VMEM)
# ----------------------------------------------------------------------------
def _gin_fused_kernel(*refs, num_layers):
    """refs = (adj_0..adj_{L-1}, h0, w1_0, w2_0, ..., w1_{L-1}, w2_{L-1}, out)."""
    adj_refs = refs[:num_layers]
    h_ref = refs[num_layers]
    w_refs = refs[num_layers + 1: num_layers + 1 + 2 * num_layers]
    o_ref = refs[-1]

    h = h_ref[...]                                    # bf16, (Np, D0p)
    for l in range(num_layers):                       # static Python loop
        # int8 (0/1/2) adjacency with the (1+eps) self-term on the diagonal;
        # cast int8 -> f32 -> bf16 on the VPU (exact for these integer values).
        a = adj_refs[l][...].astype(jnp.float32).astype(jnp.bfloat16)
        agg = jnp.dot(a, h, preferred_element_type=jnp.float32)
        h1 = jnp.maximum(
            jnp.dot(agg.astype(jnp.bfloat16), w_refs[2 * l][...],
                    preferred_element_type=jnp.float32), 0.0)
        out = jnp.dot(h1.astype(jnp.bfloat16), w_refs[2 * l + 1][...],
                      preferred_element_type=jnp.float32)
        if l != num_layers - 1:
            out = jnp.maximum(out, 0.0)               # relu between layers
            h = out.astype(jnp.bfloat16)              # dropout: eval identity
        else:
            o_ref[...] = out.astype(o_ref.dtype)


def _gin_fused(adjs, h0, weights):
    n_layers = len(adjs)
    Np = h0.shape[0]
    d_out = weights[-1][1].shape[1]
    flat_w = [w for pair in weights for w in pair]
    inputs = (*adjs, h0, *flat_w)
    kern = functools.partial(_gin_fused_kernel, num_layers=n_layers)
    return pl.pallas_call(
        kern,
        out_shape=jax.ShapeDtypeStruct((Np, d_out), jnp.float32),
        in_specs=[pl.BlockSpec(memory_space=pltpu.MemorySpace.VMEM)] * len(inputs),
        out_specs=pl.BlockSpec(memory_space=pltpu.MemorySpace.VMEM),
        compiler_params=pltpu.CompilerParams(vmem_limit_bytes=VMEM_LIMIT),
    )(*inputs)


# ----------------------------------------------------------------------------
# Per-layer K-tiled kernel (large graphs)
# ----------------------------------------------------------------------------
def _gin_layer_kernel(adj_ref, hsrc_ref, w1_ref, w2_ref, o_ref, acc_ref, *,
                      relu_out):
    """Grid = (node tiles, K tiles).  K axis ("arbitrary", last) accumulates the
    neighbor sum (A + (1+eps)I) @ h into an f32 VMEM scratch; the 2-layer MLP
    and the store run only on the last K step."""
    k = pl.program_id(1)

    @pl.when(k == 0)
    def _():
        acc_ref[...] = jnp.zeros_like(acc_ref)

    # int8 adjacency tile -> bf16 operand; f32 accumulate on the MXU.
    a = adj_ref[...].astype(jnp.float32).astype(jnp.bfloat16)
    acc_ref[...] += jnp.dot(a, hsrc_ref[...], preferred_element_type=jnp.float32)

    @pl.when(k == pl.num_programs(1) - 1)
    def _():
        h1 = jnp.maximum(
            jnp.dot(acc_ref[...].astype(jnp.bfloat16), w1_ref[...],
                    preferred_element_type=jnp.float32), 0.0)
        out = jnp.dot(h1.astype(jnp.bfloat16), w2_ref[...],
                      preferred_element_type=jnp.float32)
        if relu_out:                       # static flag -> two kernel variants
            out = jnp.maximum(out, 0.0)
        o_ref[...] = out.astype(o_ref.dtype)


def gin_layer(adj, h, w1_t, w2_t, *, relu_out, out_dtype):
    """adj: (Np, Np) int8 (diag-folded self term); h: (Np, D_in_p) bf16;
    w1_t: (D_in_p, D_hid_p) bf16; w2_t: (D_hid_p, D_out_p) bf16.
    All dims already padded to multiples of 128."""
    Np, d_in = h.shape
    d_hid = w1_t.shape[1]
    d_out = w2_t.shape[1]

    # Node tile: as big as possible (up to 512) while keeping >= 2 tiles so the
    # "parallel" axis spans both v7x TensorCores whenever Np allows it.
    tn = _largest_tile(Np, min(MAX_TN, max(LANE, Np // 2)))
    # K tile: largest 128-multiple dividing Np, up to 1024.
    tk = _largest_tile(Np, MAX_TK)
    grid = (Np // tn, Np // tk)

    kern = functools.partial(_gin_layer_kernel, relu_out=relu_out)
    return pl.pallas_call(
        kern,
        out_shape=jax.ShapeDtypeStruct((Np, d_out), out_dtype),
        grid_spec=pltpu.PrefetchScalarGridSpec(
            num_scalar_prefetch=0,
            grid=grid,
            in_specs=[
                pl.BlockSpec((tn, tk), lambda i, k: (i, k)),        # A tile (int8)
                pl.BlockSpec((tk, d_in), lambda i, k: (k, 0)),      # source feats
                pl.BlockSpec((d_in, d_hid), lambda i, k: (0, 0)),   # W1^T
                pl.BlockSpec((d_hid, d_out), lambda i, k: (0, 0)),  # W2^T
            ],
            out_specs=pl.BlockSpec((tn, d_out), lambda i, k: (i, 0)),
            scratch_shapes=[pltpu.VMEM((tn, d_in), jnp.float32)],
        ),
        compiler_params=pltpu.CompilerParams(
            dimension_semantics=("parallel", "arbitrary"),
            vmem_limit_bytes=VMEM_LIMIT),
    )(adj, h, w1_t, w2_t)


# ----------------------------------------------------------------------------
# Wrapper: prepare (pad/cast, outside the hot path) + jitted forward
# ----------------------------------------------------------------------------
def prepare_gin(blocks, params, eps=EPS):
    """One-time prep outside the jitted hot path: pad nodes/features to 128
    multiples, fold the (1+eps) self-term into the adjacency diagonal, store
    adjacencies as int8 and weights (transposed) as bf16."""
    N = blocks[0].shape[0]
    Np = _round_up(N, LANE)
    eye = jnp.eye(N, dtype=jnp.float32)
    adjs, weights = [], []
    for adj, (w1, w2) in zip(blocks, params):
        # eps == 0 keeps the int8 storage exact (values 0, 1, or 2).
        a = adj.astype(jnp.float32) + (1.0 + eps) * eye
        adjs.append(_pad_to(a, Np, Np).astype(jnp.int8))
        d_hid, d_in = w1.shape
        d_out = w2.shape[0]
        w1p = _pad_to(w1.T, _round_up(d_in, LANE),
                      _round_up(d_hid, LANE)).astype(jnp.bfloat16)
        w2p = _pad_to(w2.T, _round_up(d_hid, LANE),
                      _round_up(d_out, LANE)).astype(jnp.bfloat16)
        weights.append((w1p, w2p))
    d_out_final = params[-1][1].shape[0]
    return tuple(adjs), tuple(weights), (N, Np, d_out_final)


@functools.partial(jax.jit, static_argnums=(3,))
def _gin_forward_prepared(adjs, h0, weights, fuse):
    n_layers = len(adjs)
    if fuse:
        return _gin_fused(adjs, h0, weights)
    h = h0
    for l, (adj, (w1, w2)) in enumerate(zip(adjs, weights)):
        last = l == n_layers - 1
        h = gin_layer(adj, h, w1, w2, relu_out=not last,
                      out_dtype=jnp.float32 if last else jnp.bfloat16)
        # dropout between layers: identity (eval mode) — see TODO(synk) above.
    return h


def gin_forward(blocks, x, params, *, fuse=None):
    """blocks: list of dense (N, N) adjacencies (A[dst, src] = 1 per edge);
    x: (N, input_dim) f32; params: list of (W1, W2) in torch nn.Linear layout
    (out_features, in_features).  Returns (N, output_dim) f32."""
    adjs, weights, (N, Np, d_out) = prepare_gin(blocks, params)
    h0 = _pad_to(x, Np, _round_up(x.shape[1], LANE)).astype(jnp.bfloat16)

    if fuse is None:
        n_layers = len(adjs)
        d_max = max(h0.shape[1],
                    max(w.shape[1] for pair in weights for w in pair))
        resident = (n_layers * Np * Np                      # int8 adjacencies
                    + 4 * Np * d_max * 4                    # working h copies
                    + sum(w.size * 2 for pair in weights for w in pair))
        fuse = resident <= FUSED_RESIDENT_BUDGET

    out = _gin_forward_prepared(adjs, h0, weights, bool(fuse))
    return out[:N, :d_out]


# ----------------------------------------------------------------------------
# Params / reference / demo
# ----------------------------------------------------------------------------
def init_gin_params(key, input_dim, hid_size, output_dim, num_layers=5):
    """Deterministic init of the 5 GINConv MLPs (two bias-free Linears each),
    stored in torch nn.Linear layout: (out_features, in_features)."""
    params = []
    for layer in range(num_layers):
        if layer == 0:
            dims = (input_dim, hid_size, hid_size)
        elif layer == num_layers - 1:
            dims = (hid_size, hid_size, output_dim)
        else:
            dims = (hid_size, hid_size, hid_size)
        d_in, d_hid, d_out = dims
        key, k1, k2 = jax.random.split(key, 3)
        w1 = jax.random.normal(k1, (d_hid, d_in), jnp.float32) * 0.1
        w2 = jax.random.normal(k2, (d_out, d_hid), jnp.float32) * 0.1
        params.append((w1, w2))
    return params


def _reference_forward(blocks, x, params, eps=EPS):
    """Pure-JAX f32 reference mirroring the PyTorch forward (eval mode)."""
    h = x
    n_layers = len(params)
    for l, (adj, (w1, w2)) in enumerate(zip(blocks, params)):
        agg = adj @ h + (1.0 + eps) * h
        h = jnp.maximum(agg @ w1.T, 0.0) @ w2.T
        if l != n_layers - 1:
            h = jnp.maximum(h, 0.0)
    return h


if __name__ == "__main__":
    N = 256
    INPUT_DIM = 32
    HID_SIZE = 64
    OUTPUT_DIM = 16
    NUM_LAYERS = 5

    key = jax.random.PRNGKey(0)
    key, kx, ka = jax.random.split(key, 3)

    x = jax.random.normal(kx, (N, INPUT_DIM), jnp.float32)
    akeys = jax.random.split(ka, NUM_LAYERS)
    blocks = [(jax.random.uniform(k, (N, N)) < 0.05).astype(jnp.float32)
              for k in akeys]
    params = init_gin_params(key, INPUT_DIM, HID_SIZE, OUTPUT_DIM, NUM_LAYERS)

    # Fused single-kernel path (auto-selected at this small size).
    out = jax.block_until_ready(gin_forward(blocks, x, params))
    assert out.shape == (N, OUTPUT_DIM) and out.dtype == jnp.float32
    assert bool(jnp.isfinite(out).all())

    # Layered K-tiled path (forced) — must agree with the fused path.
    out_layered = jax.block_until_ready(gin_forward(blocks, x, params, fuse=False))
    assert out_layered.shape == (N, OUTPUT_DIM)
    diff = float(jnp.linalg.norm(out - out_layered) /
                 (jnp.linalg.norm(out) + 1e-6))
    assert diff < 2e-2, diff

    # Loose check against the f32 reference (kernels compute in bf16/f32-acc).
    ref = _reference_forward(blocks, x, params)
    rel = float(jnp.linalg.norm(out - ref) / (jnp.linalg.norm(ref) + 1e-6))
    assert rel < 0.1, rel

    print("KERNEL_OK")
</pallas_src>

<mosaic_0001>
module attributes {stable_mosaic.version = 11 : i64} {
  func.func @_gin_fused_kernel(%arg0: memref<256x256xi8, #tpu.memory_space<vmem>>, %arg1: memref<256x256xi8, #tpu.memory_space<vmem>>, %arg2: memref<256x256xi8, #tpu.memory_space<vmem>>, %arg3: memref<256x256xi8, #tpu.memory_space<vmem>>, %arg4: memref<256x256xi8, #tpu.memory_space<vmem>>, %arg5: memref<256x128xbf16, #tpu.memory_space<vmem>>, %arg6: memref<128x128xbf16, #tpu.memory_space<vmem>>, %arg7: memref<128x128xbf16, #tpu.memory_space<vmem>>, %arg8: memref<128x128xbf16, #tpu.memory_space<vmem>>, %arg9: memref<128x128xbf16, #tpu.memory_space<vmem>>, %arg10: memref<128x128xbf16, #tpu.memory_space<vmem>>, %arg11: memref<128x128xbf16, #tpu.memory_space<vmem>>, %arg12: memref<128x128xbf16, #tpu.memory_space<vmem>>, %arg13: memref<128x128xbf16, #tpu.memory_space<vmem>>, %arg14: memref<128x128xbf16, #tpu.memory_space<vmem>>, %arg15: memref<128x128xbf16, #tpu.memory_space<vmem>>, %arg16: memref<256x128xf32, #tpu.memory_space<vmem>>) attributes {dimension_semantics = [], scalar_prefetch = 0 : i64, scratch_operands = 0 : i64, tpu.core_type = #tpu.core_type<tc>} {
    %c0 = arith.constant 0 : index
    %c0_0 = arith.constant 0 : index
    %0 = vector.load %arg5[%c0, %c0_0] : memref<256x128xbf16, #tpu.memory_space<vmem>>, vector<256x128xbf16>
    %c0_1 = arith.constant 0 : index
    %c0_2 = arith.constant 0 : index
    %1 = vector.load %arg0[%c0_1, %c0_2] : memref<256x256xi8, #tpu.memory_space<vmem>>, vector<256x256xi8>
    %2 = arith.sitofp %1 : vector<256x256xi8> to vector<256x256xf32>
    %3 = arith.truncf %2 : vector<256x256xf32> to vector<256x256xbf16>
    %cst = arith.constant dense<0.000000e+00> : vector<256x128xf32>
    %4 = tpu.matmul %3, %0, %cst {dimension_numbers = #tpu.dot_dimension_numbers<[1], [0], [0], [1], [0, 0, 1, 1], [], []>} : vector<256x256xbf16>, vector<256x128xbf16>, vector<256x128xf32> -> vector<256x128xf32>
    %5 = arith.truncf %4 : vector<256x128xf32> to vector<256x128xbf16>
    %c0_3 = arith.constant 0 : index
    %c0_4 = arith.constant 0 : index
    %6 = vector.load %arg6[%c0_3, %c0_4] : memref<128x128xbf16, #tpu.memory_space<vmem>>, vector<128x128xbf16>
    %cst_5 = arith.constant dense<0.000000e+00> : vector<256x128xf32>
    %7 = tpu.matmul %5, %6, %cst_5 {dimension_numbers = #tpu.dot_dimension_numbers<[1], [0], [0], [1], [0, 0, 1, 1], [], []>} : vector<256x128xbf16>, vector<128x128xbf16>, vector<256x128xf32> -> vector<256x128xf32>
    %cst_6 = arith.constant 0.000000e+00 : f32
    %8 = vector.broadcast %cst_6 : f32 to vector<256x128xf32>
    %9 = arith.maximumf %7, %8 : vector<256x128xf32>
    %10 = arith.truncf %9 : vector<256x128xf32> to vector<256x128xbf16>
    %c0_7 = arith.constant 0 : index
    %c0_8 = arith.constant 0 : index
    %11 = vector.load %arg7[%c0_7, %c0_8] : memref<128x128xbf16, #tpu.memory_space<vmem>>, vector<128x128xbf16>
    %cst_9 = arith.constant dense<0.000000e+00> : vector<256x128xf32>
    %12 = tpu.matmul %10, %11, %cst_9 {dimension_numbers = #tpu.dot_dimension_numbers<[1], [0], [0], [1], [0, 0, 1, 1], [], []>} : vector<256x128xbf16>, vector<128x128xbf16>, vector<256x128xf32> -> vector<256x128xf32>
    %cst_10 = arith.constant 0.000000e+00 : f32
    %13 = vector.broadcast %cst_10 : f32 to vector<256x128xf32>
    %14 = arith.maximumf %12, %13 : vector<256x128xf32>
    %15 = arith.truncf %14 : vector<256x128xf32> to vector<256x128xbf16>
    %c0_11 = arith.constant 0 : index
    %c0_12 = arith.constant 0 : index
    %16 = vector.load %arg1[%c0_11, %c0_12] : memref<256x256xi8, #tpu.memory_space<vmem>>, vector<256x256xi8>
    %17 = arith.sitofp %16 : vector<256x256xi8> to vector<256x256xf32>
    %18 = arith.truncf %17 : vector<256x256xf32> to vector<256x256xbf16>
    %cst_13 = arith.constant dense<0.000000e+00> : vector<256x128xf32>
    %19 = tpu.matmul %18, %15, %cst_13 {dimension_numbers = #tpu.dot_dimension_numbers<[1], [0], [0], [1], [0, 0, 1, 1], [], []>} : vector<256x256xbf16>, vector<256x128xbf16>, vector<256x128xf32> -> vector<256x128xf32>
    %20 = arith.truncf %19 : vector<256x128xf32> to vector<256x128xbf16>
    %c0_14 = arith.constant 0 : index
    %c0_15 = arith.constant 0 : index
    %21 = vector.load %arg8[%c0_14, %c0_15] : memref<128x128xbf16, #tpu.memory_space<vmem>>, vector<128x128xbf16>
    %cst_16 = arith.constant dense<0.000000e+00> : vector<256x128xf32>
    %22 = tpu.matmul %20, %21, %cst_16 {dimension_numbers = #tpu.dot_dimension_numbers<[1], [0], [0], [1], [0, 0, 1, 1], [], []>} : vector<256x128xbf16>, vector<128x128xbf16>, vector<256x128xf32> -> vector<256x128xf32>
    %cst_17 = arith.constant 0.000000e+00 : f32
    %23 = vector.broadcast %cst_17 : f32 to vector<256x128xf32>
    %24 = arith.maximumf %22, %23 : vector<256x128xf32>
    %25 = arith.truncf %24 : vector<256x128xf32> to vector<256x128xbf16>
    %c0_18 = arith.constant 0 : index
    %c0_19 = arith.constant 0 : index
    %26 = vector.load %arg9[%c0_18, %c0_19] : memref<128x128xbf16, #tpu.memory_space<vmem>>, vector<128x128xbf16>
    %cst_20 = arith.constant dense<0.000000e+00> : vector<256x128xf32>
    %27 = tpu.matmul %25, %26, %cst_20 {dimension_numbers = #tpu.dot_dimension_numbers<[1], [0], [0], [1], [0, 0, 1, 1], [], []>} : vector<256x128xbf16>, vector<128x128xbf16>, vector<256x128xf32> -> vector<256x128xf32>
    %cst_21 = arith.constant 0.000000e+00 : f32
    %28 = vector.broadcast %cst_21 : f32 to vector<256x128xf32>
    %29 = arith.maximumf %27, %28 : vector<256x128xf32>
    %30 = arith.truncf %29 : vector<256x128xf32> to vector<256x128xbf16>
    %c0_22 = arith.constant 0 : index
    %c0_23 = arith.constant 0 : index
    %31 = vector.load %arg2[%c0_22, %c0_23] : memref<256x256xi8, #tpu.memory_space<vmem>>, vector<256x256xi8>
    %32 = arith.sitofp %31 : vector<256x256xi8> to vector<256x256xf32>
    %33 = arith.truncf %32 : vector<256x256xf32> to vector<256x256xbf16>
    %cst_24 = arith.constant dense<0.000000e+00> : vector<256x128xf32>
    %34 = tpu.matmul %33, %30, %cst_24 {dimension_numbers = #tpu.dot_dimension_numbers<[1], [0], [0], [1], [0, 0, 1, 1], [], []>} : vector<256x256xbf16>, vector<256x128xbf16>, vector<256x128xf32> -> vector<256x128xf32>
    %35 = arith.truncf %34 : vector<256x128xf32> to vector<256x128xbf16>
    %c0_25 = arith.constant 0 : index
    %c0_26 = arith.constant 0 : index
    %36 = vector.load %arg10[%c0_25, %c0_26] : memref<128x128xbf16, #tpu.memory_space<vmem>>, vector<128x128xbf16>
    %cst_27 = arith.constant dense<0.000000e+00> : vector<256x128xf32>
    %37 = tpu.matmul %35, %36, %cst_27 {dimension_numbers = #tpu.dot_dimension_numbers<[1], [0], [0], [1], [0, 0, 1, 1], [], []>} : vector<256x128xbf16>, vector<128x128xbf16>, vector<256x128xf32> -> vector<256x128xf32>
    %cst_28 = arith.constant 0.000000e+00 : f32
    %38 = vector.broadcast %cst_28 : f32 to vector<256x128xf32>
    %39 = arith.maximumf %37, %38 : vector<256x128xf32>
    %40 = arith.truncf %39 : vector<256x128xf32> to vector<256x128xbf16>
    %c0_29 = arith.constant 0 : index
    %c0_30 = arith.constant 0 : index
    %41 = vector.load %arg11[%c0_29, %c0_30] : memref<128x128xbf16, #tpu.memory_space<vmem>>, vector<128x128xbf16>
    %cst_31 = arith.constant dense<0.000000e+00> : vector<256x128xf32>
    %42 = tpu.matmul %40, %41, %cst_31 {dimension_numbers = #tpu.dot_dimension_numbers<[1], [0], [0], [1], [0, 0, 1, 1], [], []>} : vector<256x128xbf16>, vector<128x128xbf16>, vector<256x128xf32> -> vector<256x128xf32>
    %cst_32 = arith.constant 0.000000e+00 : f32
    %43 = vector.broadcast %cst_32 : f32 to vector<256x128xf32>
    %44 = arith.maximumf %42, %43 : vector<256x128xf32>
    %45 = arith.truncf %44 : vector<256x128xf32> to vector<256x128xbf16>
    %c0_33 = arith.constant 0 : index
    %c0_34 = arith.constant 0 : index
    %46 = vector.load %arg3[%c0_33, %c0_34] : memref<256x256xi8, #tpu.memory_space<vmem>>, vector<256x256xi8>
    %47 = arith.sitofp %46 : vector<256x256xi8> to vector<256x256xf32>
    %48 = arith.truncf %47 : vector<256x256xf32> to vector<256x256xbf16>
    %cst_35 = arith.constant dense<0.000000e+00> : vector<256x128xf32>
    %49 = tpu.matmul %48, %45, %cst_35 {dimension_numbers = #tpu.dot_dimension_numbers<[1], [0], [0], [1], [0, 0, 1, 1], [], []>} : vector<256x256xbf16>, vector<256x128xbf16>, vector<256x128xf32> -> vector<256x128xf32>
    %50 = arith.truncf %49 : vector<256x128xf32> to vector<256x128xbf16>
    %c0_36 = arith.constant 0 : index
    %c0_37 = arith.constant 0 : index
    %51 = vector.load %arg12[%c0_36, %c0_37] : memref<128x128xbf16, #tpu.memory_space<vmem>>, vector<128x128xbf16>
    %cst_38 = arith.constant dense<0.000000e+00> : vector<256x128xf32>
    %52 = tpu.matmul %50, %51, %cst_38 {dimension_numbers = #tpu.dot_dimension_numbers<[1], [0], [0], [1], [0, 0, 1, 1], [], []>} : vector<256x128xbf16>, vector<128x128xbf16>, vector<256x128xf32> -> vector<256x128xf32>
    %cst_39 = arith.constant 0.000000e+00 : f32
    %53 = vector.broadcast %cst_39 : f32 to vector<256x128xf32>
    %54 = arith.maximumf %52, %53 : vector<256x128xf32>
    %55 = arith.truncf %54 : vector<256x128xf32> to vector<256x128xbf16>
    %c0_40 = arith.constant 0 : index
    %c0_41 = arith.constant 0 : index
    %56 = vector.load %arg13[%c0_40, %c0_41] : memref<128x128xbf16, #tpu.memory_space<vmem>>, vector<128x128xbf16>
    %cst_42 = arith.constant dense<0.000000e+00> : vector<256x128xf32>
    %57 = tpu.matmul %55, %56, %cst_42 {dimension_numbers = #tpu.dot_dimension_numbers<[1], [0], [0], [1], [0, 0, 1, 1], [], []>} : vector<256x128xbf16>, vector<128x128xbf16>, vector<256x128xf32> -> vector<256x128xf32>
    %cst_43 = arith.constant 0.000000e+00 : f32
    %58 = vector.broadcast %cst_43 : f32 to vector<256x128xf32>
    %59 = arith.maximumf %57, %58 : vector<256x128xf32>
    %60 = arith.truncf %59 : vector<256x128xf32> to vector<256x128xbf16>
    %c0_44 = arith.constant 0 : index
    %c0_45 = arith.constant 0 : index
    %61 = vector.load %arg4[%c0_44, %c0_45] : memref<256x256xi8, #tpu.memory_space<vmem>>, vector<256x256xi8>
    %62 = arith.sitofp %61 : vector<256x256xi8> to vector<256x256xf32>
    %63 = arith.truncf %62 : vector<256x256xf32> to vector<256x256xbf16>
    %cst_46 = arith.constant dense<0.000000e+00> : vector<256x128xf32>
    %64 = tpu.matmul %63, %60, %cst_46 {dimension_numbers = #tpu.dot_dimension_numbers<[1], [0], [0], [1], [0, 0, 1, 1], [], []>} : vector<256x256xbf16>, vector<256x128xbf16>, vector<256x128xf32> -> vector<256x128xf32>
    %65 = arith.truncf %64 : vector<256x128xf32> to vector<256x128xbf16>
    %c0_47 = arith.constant 0 : index
    %c0_48 = arith.constant 0 : index
    %66 = vector.load %arg14[%c0_47, %c0_48] : memref<128x128xbf16, #tpu.memory_space<vmem>>, vector<128x128xbf16>
    %cst_49 = arith.constant dense<0.000000e+00> : vector<256x128xf32>
    %67 = tpu.matmul %65, %66, %cst_49 {dimension_numbers = #tpu.dot_dimension_numbers<[1], [0], [0], [1], [0, 0, 1, 1], [], []>} : vector<256x128xbf16>, vector<128x128xbf16>, vector<256x128xf32> -> vector<256x128xf32>
    %cst_50 = arith.constant 0.000000e+00 : f32
    %68 = vector.broadcast %cst_50 : f32 to vector<256x128xf32>
    %69 = arith.maximumf %67, %68 : vector<256x128xf32>
    %70 = arith.truncf %69 : vector<256x128xf32> to vector<256x128xbf16>
    %c0_51 = arith.constant 0 : index
    %c0_52 = arith.constant 0 : index
    %71 = vector.load %arg15[%c0_51, %c0_52] : memref<128x128xbf16, #tpu.memory_space<vmem>>, vector<128x128xbf16>
    %cst_53 = arith.constant dense<0.000000e+00> : vector<256x128xf32>
    %72 = tpu.matmul %70, %71, %cst_53 {dimension_numbers = #tpu.dot_dimension_numbers<[1], [0], [0], [1], [0, 0, 1, 1], [], []>} : vector<256x128xbf16>, vector<128x128xbf16>, vector<256x128xf32> -> vector<256x128xf32>
    %c0_54 = arith.constant 0 : index
    %c0_55 = arith.constant 0 : index
    %73 = vector.load %arg16[%c0_54, %c0_55] : memref<256x128xf32, #tpu.memory_space<vmem>>, vector<256x128xf32>
    tpu.vector_store %arg16[%c0_54, %c0_55], %72 {strides = array<i32>} : memref<256x128xf32, #tpu.memory_space<vmem>>, vector<256x128xf32>,
    return
  }
}

</mosaic_0001>

<llo_original>
// kernel: _gin_forward_prepared.1
$region0: #{_gin_forward_prepared.1}
  #allocation0 [shape = 'u32[]', space=smem, size = 0x4, offset = 0x4, fixed_abs, tag = 'smem constant byte address 0x4 - core index']
  #allocation1 [shape = 'u32[144,128]{1,0:T(1,128)}', space=vmem, size = 0x12000, scoped, tag = 'internal scratch']
  %s0 = inlined_call_operand.hbm [shape: s8[256,256], index: 0, kind: input, shape index: {}]
  %s1 = inlined_call_operand.hbm [shape: s8[256,256], index: 1, kind: input, shape index: {}]
  %s2 = inlined_call_operand.hbm [shape: s8[256,256], index: 2, kind: input, shape index: {}]
  %s3 = inlined_call_operand.hbm [shape: s8[256,256], index: 3, kind: input, shape index: {}]
  %s4 = inlined_call_operand.hbm [shape: s8[256,256], index: 4, kind: input, shape index: {}]
  %s5 = inlined_call_operand.hbm [shape: bf16[256,128], index: 5, kind: input, shape index: {}]
  %s6 = inlined_call_operand.hbm [shape: bf16[128,128], index: 6, kind: input, shape index: {}]
  %s7 = inlined_call_operand.hbm [shape: bf16[128,128], index: 7, kind: input, shape index: {}]
  %s8 = inlined_call_operand.hbm [shape: bf16[128,128], index: 8, kind: input, shape index: {}]
  %s9 = inlined_call_operand.hbm [shape: bf16[128,128], index: 9, kind: input, shape index: {}]
  %s10 = inlined_call_operand.hbm [shape: bf16[128,128], index: 10, kind: input, shape index: {}]
  %s11 = inlined_call_operand.hbm [shape: bf16[128,128], index: 11, kind: input, shape index: {}]
  %s12 = inlined_call_operand.hbm [shape: bf16[128,128], index: 12, kind: input, shape index: {}]
  %s13 = inlined_call_operand.hbm [shape: bf16[128,128], index: 13, kind: input, shape index: {}]
  %s14 = inlined_call_operand.hbm [shape: bf16[128,128], index: 14, kind: input, shape index: {}]
  %s15 = inlined_call_operand.hbm [shape: bf16[128,128], index: 15, kind: input, shape index: {}]
  %s16 = inlined_call_operand.hbm [shape: f32[256,128], index: 16, kind: output, shape index: {}]
  %s17 = sld [smem:[#allocation0]]
  $region138: #{_gin_forward_prepared.1} parent=0
    _
  %s19 = ssub.s32 1, %s17
  %s20 = scalar_select 0, %s19, %s17
  $region1: #{_gin_forward_prepared.1} parent=0
    #allocation2 [shape = 'u8[65536]{0}', space=vmem, size = 0x10000, scoped, tag = 'input window, operand 0, single buffered']
    #allocation3 [shape = 's32[1]{0}', space=sflag, size = 0x4, scoped, tag = 'scoped memory for _gin_forward_prepared.1']
    #allocation4 [shape = 's32[1]{0}', space=sflag, size = 0x4, scoped, tag = 'scoped memory for _gin_forward_prepared.1']
    #allocation5 [shape = 'u8[65536]{0}', space=vmem, size = 0x10000, scoped, tag = 'input window, operand 1, single buffered']
    #allocation6 [shape = 's32[1]{0}', space=sflag, size = 0x4, scoped, tag = 'scoped memory for _gin_forward_prepared.1']
    #allocation7 [shape = 'u8[65536]{0}', space=vmem, size = 0x10000, scoped, tag = 'input window, operand 2, single buffered']
    #allocation8 [shape = 'u8[65536]{0}', space=vmem, size = 0x10000, scoped, tag = 'input window, operand 3, single buffered']
    #allocation9 [shape = 's32[1]{0}', space=sflag, size = 0x4, scoped, tag = 'scoped memory for _gin_forward_prepared.1']
    #allocation10 [shape = 'u8[65536]{0}', space=vmem, size = 0x10000, scoped, tag = 'input window, operand 4, single buffered']
    #allocation11 [shape = 'u8[65536]{0}', space=vmem, size = 0x10000, scoped, tag = 'input window, operand 5, single buffered']
    #allocation12 [shape = 's32[1]{0}', space=sflag, size = 0x4, scoped, tag = 'scoped memory for _gin_forward_prepared.1']
    #allocation13 [shape = 'u8[32768]{0}', space=vmem, size = 0x8000, scoped, tag = 'input window, operand 6, single buffered']
    #allocation14 [shape = 'u8[32768]{0}', space=vmem, size = 0x8000, scoped, tag = 'input window, operand 7, single buffered']
    #allocation15 [shape = 's32[1]{0}', space=sflag, size = 0x4, scoped, tag = 'scoped memory for _gin_forward_prepared.1']
    #allocation16 [shape = 'u8[32768]{0}', space=vmem, size = 0x8000, scoped, tag = 'input window, operand 8, single buffered']
    #allocation17 [shape = 'u8[32768]{0}', space=vmem, size = 0x8000, scoped, tag = 'input window, operand 9, single buffered']
    #allocation18 [shape = 's32[1]{0}', space=sflag, size = 0x4, scoped, tag = 'scoped memory for _gin_forward_prepared.1']
    #allocation19 [shape = 'u8[32768]{0}', space=vmem, size = 0x8000, scoped, tag = 'input window, operand 10, single buffered']
    #allocation20 [shape = 'u8[32768]{0}', space=vmem, size = 0x8000, scoped, tag = 'input window, operand 11, single buffered']
    #allocation21 [shape = 's32[1]{0}', space=sflag, size = 0x4, scoped, tag = 'scoped memory for _gin_forward_prepared.1']
    #allocation22 [shape = 'u8[32768]{0}', space=vmem, size = 0x8000, scoped, tag = 'input window, operand 12, single buffered']
    #allocation23 [shape = 'u8[32768]{0}', space=vmem, size = 0x8000, scoped, tag = 'input window, operand 13, single buffered']
    #allocation24 [shape = 's32[1]{0}', space=sflag, size = 0x4, scoped, tag = 'scoped memory for _gin_forward_prepared.1']
    #allocation25 [shape = 'u8[32768]{0}', space=vmem, size = 0x8000, scoped, tag = 'input window, operand 14, single buffered']
    #allocation26 [shape = 'u8[32768]{0}', space=vmem, size = 0x8000, scoped, tag = 'input window, operand 15, single buffered']
    #allocation27 [shape = 's32[1]{0}', space=sflag, size = 0x4, scoped, tag = 'scoped memory for _gin_forward_prepared.1']
    #allocation28 [shape = 'u8[131072]{0}', space=vmem, size = 0x20000, scoped, tag = 'output window, operand 0, single buffered']
    %21 = vsyncpa [#allocation3], 0
    %22 = vsyncpa [#allocation6], 0
    %23 = vsyncpa [#allocation9], 0
    %24 = vsyncpa [#allocation12], 0
    %25 = vsyncpa [#allocation15], 0
    %26 = vsyncpa [#allocation18], 0
    %27 = vsyncpa [#allocation21], 0
    %28 = vsyncpa [#allocation24], 0
    %29 = vsyncpa [#allocation27], 0
    %30 = vsyncpa [#allocation4], 0
    // Predicated region
    $region2: #{_gin_forward_prepared.1} parent=1 // pred_check
      _
    $region3: #{_gin_forward_prepared.1} parent=1 // pred_check_branch
      %32 = sbr.rel (0) target = $region5
    $region4: #{_gin_forward_prepared.1} parent=1 // pred_region
      %s34 = ssub.s32 2048, 2048
      %35 = vsyncadd [#allocation3], %s34
      %s36 = sshll.u32 [#allocation2], 4
      %s37 = int_to_ptr.vmem [resolvable:$true] %s36
      %42 = dma.hbm_to_vmem [thread:$0]  %s0, 2048, %s37, [#allocation3], 256, 256, 16
    $region5: #{_gin_forward_prepared.1} parent=1 // pred_fallthru
      _
    // Predicated region
    $region6: #{_gin_forward_prepared.1} parent=1 // pred_check
      _
    $region7: #{_gin_forward_prepared.1} parent=1 // pred_check_branch
      %44 = sbr.rel (0) target = $region9
    $region8: #{_gin_forward_prepared.1} parent=1 // pred_region
      %s46 = ssub.s32 2048, 2048
      %47 = vsyncadd [#allocation6], %s46
      %s48 = sshll.u32 [#allocation5], 4
      %s49 = int_to_ptr.vmem [resolvable:$true] %s48
      %54 = dma.hbm_to_vmem [thread:$0]  %s1, 2048, %s49, [#allocation6], 256, 256, 16
    $region9: #{_gin_forward_prepared.1} parent=1 // pred_fallthru
      _
    // Predicated region
    $region10: #{_gin_forward_prepared.1} parent=1 // pred_check
      _
    $region11: #{_gin_forward_prepared.1} parent=1 // pred_check_branch
      %56 = sbr.rel (0) target = $region13
    $region12: #{_gin_forward_prepared.1} parent=1 // pred_region
      %s58 = ssub.s32 2048, 2048
      %59 = vsyncadd [#allocation6], %s58
      %s60 = sshll.u32 [#allocation7], 4
      %s61 = int_to_ptr.vmem [resolvable:$true] %s60
      %66 = dma.hbm_to_vmem [thread:$0]  %s2, 2048, %s61, [#allocation6], 256, 256, 16
    $region13: #{_gin_forward_prepared.1} parent=1 // pred_fallthru
      _
    // Predicated region
    $region14: #{_gin_forward_prepared.1} parent=1 // pred_check
      _
    $region15: #{_gin_forward_prepared.1} parent=1 // pred_check_branch
      %68 = sbr.rel (0) target = $region17
    $region16: #{_gin_forward_prepared.1} parent=1 // pred_region
      %s70 = ssub.s32 2048, 2048
      %71 = vsyncadd [#allocation9], %s70
      %s72 = sshll.u32 [#allocation8], 4
      %s73 = int_to_ptr.vmem [resolvable:$true] %s72
      %78 = dma.hbm_to_vmem [thread:$0]  %s3, 2048, %s73, [#allocation9], 256, 256, 16
    $region17: #{_gin_forward_prepared.1} parent=1 // pred_fallthru
      _
    // Predicated region
    $region18: #{_gin_forward_prepared.1} parent=1 // pred_check
      _
    $region19: #{_gin_forward_prepared.1} parent=1 // pred_check_branch
      %80 = sbr.rel (0) target = $region21
    $region20: #{_gin_forward_prepared.1} parent=1 // pred_region
      %s82 = ssub.s32 2048, 2048
      %83 = vsyncadd [#allocation9], %s82
      %s84 = sshll.u32 [#allocation10], 4
      %s85 = int_to_ptr.vmem [resolvable:$true] %s84
      %90 = dma.hbm_to_vmem [thread:$0]  %s4, 2048, %s85, [#allocation9], 256, 256, 16
    $region21: #{_gin_forward_prepared.1} parent=1 // pred_fallthru
      _
    // Predicated region
    $region22: #{_gin_forward_prepared.1} parent=1 // pred_check
      _
    $region23: #{_gin_forward_prepared.1} parent=1 // pred_check_branch
      %92 = sbr.rel (0) target = $region25
    $region24: #{_gin_forward_prepared.1} parent=1 // pred_region
      %s94 = ssub.s32 2048, 2048
      %95 = vsyncadd [#allocation12], %s94
      %s96 = sshll.u32 [#allocation11], 4
      %s97 = int_to_ptr.vmem [resolvable:$true] %s96
      %102 = dma.hbm_to_vmem [thread:$0]  %s5, 2048, %s97, [#allocation12], 64, 64, 4
    $region25: #{_gin_forward_prepared.1} parent=1 // pred_fallthru
      _
    // Predicated region
    $region26: #{_gin_forward_prepared.1} parent=1 // pred_check
      _
    $region27: #{_gin_forward_prepared.1} parent=1 // pred_check_branch
      %104 = sbr.rel (0) target = $region29
    $region28: #{_gin_forward_prepared.1} parent=1 // pred_region
      %s106 = ssub.s32 1024, 1024
      %107 = vsyncadd [#allocation12], %s106
      %s108 = sshll.u32 [#allocation13], 4
      %s109 = int_to_ptr.vmem [resolvable:$true] %s108
      %114 = dma.hbm_to_vmem [thread:$0]  %s6, 1024, %s109, [#allocation12], 64, 64, 4
    $region29: #{_gin_forward_prepared.1} parent=1 // pred_fallthru
      _
    // Predicated region
    $region30: #{_gin_forward_prepared.1} parent=1 // pred_check
      _
    $region31: #{_gin_forward_prepared.1} parent=1 // pred_check_branch
      %116 = sbr.rel (0) target = $region33
    $region32: #{_gin_forward_prepared.1} parent=1 // pred_region
      %s118 = ssub.s32 1024, 1024
      %119 = vsyncadd [#allocation15], %s118
      %s120 = sshll.u32 [#allocation14], 4
      %s121 = int_to_ptr.vmem [resolvable:$true] %s120
      %126 = dma.hbm_to_vmem [thread:$0]  %s7, 1024, %s121, [#allocation15], 64, 64, 4
    $region33: #{_gin_forward_prepared.1} parent=1 // pred_fallthru
      _
    // Predicated region
    $region34: #{_gin_forward_prepared.1} parent=1 // pred_check
      _
    $region35: #{_gin_forward_prepared.1} parent=1 // pred_check_branch
      %128 = sbr.rel (0) target = $region37
    $region36: #{_gin_forward_prepared.1} parent=1 // pred_region
      %s130 = ssub.s32 1024, 1024
      %131 = vsyncadd [#allocation15], %s130
      %s132 = sshll.u32 [#allocation16], 4
      %s133 = int_to_ptr.vmem [resolvable:$true] %s132
      %138 = dma.hbm_to_vmem [thread:$0]  %s8, 1024, %s133, [#allocation15], 64, 64, 4
    $region37: #{_gin_forward_prepared.1} parent=1 // pred_fallthru
      _
    // Predicated region
    $region38: #{_gin_forward_prepared.1} parent=1 // pred_check
      _
    $region39: #{_gin_forward_prepared.1} parent=1 // pred_check_branch
      %140 = sbr.rel (0) target = $region41
    $region40: #{_gin_forward_prepared.1} parent=1 // pred_region
      %s142 = ssub.s32 1024, 1024
      %143 = vsyncadd [#allocation18], %s142
      %s144 = sshll.u32 [#allocation17], 4
      %s145 = int_to_ptr.vmem [resolvable:$true] %s144
      %150 = dma.hbm_to_vmem [thread:$0]  %s9, 1024, %s145, [#allocation18], 64, 64, 4
    $region41: #{_gin_forward_prepared.1} parent=1 // pred_fallthru
      _
    // Predicated region
    $region42: #{_gin_forward_prepared.1} parent=1 // pred_check
      _
    $region43: #{_gin_forward_prepared.1} parent=1 // pred_check_branch
      %152 = sbr.rel (0) target = $region45
    $region44: #{_gin_forward_prepared.1} parent=1 // pred_region
      %s154 = ssub.s32 1024, 1024
      %155 = vsyncadd [#allocation18], %s154
      %s156 = sshll.u32 [#allocation19], 4
      %s157 = int_to_ptr.vmem [resolvable:$true] %s156
      %162 = dma.hbm_to_vmem [thread:$0]  %s10, 1024, %s157, [#allocation18], 64, 64, 4
    $region45: #{_gin_forward_prepared.1} parent=1 // pred_fallthru
      _
    // Predicated region
    $region46: #{_gin_forward_prepared.1} parent=1 // pred_check
      _
    $region47: #{_gin_forward_prepared.1} parent=1 // pred_check_branch
      %164 = sbr.rel (0) target = $region49
    $region48: #{_gin_forward_prepared.1} parent=1 // pred_region
      %s166 = ssub.s32 1024, 1024
      %167 = vsyncadd [#allocation21], %s166
      %s168 = sshll.u32 [#allocation20], 4
      %s169 = int_to_ptr.vmem [resolvable:$true] %s168
      %174 = dma.hbm_to_vmem [thread:$0]  %s11, 1024, %s169, [#allocation21], 64, 64, 4
    $region49: #{_gin_forward_prepared.1} parent=1 // pred_fallthru
      _
    // Predicated region
    $region50: #{_gin_forward_prepared.1} parent=1 // pred_check
      _
    $region51: #{_gin_forward_prepared.1} parent=1 // pred_check_branch
      %176 = sbr.rel (0) target = $region53
    $region52: #{_gin_forward_prepared.1} parent=1 // pred_region
      %s178 = ssub.s32 1024, 1024
      %179 = vsyncadd [#allocation21], %s178
      %s180 = sshll.u32 [#allocation22], 4
      %s181 = int_to_ptr.vmem [resolvable:$true] %s180
      %186 = dma.hbm_to_vmem [thread:$0]  %s12, 1024, %s181, [#allocation21], 64, 64, 4
    $region53: #{_gin_forward_prepared.1} parent=1 // pred_fallthru
      _
    // Predicated region
    $region54: #{_gin_forward_prepared.1} parent=1 // pred_check
      _
    $region55: #{_gin_forward_prepared.1} parent=1 // pred_check_branch
      %188 = sbr.rel (0) target = $region57
    $region56: #{_gin_forward_prepared.1} parent=1 // pred_region
      %s190 = ssub.s32 1024, 1024
      %191 = vsyncadd [#allocation24], %s190
      %s192 = sshll.u32 [#allocation23], 4
      %s193 = int_to_ptr.vmem [resolvable:$true] %s192
      %198 = dma.hbm_to_vmem [thread:$0]  %s13, 1024, %s193, [#allocation24], 64, 64, 4
    $region57: #{_gin_forward_prepared.1} parent=1 // pred_fallthru
      _
    // Predicated region
    $region58: #{_gin_forward_prepared.1} parent=1 // pred_check
      _
    $region59: #{_gin_forward_prepared.1} parent=1 // pred_check_branch
      %200 = sbr.rel (0) target = $region61
    $region60: #{_gin_forward_prepared.1} parent=1 // pred_region
      %s202 = ssub.s32 1024, 1024
      %203 = vsyncadd [#allocation24], %s202
      %s204 = sshll.u32 [#allocation25], 4
      %s205 = int_to_ptr.vmem [resolvable:$true] %s204
      %210 = dma.hbm_to_vmem [thread:$0]  %s14, 1024, %s205, [#allocation24], 64, 64, 4
    $region61: #{_gin_forward_prepared.1} parent=1 // pred_fallthru
      _
    // Predicated region
    $region62: #{_gin_forward_prepared.1} parent=1 // pred_check
      _
    $region63: #{_gin_forward_prepared.1} parent=1 // pred_check_branch
      %212 = sbr.rel (0) target = $region65
    $region64: #{_gin_forward_prepared.1} parent=1 // pred_region
      %s214 = ssub.s32 1024, 1024
      %215 = vsyncadd [#allocation27], %s214
      %s216 = sshll.u32 [#allocation26], 4
      %s217 = int_to_ptr.vmem [resolvable:$true] %s216
      %222 = dma.hbm_to_vmem [thread:$0]  %s15, 1024, %s217, [#allocation27], 64, 64, 4
    $region65: #{_gin_forward_prepared.1} parent=1 // pred_fallthru
      _
    // Predicated region
    $region66: #{_gin_forward_prepared.1} parent=1 // pred_check
      _
    $region67: #{_gin_forward_prepared.1} parent=1 // pred_check_branch
      %224 = sbr.rel (0) target = $region69
    $region68: #{_gin_forward_prepared.1} parent=1 // pred_region
      %225 = dma.done [#allocation3], 2048
    $region69: #{_gin_forward_prepared.1} parent=1 // pred_fallthru
      _
    // Predicated region
    $region70: #{_gin_forward_prepared.1} parent=1 // pred_check
      _
    $region71: #{_gin_forward_prepared.1} parent=1 // pred_check_branch
      %227 = sbr.rel (0) target = $region73
    $region72: #{_gin_forward_prepared.1} parent=1 // pred_region
      %228 = dma.done [#allocation6], 2048
    $region73: #{_gin_forward_prepared.1} parent=1 // pred_fallthru
      _
    // Predicated region
    $region74: #{_gin_forward_prepared.1} parent=1 // pred_check
      _
    $region75: #{_gin_forward_prepared.1} parent=1 // pred_check_branch
      %230 = sbr.rel (0) target = $region77
    $region76: #{_gin_forward_prepared.1} parent=1 // pred_region
      %231 = dma.done [#allocation6], 2048
    $region77: #{_gin_forward_prepared.1} parent=1 // pred_fallthru
      _
    // Predicated region
    $region78: #{_gin_forward_prepared.1} parent=1 // pred_check
      _
    $region79: #{_gin_forward_prepared.1} parent=1 // pred_check_branch
      %233 = sbr.rel (0) target = $region81
    $region80: #{_gin_forward_prepared.1} parent=1 // pred_region
      %234 = dma.done [#allocation9], 2048
    $region81: #{_gin_forward_prepared.1} parent=1 // pred_fallthru
      _
    // Predicated region
    $region82: #{_gin_forward_prepared.1} parent=1 // pred_check
      _
    $region83: #{_gin_forward_prepared.1} parent=1 // pred_check_branch
      %236 = sbr.rel (0) target = $region85
    $region84: #{_gin_forward_prepared.1} parent=1 // pred_region
      %237 = dma.done [#allocation9], 2048
    $region85: #{_gin_forward_prepared.1} parent=1 // pred_fallthru
      _
    // Predicated region
    $region86: #{_gin_forward_prepared.1} parent=1 // pred_check
      _
    $region87: #{_gin_forward_prepared.1} parent=1 // pred_check_branch
      %239 = sbr.rel (0) target = $region89
    $region88: #{_gin_forward_prepared.1} parent=1 // pred_region
      %240 = dma.done [#allocation12], 2048
    $region89: #{_gin_forward_prepared.1} parent=1 // pred_fallthru
      _
    // Predicated region
    $region90: #{_gin_forward_prepared.1} parent=1 // pred_check
      _
    $region91: #{_gin_forward_prepared.1} parent=1 // pred_check_branch
      %242 = sbr.rel (0) target = $region93
    $region92: #{_gin_forward_prepared.1} parent=1 // pred_region
      %243 = dma.done [#allocation12], 1024
    $region93: #{_gin_forward_prepared.1} parent=1 // pred_fallthru
      _
    // Predicated region
    $region94: #{_gin_forward_prepared.1} parent=1 // pred_check
      _
    $region95: #{_gin_forward_prepared.1} parent=1 // pred_check_branch
      %245 = sbr.rel (0) target = $region97
    $region96: #{_gin_forward_prepared.1} parent=1 // pred_region
      %246 = dma.done [#allocation15], 1024
    $region97: #{_gin_forward_prepared.1} parent=1 // pred_fallthru
      _
    // Predicated region
    $region98: #{_gin_forward_prepared.1} parent=1 // pred_check
      _
    $region99: #{_gin_forward_prepared.1} parent=1 // pred_check_branch
      %248 = sbr.rel (0) target = $region101
    $region100: #{_gin_forward_prepared.1} parent=1 // pred_region
      %249 = dma.done [#allocation15], 1024
    $region101: #{_gin_forward_prepared.1} parent=1 // pred_fallthru
      _
    // Predicated region
    $region102: #{_gin_forward_prepared.1} parent=1 // pred_check
      _
    $region103: #{_gin_forward_prepared.1} parent=1 // pred_check_branch
      %251 = sbr.rel (0) target = $region105
    $region104: #{_gin_forward_prepared.1} parent=1 // pred_region
      %252 = dma.done [#allocation18], 1024
    $region105: #{_gin_forward_prepared.1} parent=1 // pred_fallthru
      _
    // Predicated region
    $region106: #{_gin_forward_prepared.1} parent=1 // pred_check
      _
    $region107: #{_gin_forward_prepared.1} parent=1 // pred_check_branch
      %254 = sbr.rel (0) target = $region109
    $region108: #{_gin_forward_prepared.1} parent=1 // pred_region
      %255 = dma.done [#allocation18], 1024
    $region109: #{_gin_forward_prepared.1} parent=1 // pred_fallthru
      _
    // Predicated region
    $region110: #{_gin_forward_prepared.1} parent=1 // pred_check
      _
    $region111: #{_gin_forward_prepared.1} parent=1 // pred_check_branch
      %257 = sbr.rel (0) target = $region113
    $region112: #{_gin_forward_prepared.1} parent=1 // pred_region
      %258 = dma.done [#allocation21], 1024
    $region113: #{_gin_forward_prepared.1} parent=1 // pred_fallthru
      _
    // Predicated region
    $region114: #{_gin_forward_prepared.1} parent=1 // pred_check
      _
    $region115: #{_gin_forward_prepared.1} parent=1 // pred_check_branch
      %260 = sbr.rel (0) target = $region117
    $region116: #{_gin_forward_prepared.1} parent=1 // pred_region
      %261 = dma.done [#allocation21], 1024
    $region117: #{_gin_forward_prepared.1} parent=1 // pred_fallthru
      _
    // Predicated region
    $region118: #{_gin_forward_prepared.1} parent=1 // pred_check
      _
    $region119: #{_gin_forward_prepared.1} parent=1 // pred_check_branch
      %263 = sbr.rel (0) target = $region121
    $region120: #{_gin_forward_prepared.1} parent=1 // pred_region
      %264 = dma.done [#allocation24], 1024
    $region121: #{_gin_forward_prepared.1} parent=1 // pred_fallthru
      _
    // Predicated region
    $region122: #{_gin_forward_prepared.1} parent=1 // pred_check
      _
    $region123: #{_gin_forward_prepared.1} parent=1 // pred_check_branch
      %266 = sbr.rel (0) target = $region125
    $region124: #{_gin_forward_prepared.1} parent=1 // pred_region
      %267 = dma.done [#allocation24], 1024
    $region125: #{_gin_forward_prepared.1} parent=1 // pred_fallthru
      _
    // Predicated region
    $region126: #{_gin_forward_prepared.1} parent=1 // pred_check
      _
    $region127: #{_gin_forward_prepared.1} parent=1 // pred_check_branch
      %269 = sbr.rel (0) target = $region129
    $region128: #{_gin_forward_prepared.1} parent=1 // pred_region
      %270 = dma.done [#allocation27], 1024
    $region129: #{_gin_forward_prepared.1} parent=1 // pred_fallthru
      _
    %v272 = vld [vmem:[#allocation11] sm:$0xf]
    %v273 = vld [vmem:[#allocation11 + $0x4] sm:$0xf]
    %v274 = vld [vmem:[#allocation11 + $0x8] sm:$0xf]
    %v275 = vld [vmem:[#allocation11 + $0xc] sm:$0xf]
    %v276 = vld [vmem:[#allocation11 + $0x10] sm:$0xf]
    %v277 = vld [vmem:[#allocation11 + $0x14] sm:$0xf]
    %v278 = vld [vmem:[#allocation11 + $0x18] sm:$0xf]
    %v279 = vld [vmem:[#allocation11 + $0x1c] sm:$0xf]
    %v280 = vld [vmem:[#allocation11 + $0x20] sm:$0xf]
    %v281 = vld [vmem:[#allocation11 + $0x24] sm:$0xf]
    %v282 = vld [vmem:[#allocation11 + $0x28] sm:$0xf]
    %v283 = vld [vmem:[#allocation11 + $0x2c] sm:$0xf]
    %v284 = vld [vmem:[#allocation11 + $0x30] sm:$0xf]
    %v285 = vld [vmem:[#allocation11 + $0x34] sm:$0xf]
    %v286 = vld [vmem:[#allocation11 + $0x38] sm:$0xf]
    %v287 = vld [vmem:[#allocation11 + $0x3c] sm:$0xf]
    %v288 = vld [vmem:[#allocation11 + $0x40] sm:$0xf]
    %v289 = vld [vmem:[#allocation11 + $0x44] sm:$0xf]
    %v290 = vld [vmem:[#allocation11 + $0x48] sm:$0xf]
    %v291 = vld [vmem:[#allocation11 + $0x4c] sm:$0xf]
    %v292 = vld [vmem:[#allocation11 + $0x50] sm:$0xf]
    %v293 = vld [vmem:[#allocation11 + $0x54] sm:$0xf]
    %v294 = vld [vmem:[#allocation11 + $0x58] sm:$0xf]
    %v295 = vld [vmem:[#allocation11 + $0x5c] sm:$0xf]
    %v296 = vld [vmem:[#allocation11 + $0x60] sm:$0xf]
    %v297 = vld [vmem:[#allocation11 + $0x64] sm:$0xf]
    %v298 = vld [vmem:[#allocation11 + $0x68] sm:$0xf]
    %v299 = vld [vmem:[#allocation11 + $0x6c] sm:$0xf]
    %v300 = vld [vmem:[#allocation11 + $0x70] sm:$0xf]
    %v301 = vld [vmem:[#allocation11 + $0x74] sm:$0xf]
    %v302 = vld [vmem:[#allocation11 + $0x78] sm:$0xf]
    %v303 = vld [vmem:[#allocation11 + $0x7c] sm:$0xf]
    %v304 = vld [vmem:[#allocation2] sm:$0xff]
    %v305 = vld [vmem:[#allocation2 + $0x8] sm:$0xff]
    %v306 = vld [vmem:[#allocation2 + $0x10] sm:$0xff]
    %v307 = vld [vmem:[#allocation2 + $0x18] sm:$0xff]
    %v308 = vld [vmem:[#allocation2 + $0x20] sm:$0xff]
    %v309 = vld [vmem:[#allocation2 + $0x28] sm:$0xff]
    %v310 = vld [vmem:[#allocation2 + $0x30] sm:$0xff]
    %v311 = vld [vmem:[#allocation2 + $0x38] sm:$0xff]
    %v312 = vld [vmem:[#allocation2 + $0x40] sm:$0xff]
    %v313 = vld [vmem:[#allocation2 + $0x48] sm:$0xff]
    %v314 = vld [vmem:[#allocation2 + $0x50] sm:$0xff]
    %v315 = vld [vmem:[#allocation2 + $0x58] sm:$0xff]
    %v316 = vld [vmem:[#allocation2 + $0x60] sm:$0xff]
    %v317 = vld [vmem:[#allocation2 + $0x68] sm:$0xff]
    %v318 = vld [vmem:[#allocation2 + $0x70] sm:$0xff]
    %v319 = vld [vmem:[#allocation2 + $0x78] sm:$0xff]
    %v320 = vunpack.c.l.s8.bf16 %v304
    %v321 = vunpack.c.l.s8.bf16 %v305
    %v322 = vunpack.c.h.s8.bf16 %v304
    %v323 = vunpack.c.h.s8.bf16 %v305
    %v324 = vunpack.c.l.s8.bf16 %v306
    %v325 = vunpack.c.l.s8.bf16 %v307
    %v326 = vunpack.c.h.s8.bf16 %v306
    %v327 = vunpack.c.h.s8.bf16 %v307
    %v328 = vunpack.c.l.s8.bf16 %v308
    %v329 = vunpack.c.l.s8.bf16 %v309
    %v330 = vunpack.c.h.s8.bf16 %v308
    %v331 = vunpack.c.h.s8.bf16 %v309
    %v332 = vunpack.c.l.s8.bf16 %v310
    %v333 = vunpack.c.l.s8.bf16 %v311
    %v334 = vunpack.c.h.s8.bf16 %v310
    %v335 = vunpack.c.h.s8.bf16 %v311
    %v336 = vunpack.c.l.s8.bf16 %v312
    %v337 = vunpack.c.l.s8.bf16 %v313
    %v338 = vunpack.c.h.s8.bf16 %v312
    %v339 = vunpack.c.h.s8.bf16 %v313
    %v340 = vunpack.c.l.s8.bf16 %v314
    %v341 = vunpack.c.l.s8.bf16 %v315
    %v342 = vunpack.c.h.s8.bf16 %v314
    %v343 = vunpack.c.h.s8.bf16 %v315
    %v344 = vunpack.c.l.s8.bf16 %v316
    %v345 = vunpack.c.l.s8.bf16 %v317
    %v346 = vunpack.c.h.s8.bf16 %v316
    %v347 = vunpack.c.h.s8.bf16 %v317
    %v348 = vunpack.c.l.s8.bf16 %v318
    %v349 = vunpack.c.l.s8.bf16 %v319
    %v350 = vunpack.c.h.s8.bf16 %v318
    %v351 = vunpack.c.h.s8.bf16 %v319
    %v384 = vunpack.c.l.b16 %v272
    %v385 = vunpack.c.l.b16 %v273
    %v386 = vunpack.c.l.b16 %v274
    %v387 = vunpack.c.l.b16 %v275
    %v388 = vunpack.c.l.b16 %v276
    %v389 = vunpack.c.l.b16 %v277
    %v390 = vunpack.c.l.b16 %v278
    %v391 = vunpack.c.l.b16 %v279
    %v392 = vunpack.c.l.b16 %v280
    %v393 = vunpack.c.l.b16 %v281
    %v394 = vunpack.c.l.b16 %v282
    %v395 = vunpack.c.l.b16 %v283
    %v396 = vunpack.c.l.b16 %v284
    %v397 = vunpack.c.l.b16 %v285
    %v398 = vunpack.c.l.b16 %v286
    %v399 = vunpack.c.l.b16 %v287
    %v400 = vunpack.c.l.b16 %v288
    %v401 = vunpack.c.l.b16 %v289
    %v402 = vunpack.c.l.b16 %v290
    %v403 = vunpack.c.l.b16 %v291
    %v404 = vunpack.c.l.b16 %v292
    %v405 = vunpack.c.l.b16 %v293
    %v406 = vunpack.c.l.b16 %v294
    %v407 = vunpack.c.l.b16 %v295
    %v408 = vunpack.c.l.b16 %v296
    %v409 = vunpack.c.l.b16 %v297
    %v410 = vunpack.c.l.b16 %v298
    %v411 = vunpack.c.l.b16 %v299
    %v412 = vunpack.c.l.b16 %v300
    %v413 = vunpack.c.l.b16 %v301
    %v414 = vunpack.c.l.b16 %v302
    %v415 = vunpack.c.l.b16 %v303
    %v416 = vpack.c.b16 %v385, %v384
    %v417 = vpack.c.b16 %v387, %v386
    %v418 = vpack.c.b16 %v389, %v388
    %v419 = vpack.c.b16 %v391, %v390
    %v420 = vpack.c.b16 %v393, %v392
    %v421 = vpack.c.b16 %v395, %v394
    %v422 = vpack.c.b16 %v397, %v396
    %v423 = vpack.c.b16 %v399, %v398
    %v424 = vpack.c.b16 %v401, %v400
    %v425 = vpack.c.b16 %v403, %v402
    %v426 = vpack.c.b16 %v405, %v404
    %v427 = vpack.c.b16 %v407, %v406
    %v428 = vpack.c.b16 %v409, %v408
    %v429 = vpack.c.b16 %v411, %v410
    %v430 = vpack.c.b16 %v413, %v412
    %v431 = vpack.c.b16 %v415, %v414
    %448 = vmatprep.subr.bf16.mxu0 0
    %449 = vmatpush1.bf16.msra.mxu0 %v416
    %450 = vmatprep.subr.bf16.mxu0 0
    %451 = vmatpush1.bf16.msra.mxu0 %v417
    %452 = vmatprep.subr.bf16.mxu0 0
    %453 = vmatpush1.bf16.msra.mxu0 %v418
    %454 = vmatprep.subr.bf16.mxu0 0
    %455 = vmatpush1.bf16.msra.mxu0 %v419
    %456 = vmatprep.subr.bf16.mxu0 0
    %457 = vmatpush1.bf16.msra.mxu0 %v420
    %458 = vmatprep.subr.bf16.mxu0 0
    %459 = vmatpush1.bf16.msra.mxu0 %v421
    %460 = vmatprep.subr.bf16.mxu0 0
    %461 = vmatpush1.bf16.msra.mxu0 %v422
    %462 = vmatprep.subr.bf16.mxu0 0
    %463 = vmatpush1.bf16.msra.mxu0 %v423
    %464 = vmatprep.subr.bf16.mxu0 0
    %465 = vmatpush1.bf16.msra.mxu0 %v424
    %466 = vmatprep.subr.bf16.mxu0 0
    %467 = vmatpush1.bf16.msra.mxu0 %v425
    %468 = vmatprep.subr.bf16.mxu0 0
    %469 = vmatpush1.bf16.msra.mxu0 %v426
    %470 = vmatprep.subr.bf16.mxu0 0
    %471 = vmatpush1.bf16.msra.mxu0 %v427
    %472 = vmatprep.subr.bf16.mxu0 0
    %473 = vmatpush1.bf16.msra.mxu0 %v428
    %474 = vmatprep.subr.bf16.mxu0 0
    %475 = vmatpush1.bf16.msra.mxu0 %v429
    %476 = vmatprep.subr.bf16.mxu0 0
    %477 = vmatpush1.bf16.msra.mxu0 %v430
    %478 = vmatprep.subr.bf16.mxu0 0
    %479 = vmatpush1.bf16.msra.mxu0 %v431
    %480 = vmatprep.mubr.bf16.mxu0 %v321
    %481 = vmatmul.mubr.bf16.gmra.mrb[0].mxu0 %v320
    %v482 = vpop.f32.mrb[0].mxu0
    %v483 = vadd.f32 0.0, %v482
    %v484 = vpop.f32.mrb[0].mxu0
    %v485 = vpop.f32.mrb[0].mxu0
    %v486 = vadd.f32 0.0, %v485
    %v487 = vpop.f32.mrb[0].mxu0
    %488 = vmatprep.mubr.bf16.mxu0 %v323
    %489 = vmatmul.mubr.bf16.gmra.mrb[0].mxu0 %v322
    %v490 = vpop.f32.mrb[0].mxu0
    %v491 = vadd.f32 0.0, %v490
    %v492 = vpop.f32.mrb[0].mxu0
    %v493 = vpop.f32.mrb[0].mxu0
    %v494 = vadd.f32 0.0, %v493
    %v495 = vpop.f32.mrb[0].mxu0
    %496 = vmatprep.mubr.bf16.mxu0 %v325
    %497 = vmatmul.mubr.bf16.gmra.mrb[0].mxu0 %v324
    %v498 = vpop.f32.mrb[0].mxu0
    %v499 = vadd.f32 0.0, %v498
    %v500 = vpop.f32.mrb[0].mxu0
    %v501 = vpop.f32.mrb[0].mxu0
    %v502 = vadd.f32 0.0, %v501
    %v503 = vpop.f32.mrb[0].mxu0
    %504 = vmatprep.mubr.bf16.mxu0 %v327
    %505 = vmatmul.mubr.bf16.gmra.mrb[0].mxu0 %v326
    %v506 = vpop.f32.mrb[0].mxu0
    %v507 = vadd.f32 0.0, %v506
    %v508 = vpop.f32.mrb[0].mxu0
    %v509 = vpop.f32.mrb[0].mxu0
    %v510 = vadd.f32 0.0, %v509
    %v511 = vpop.f32.mrb[0].mxu0
    %512 = vmatprep.mubr.bf16.mxu0 %v329
    %513 = vmatmul.mubr.bf16.gmra.mrb[0].mxu0 %v328
    %v514 = vpop.f32.mrb[0].mxu0
    %v515 = vadd.f32 0.0, %v514
    %v516 = vpop.f32.mrb[0].mxu0
    %v517 = vpop.f32.mrb[0].mxu0
    %v518 = vadd.f32 0.0, %v517
    %v519 = vpop.f32.mrb[0].mxu0
    %520 = vmatprep.mubr.bf16.mxu0 %v331
    %521 = vmatmul.mubr.bf16.gmra.mrb[0].mxu0 %v330
    %v522 = vpop.f32.mrb[0].mxu0
    %v523 = vadd.f32 0.0, %v522
    %v524 = vpop.f32.mrb[0].mxu0
    %v525 = vpop.f32.mrb[0].mxu0
    %v526 = vadd.f32 0.0, %v525
    %v527 = vpop.f32.mrb[0].mxu0
    %528 = vmatprep.mubr.bf16.mxu0 %v333
    %529 = vmatmul.mubr.bf16.gmra.mrb[0].mxu0 %v332
    %v530 = vpop.f32.mrb[0].mxu0
    %v531 = vadd.f32 0.0, %v530
    %v532 = vpop.f32.mrb[0].mxu0
    %v533 = vpop.f32.mrb[0].mxu0
    %v534 = vadd.f32 0.0, %v533
    %v535 = vpop.f32.mrb[0].mxu0
    %536 = vmatprep.mubr.bf16.mxu0 %v335
    %537 = vmatmul.mubr.bf16.gmra.mrb[0].mxu0 %v334
    %v538 = vpop.f32.mrb[0].mxu0
    %v539 = vadd.f32 0.0, %v538
    %v540 = vpop.f32.mrb[0].mxu0
    %v541 = vpop.f32.mrb[0].mxu0
    %v542 = vadd.f32 0.0, %v541
    %v543 = vpop.f32.mrb[0].mxu0
    %544 = vmatprep.mubr.bf16.mxu0 %v337
    %545 = vmatmul.mubr.bf16.gmra.mrb[0].mxu0 %v336
    %v546 = vpop.f32.mrb[0].mxu0
    %v547 = vadd.f32 0.0, %v546
    %v548 = vpop.f32.mrb[0].mxu0
    %v549 = vpop.f32.mrb[0].mxu0
    %v550 = vadd.f32 0.0, %v549
    %v551 = vpop.f32.mrb[0].mxu0
    %552 = vmatprep.mubr.bf16.mxu0 %v339
    %553 = vmatmul.mubr.bf16.gmra.mrb[0].mxu0 %v338
    %v554 = vpop.f32.mrb[0].mxu0
    %v555 = vadd.f32 0.0, %v554
    %v556 = vpop.f32.mrb[0].mxu0
    %v557 = vpop.f32.mrb[0].mxu0
    %v558 = vadd.f32 0.0, %v557
    %v559 = vpop.f32.mrb[0].mxu0
    %560 = vmatprep.mubr.bf16.mxu0 %v341
    %561 = vmatmul.mubr.bf16.gmra.mrb[0].mxu0 %v340
    %v562 = vpop.f32.mrb[0].mxu0
    %v563 = vadd.f32 0.0, %v562
    %v564 = vpop.f32.mrb[0].mxu0
    %v565 = vpop.f32.mrb[0].mxu0
    %v566 = vadd.f32 0.0, %v565
    %v567 = vpop.f32.mrb[0].mxu0
    %568 = vmatprep.mubr.bf16.mxu0 %v343
    %569 = vmatmul.mubr.bf16.gmra.mrb[0].mxu0 %v342
    %v570 = vpop.f32.mrb[0].mxu0
    %v571 = vadd.f32 0.0, %v570
    %v572 = vpop.f32.mrb[0].mxu0
    %v573 = vpop.f32.mrb[0].mxu0
    %v574 = vadd.f32 0.0, %v573
    %v575 = vpop.f32.mrb[0].mxu0
    %576 = vmatprep.mubr.bf16.mxu0 %v345
    %577 = vmatmul.mubr.bf16.gmra.mrb[0].mxu0 %v344
    %v578 = vpop.f32.mrb[0].mxu0
    %v579 = vadd.f32 0.0, %v578
    %v580 = vpop.f32.mrb[0].mxu0
    %v581 = vpop.f32.mrb[0].mxu0
    %v582 = vadd.f32 0.0, %v581
    %v583 = vpop.f32.mrb[0].mxu0
    %584 = vmatprep.mubr.bf16.mxu0 %v347
    %585 = vmatmul.mubr.bf16.gmra.mrb[0].mxu0 %v346
    %v586 = vpop.f32.mrb[0].mxu0
    %v587 = vadd.f32 0.0, %v586
    %v588 = vpop.f32.mrb[0].mxu0
    %v589 = vpop.f32.mrb[0].mxu0
    %v590 = vadd.f32 0.0, %v589
    %v591 = vpop.f32.mrb[0].mxu0
    %592 = vmatprep.mubr.bf16.mxu0 %v349
    %593 = vmatmul.mubr.bf16.gmra.mrb[0].mxu0 %v348
    %v594 = vpop.f32.mrb[0].mxu0
    %v595 = vadd.f32 0.0, %v594
    %v596 = vpop.f32.mrb[0].mxu0
    %v597 = vpop.f32.mrb[0].mxu0
    %v598 = vadd.f32 0.0, %v597
    %v599 = vpop.f32.mrb[0].mxu0
    %600 = vmatprep.mubr.bf16.mxu0 %v351
    %601 = vmatmul.mubr.bf16.gmra.mrb[0].mxu0 %v350
    %v602 = vpop.f32.mrb[0].mxu0
    %v603 = vadd.f32 0.0, %v602
    %v604 = vpop.f32.mrb[0].mxu0
    %v605 = vpop.f32.mrb[0].mxu0
    %v606 = vadd.f32 0.0, %v605
    %v607 = vpop.f32.mrb[0].mxu0
    %608 = vdwg.mxu0
    %v609 = vpack.c.bf16 %v486, %v483
    %v610 = vpack.c.bf16 %v494, %v491
    %v611 = vpack.c.bf16 %v502, %v499
    %v612 = vpack.c.bf16 %v510, %v507
    %v613 = vpack.c.bf16 %v518, %v515
    %v614 = vpack.c.bf16 %v526, %v523
    %v615 = vpack.c.bf16 %v534, %v531
    %v616 = vpack.c.bf16 %v542, %v539
    %v617 = vpack.c.bf16 %v550, %v547
    %v618 = vpack.c.bf16 %v558, %v555
    %v619 = vpack.c.bf16 %v566, %v563
    %v620 = vpack.c.bf16 %v574, %v571
    %v621 = vpack.c.bf16 %v582, %v579
    %v622 = vpack.c.bf16 %v590, %v587
    %v623 = vpack.c.bf16 %v598, %v595
    %v624 = vpack.c.bf16 %v606, %v603
    %v625 = vld [vmem:[#allocation13] sm:$0xf]
    %v626 = vld [vmem:[#allocation13 + $0x4] sm:$0xf]
    %v627 = vld [vmem:[#allocation13 + $0x8] sm:$0xf]
    %v628 = vld [vmem:[#allocation13 + $0xc] sm:$0xf]
    %v629 = vld [vmem:[#allocation13 + $0x10] sm:$0xf]
    %v630 = vld [vmem:[#allocation13 + $0x14] sm:$0xf]
    %v631 = vld [vmem:[#allocation13 + $0x18] sm:$0xf]
    %v632 = vld [vmem:[#allocation13 + $0x1c] sm:$0xf]
    %v633 = vld [vmem:[#allocation13 + $0x20] sm:$0xf]
    %v634 = vld [vmem:[#allocation13 + $0x24] sm:$0xf]
    %v635 = vld [vmem:[#allocation13 + $0x28] sm:$0xf]
    %v636 = vld [vmem:[#allocation13 + $0x2c] sm:$0xf]
    %v637 = vld [vmem:[#allocation13 + $0x30] sm:$0xf]
    %v638 = vld [vmem:[#allocation13 + $0x34] sm:$0xf]
    %v639 = vld [vmem:[#allocation13 + $0x38] sm:$0xf]
    %v640 = vld [vmem:[#allocation13 + $0x3c] sm:$0xf]
    %v657 = vunpack.c.l.b16 %v625
    %v658 = vunpack.c.l.b16 %v626
    %v659 = vunpack.c.l.b16 %v627
    %v660 = vunpack.c.l.b16 %v628
    %v661 = vunpack.c.l.b16 %v629
    %v662 = vunpack.c.l.b16 %v630
    %v663 = vunpack.c.l.b16 %v631
    %v664 = vunpack.c.l.b16 %v632
    %v665 = vunpack.c.l.b16 %v633
    %v666 = vunpack.c.l.b16 %v634
    %v667 = vunpack.c.l.b16 %v635
    %v668 = vunpack.c.l.b16 %v636
    %v669 = vunpack.c.l.b16 %v637
    %v670 = vunpack.c.l.b16 %v638
    %v671 = vunpack.c.l.b16 %v639
    %v672 = vunpack.c.l.b16 %v640
    %v673 = vpack.c.b16 %v658, %v657
    %v674 = vpack.c.b16 %v660, %v659
    %v675 = vpack.c.b16 %v662, %v661
    %v676 = vpack.c.b16 %v664, %v663
    %v677 = vpack.c.b16 %v666, %v665
    %v678 = vpack.c.b16 %v668, %v667
    %v679 = vpack.c.b16 %v670, %v669
    %v680 = vpack.c.b16 %v672, %v671
    %689 = vmatprep.subr.bf16.mxu0 0
    %690 = vmatpush1.bf16.msra.mxu0 %v673
    %691 = vmatprep.subr.bf16.mxu0 0
    %692 = vmatpush1.bf16.msra.mxu0 %v674
    %693 = vmatprep.subr.bf16.mxu0 0
    %694 = vmatpush1.bf16.msra.mxu0 %v675
    %695 = vmatprep.subr.bf16.mxu0 0
    %696 = vmatpush1.bf16.msra.mxu0 %v676
    %697 = vmatprep.subr.bf16.mxu0 0
    %698 = vmatpush1.bf16.msra.mxu0 %v677
    %699 = vmatprep.subr.bf16.mxu0 0
    %700 = vmatpush1.bf16.msra.mxu0 %v678
    %701 = vmatprep.subr.bf16.mxu0 0
    %702 = vmatpush1.bf16.msra.mxu0 %v679
    %703 = vmatprep.subr.bf16.mxu0 0
    %704 = vmatpush1.bf16.msra.mxu0 %v680
    %705 = vmatprep.subr.bf16.mxu0 0
    %706 = vmatpush1.bf16.msra.mxu0 0
    %707 = vmatprep.subr.bf16.mxu0 0
    %708 = vmatpush1.bf16.msra.mxu0 0
    %709 = vmatprep.subr.bf16.mxu0 0
    %710 = vmatpush1.bf16.msra.mxu0 0
    %711 = vmatprep.subr.bf16.mxu0 0
    %712 = vmatpush1.bf16.msra.mxu0 0
    %713 = vmatprep.subr.bf16.mxu0 0
    %714 = vmatpush1.bf16.msra.mxu0 0
    %715 = vmatprep.subr.bf16.mxu0 0
    %716 = vmatpush1.bf16.msra.mxu0 0
    %717 = vmatprep.subr.bf16.mxu0 0
    %718 = vmatpush1.bf16.msra.mxu0 0
    %719 = vmatprep.subr.bf16.mxu0 0
    %720 = vmatpush1.bf16.msra.mxu0 0
    %721 = vmatprep.mubr.bf16.mxu0 0
    %722 = vmatmul.mubr.bf16.gmra.mrb[0].mxu0 %v609
    %v723 = vpop.f32.mrb[0].mxu0
    %v724 = vadd.f32 0.0, %v723
    %v725 = vpop.f32.mrb[0].mxu0
    %v726 = vpop.f32.mrb[0].mxu0
    %v727 = vadd.f32 0.0, %v726
    %v728 = vpop.f32.mrb[0].mxu0
    %729 = vmatprep.mubr.bf16.mxu0 0
    %730 = vmatmul.mubr.bf16.gmra.mrb[0].mxu0 %v610
    %v731 = vpop.f32.mrb[0].mxu0
    %v732 = vadd.f32 0.0, %v731
    %v733 = vpop.f32.mrb[0].mxu0
    %v734 = vpop.f32.mrb[0].mxu0
    %v735 = vadd.f32 0.0, %v734
    %v736 = vpop.f32.mrb[0].mxu0
    %737 = vmatprep.mubr.bf16.mxu0 0
    %738 = vmatmul.mubr.bf16.gmra.mrb[0].mxu0 %v611
    %v739 = vpop.f32.mrb[0].mxu0
    %v740 = vadd.f32 0.0, %v739
    %v741 = vpop.f32.mrb[0].mxu0
    %v742 = vpop.f32.mrb[0].mxu0
    %v743 = vadd.f32 0.0, %v742
    %v744 = vpop.f32.mrb[0].mxu0
    %745 = vmatprep.mubr.bf16.mxu0 0
    %746 = vmatmul.mubr.bf16.gmra.mrb[0].mxu0 %v612
    %v747 = vpop.f32.mrb[0].mxu0
    %v748 = vadd.f32 0.0, %v747
    %v749 = vpop.f32.mrb[0].mxu0
    %v750 = vpop.f32.mrb[0].mxu0
    %v751 = vadd.f32 0.0, %v750
    %v752 = vpop.f32.mrb[0].mxu0
    %753 = vmatprep.mubr.bf16.mxu0 0
    %754 = vmatmul.mubr.bf16.gmra.mrb[0].mxu0 %v613
    %v755 = vpop.f32.mrb[0].mxu0
    %v756 = vadd.f32 0.0, %v755
    %v757 = vpop.f32.mrb[0].mxu0
    %v758 = vpop.f32.mrb[0].mxu0
    %v759 = vadd.f32 0.0, %v758
    %v760 = vpop.f32.mrb[0].mxu0
    %761 = vmatprep.mubr.bf16.mxu0 0
    %762 = vmatmul.mubr.bf16.gmra.mrb[0].mxu0 %v614
    %v763 = vpop.f32.mrb[0].mxu0
    %v764 = vadd.f32 0.0, %v763
    %v765 = vpop.f32.mrb[0].mxu0
    %v766 = vpop.f32.mrb[0].mxu0
    %v767 = vadd.f32 0.0, %v766
    %v768 = vpop.f32.mrb[0].mxu0
    %769 = vmatprep.mubr.bf16.mxu0 0
    %770 = vmatmul.mubr.bf16.gmra.mrb[0].mxu0 %v615
    %v771 = vpop.f32.mrb[0].mxu0
    %v772 = vadd.f32 0.0, %v771
    %v773 = vpop.f32.mrb[0].mxu0
    %v774 = vpop.f32.mrb[0].mxu0
    %v775 = vadd.f32 0.0, %v774
    %v776 = vpop.f32.mrb[0].mxu0
    %777 = vmatprep.mubr.bf16.mxu0 0
    %778 = vmatmul.mubr.bf16.gmra.mrb[0].mxu0 %v616
    %v779 = vpop.f32.mrb[0].mxu0
    %v780 = vadd.f32 0.0, %v779
    %v781 = vpop.f32.mrb[0].mxu0
    %v782 = vpop.f32.mrb[0].mxu0
    %v783 = vadd.f32 0.0, %v782
    %v784 = vpop.f32.mrb[0].mxu0
    %785 = vmatprep.mubr.bf16.mxu0 0
    %786 = vmatmul.mubr.bf16.gmra.mrb[0].mxu0 %v617
    %v787 = vpop.f32.mrb[0].mxu0
    %v788 = vadd.f32 0.0, %v787
    %v789 = vpop.f32.mrb[0].mxu0
    %v790 = vpop.f32.mrb[0].mxu0
    %v791 = vadd.f32 0.0, %v790
    %v792 = vpop.f32.mrb[0].mxu0
    %793 = vmatprep.mubr.bf16.mxu0 0
    %794 = vmatmul.mubr.bf16.gmra.mrb[0].mxu0 %v618
    %v795 = vpop.f32.mrb[0].mxu0
    %v796 = vadd.f32 0.0, %v795
    %v797 = vpop.f32.mrb[0].mxu0
    %v798 = vpop.f32.mrb[0].mxu0
    %v799 = vadd.f32 0.0, %v798
    %v800 = vpop.f32.mrb[0].mxu0
    %801 = vmatprep.mubr.bf16.mxu0 0
    %802 = vmatmul.mubr.bf16.gmra.mrb[0].mxu0 %v619
    %v803 = vpop.f32.mrb[0].mxu0
    %v804 = vadd.f32 0.0, %v803
    %v805 = vpop.f32.mrb[0].mxu0
    %v806 = vpop.f32.mrb[0].mxu0
    %v807 = vadd.f32 0.0, %v806
    %v808 = vpop.f32.mrb[0].mxu0
    %809 = vmatprep.mubr.bf16.mxu0 0
    %810 = vmatmul.mubr.bf16.gmra.mrb[0].mxu0 %v620
    %v811 = vpop.f32.mrb[0].mxu0
    %v812 = vadd.f32 0.0, %v811
    %v813 = vpop.f32.mrb[0].mxu0
    %v814 = vpop.f32.mrb[0].mxu0
    %v815 = vadd.f32 0.0, %v814
    %v816 = vpop.f32.mrb[0].mxu0
    %817 = vmatprep.mubr.bf16.mxu0 0
    %818 = vmatmul.mubr.bf16.gmra.mrb[0].mxu0 %v621
    %v819 = vpop.f32.mrb[0].mxu0
    %v820 = vadd.f32 0.0, %v819
    %v821 = vpop.f32.mrb[0].mxu0
    %v822 = vpop.f32.mrb[0].mxu0
    %v823 = vadd.f32 0.0, %v822
    %v824 = vpop.f32.mrb[0].mxu0
    %825 = vmatprep.mubr.bf16.mxu0 0
    %826 = vmatmul.mubr.bf16.gmra.mrb[0].mxu0 %v622
    %v827 = vpop.f32.mrb[0].mxu0
    %v828 = vadd.f32 0.0, %v827
    %v829 = vpop.f32.mrb[0].mxu0
    %v830 = vpop.f32.mrb[0].mxu0
    %v831 = vadd.f32 0.0, %v830
    %v832 = vpop.f32.mrb[0].mxu0
    %833 = vmatprep.mubr.bf16.mxu0 0
    %834 = vmatmul.mubr.bf16.gmra.mrb[0].mxu0 %v623
    %v835 = vpop.f32.mrb[0].mxu0
    %v836 = vadd.f32 0.0, %v835
    %v837 = vpop.f32.mrb[0].mxu0
    %v838 = vpop.f32.mrb[0].mxu0
    %v839 = vadd.f32 0.0, %v838
    %v840 = vpop.f32.mrb[0].mxu0
    %841 = vmatprep.mubr.bf16.mxu0 0
    %842 = vmatmul.mubr.bf16.gmra.mrb[0].mxu0 %v624
    %v843 = vpop.f32.mrb[0].mxu0
    %v844 = vadd.f32 0.0, %v843
    %v845 = vpop.f32.mrb[0].mxu0
    %v846 = vpop.f32.mrb[0].mxu0
    %v847 = vadd.f32 0.0, %v846
    %v848 = vpop.f32.mrb[0].mxu0
    %849 = vdwg.mxu0
    %v850 = vmax.f32 %v724, 0.0
    %v851 = vmax.f32 %v727, 0.0
    %v852 = vmax.f32 %v732, 0.0
    %v853 = vmax.f32 %v735, 0.0
    %v854 = vmax.f32 %v740, 0.0
    %v855 = vmax.f32 %v743, 0.0
    %v856 = vmax.f32 %v748, 0.0
    %v857 = vmax.f32 %v751, 0.0
    %v858 = vmax.f32 %v756, 0.0
    %v859 = vmax.f32 %v759, 0.0
    %v860 = vmax.f32 %v764, 0.0
    %v861 = vmax.f32 %v767, 0.0
    %v862 = vmax.f32 %v772, 0.0
    %v863 = vmax.f32 %v775, 0.0
    %v864 = vmax.f32 %v780, 0.0
    %v865 = vmax.f32 %v783, 0.0
    %v866 = vmax.f32 %v788, 0.0
    %v867 = vmax.f32 %v791, 0.0
    %v868 = vmax.f32 %v796, 0.0
    %v869 = vmax.f32 %v799, 0.0
    %v870 = vmax.f32 %v804, 0.0
    %v871 = vmax.f32 %v807, 0.0
    %v872 = vmax.f32 %v812, 0.0
    %v873 = vmax.f32 %v815, 0.0
    %v874 = vmax.f32 %v820, 0.0
    %v875 = vmax.f32 %v823, 0.0
    %v876 = vmax.f32 %v828, 0.0
    %v877 = vmax.f32 %v831, 0.0
    %v878 = vmax.f32 %v836, 0.0
    %v879 = vmax.f32 %v839, 0.0
    %v880 = vmax.f32 %v844, 0.0
    %v881 = vmax.f32 %v847, 0.0
    %v882 = vpack.c.bf16 %v851, %v850
    %v883 = vpack.c.bf16 %v853, %v852
    %v884 = vpack.c.bf16 %v855, %v854
    %v885 = vpack.c.bf16 %v857, %v856
    %v886 = vpack.c.bf16 %v859, %v858
    %v887 = vpack.c.bf16 %v861, %v860
    %v888 = vpack.c.bf16 %v863, %v862
    %v889 = vpack.c.bf16 %v865, %v864
    %v890 = vpack.c.bf16 %v867, %v866
    %v891 = vpack.c.bf16 %v869, %v868
    %v892 = vpack.c.bf16 %v871, %v870
    %v893 = vpack.c.bf16 %v873, %v872
    %v894 = vpack.c.bf16 %v875, %v874
    %v895 = vpack.c.bf16 %v877, %v876
    %v896 = vpack.c.bf16 %v879, %v878
    %v897 = vpack.c.bf16 %v881, %v880
    %v898 = vld [vmem:[#allocation14] sm:$0xf]
    %v899 = vld [vmem:[#allocation14 + $0x4] sm:$0xf]
    %v900 = vld [vmem:[#allocation14 + $0x8] sm:$0xf]
    %v901 = vld [vmem:[#allocation14 + $0xc] sm:$0xf]
    %v902 = vld [vmem:[#allocation14 + $0x10] sm:$0xf]
    %v903 = vld [vmem:[#allocation14 + $0x14] sm:$0xf]
    %v904 = vld [vmem:[#allocation14 + $0x18] sm:$0xf]
    %v905 = vld [vmem:[#allocation14 + $0x1c] sm:$0xf]
    %v906 = vld [vmem:[#allocation14 + $0x20] sm:$0xf]
    %v907 = vld [vmem:[#allocation14 + $0x24] sm:$0xf]
    %v908 = vld [vmem:[#allocation14 + $0x28] sm:$0xf]
    %v909 = vld [vmem:[#allocation14 + $0x2c] sm:$0xf]
    %v910 = vld [vmem:[#allocation14 + $0x30] sm:$0xf]
    %v911 = vld [vmem:[#allocation14 + $0x34] sm:$0xf]
    %v912 = vld [vmem:[#allocation14 + $0x38] sm:$0xf]
    %v913 = vld [vmem:[#allocation14 + $0x3c] sm:$0xf]
    %v930 = vunpack.c.l.b16 %v898
    %v931 = vunpack.c.l.b16 %v899
    %v932 = vunpack.c.l.b16 %v900
    %v933 = vunpack.c.l.b16 %v901
    %v934 = vunpack.c.l.b16 %v902
    %v935 = vunpack.c.l.b16 %v903
    %v936 = vunpack.c.l.b16 %v904
    %v937 = vunpack.c.l.b16 %v905
    %v938 = vunpack.c.l.b16 %v906
    %v939 = vunpack.c.l.b16 %v907
    %v940 = vunpack.c.l.b16 %v908
    %v941 = vunpack.c.l.b16 %v909
    %v942 = vunpack.c.l.b16 %v910
    %v943 = vunpack.c.l.b16 %v911
    %v944 = vunpack.c.l.b16 %v912
    %v945 = vunpack.c.l.b16 %v913
    %v946 = vpack.c.b16 %v931, %v930
    %v947 = vpack.c.b16 %v933, %v932
    %v948 = vpack.c.b16 %v935, %v934
    %v949 = vpack.c.b16 %v937, %v936
    %v950 = vpack.c.b16 %v939, %v938
    %v951 = vpack.c.b16 %v941, %v940
    %v952 = vpack.c.b16 %v943, %v942
    %v953 = vpack.c.b16 %v945, %v944
    %962 = vmatprep.subr.bf16.mxu0 0
    %963 = vmatpush1.bf16.msra.mxu0 %v946
    %964 = vmatprep.subr.bf16.mxu0 0
    %965 = vmatpush1.bf16.msra.mxu0 %v947
    %966 = vmatprep.subr.bf16.mxu0 0
    %967 = vmatpush1.bf16.msra.mxu0 %v948
    %968 = vmatprep.subr.bf16.mxu0 0
    %969 = vmatpush1.bf16.msra.mxu0 %v949
    %970 = vmatprep.subr.bf16.mxu0 0
    %971 = vmatpush1.bf16.msra.mxu0 %v950
    %972 = vmatprep.subr.bf16.mxu0 0
    %973 = vmatpush1.bf16.msra.mxu0 %v951
    %974 = vmatprep.subr.bf16.mxu0 0
    %975 = vmatpush1.bf16.msra.mxu0 %v952
    %976 = vmatprep.subr.bf16.mxu0 0
    %977 = vmatpush1.bf16.msra.mxu0 %v953
    %978 = vmatprep.subr.bf16.mxu0 0
    %979 = vmatpush1.bf16.msra.mxu0 0
    %980 = vmatprep.subr.bf16.mxu0 0
    %981 = vmatpush1.bf16.msra.mxu0 0
    %982 = vmatprep.subr.bf16.mxu0 0
    %983 = vmatpush1.bf16.msra.mxu0 0
    %984 = vmatprep.subr.bf16.mxu0 0
    %985 = vmatpush1.bf16.msra.mxu0 0
    %986 = vmatprep.subr.bf16.mxu0 0
    %987 = vmatpush1.bf16.msra.mxu0 0
    %988 = vmatprep.subr.bf16.mxu0 0
    %989 = vmatpush1.bf16.msra.mxu0 0
    %990 = vmatprep.subr.bf16.mxu0 0
    %991 = vmatpush1.bf16.msra.mxu0 0
    %992 = vmatprep.subr.bf16.mxu0 0
    %993 = vmatpush1.bf16.msra.mxu0 0
    %994 = vmatprep.mubr.bf16.mxu0 0
    %995 = vmatmul.mubr.bf16.gmra.mrb[0].mxu0 %v882
    %v996 = vpop.f32.mrb[0].mxu0
    %v997 = vadd.f32 0.0, %v996
    %v998 = vpop.f32.mrb[0].mxu0
    %v999 = vpop.f32.mrb[0].mxu0
    %v1000 = vadd.f32 0.0, %v999
    %v1001 = vpop.f32.mrb[0].mxu0
    %1002 = vmatprep.mubr.bf16.mxu0 0
    %1003 = vmatmul.mubr.bf16.gmra.mrb[0].mxu0 %v883
    %v1004 = vpop.f32.mrb[0].mxu0
    %v1005 = vadd.f32 0.0, %v1004
    %v1006 = vpop.f32.mrb[0].mxu0
    %v1007 = vpop.f32.mrb[0].mxu0
    %v1008 = vadd.f32 0.0, %v1007
    %v1009 = vpop.f32.mrb[0].mxu0
    %1010 = vmatprep.mubr.bf16.mxu0 0
    %1011 = vmatmul.mubr.bf16.gmra.mrb[0].mxu0 %v884
    %v1012 = vpop.f32.mrb[0].mxu0
    %v1013 = vadd.f32 0.0, %v1012
    %v1014 = vpop.f32.mrb[0].mxu0
    %v1015 = vpop.f32.mrb[0].mxu0
    %v1016 = vadd.f32 0.0, %v1015
    %v1017 = vpop.f32.mrb[0].mxu0
    %1018 = vmatprep.mubr.bf16.mxu0 0
    %1019 = vmatmul.mubr.bf16.gmra.mrb[0].mxu0 %v885
    %v1020 = vpop.f32.mrb[0].mxu0
    %v1021 = vadd.f32 0.0, %v1020
    %v1022 = vpop.f32.mrb[0].mxu0
    %v1023 = vpop.f32.mrb[0].mxu0
    %v1024 = vadd.f32 0.0, %v1023
    %v1025 = vpop.f32.mrb[0].mxu0
    %1026 = vmatprep.mubr.bf16.mxu0 0
    %1027 = vmatmul.mubr.bf16.gmra.mrb[0].mxu0 %v886
    %v1028 = vpop.f32.mrb[0].mxu0
    %v1029 = vadd.f32 0.0, %v1028
    %v1030 = vpop.f32.mrb[0].mxu0
    %v1031 = vpop.f32.mrb[0].mxu0
    %v1032 = vadd.f32 0.0, %v1031
    %v1033 = vpop.f32.mrb[0].mxu0
    %1034 = vmatprep.mubr.bf16.mxu0 0
    %1035 = vmatmul.mubr.bf16.gmra.mrb[0].mxu0 %v887
    %v1036 = vpop.f32.mrb[0].mxu0
    %v1037 = vadd.f32 0.0, %v1036
    %v1038 = vpop.f32.mrb[0].mxu0
    %v1039 = vpop.f32.mrb[0].mxu0
    %v1040 = vadd.f32 0.0, %v1039
    %v1041 = vpop.f32.mrb[0].mxu0
    %1042 = vmatprep.mubr.bf16.mxu0 0
    %1043 = vmatmul.mubr.bf16.gmra.mrb[0].mxu0 %v888
    %v1044 = vpop.f32.mrb[0].mxu0
    %v1045 = vadd.f32 0.0, %v1044
    %v1046 = vpop.f32.mrb[0].mxu0
    %v1047 = vpop.f32.mrb[0].mxu0
    %v1048 = vadd.f32 0.0, %v1047
    %v1049 = vpop.f32.mrb[0].mxu0
    %1050 = vmatprep.mubr.bf16.mxu0 0
    %1051 = vmatmul.mubr.bf16.gmra.mrb[0].mxu0 %v889
    %v1052 = vpop.f32.mrb[0].mxu0
    %v1053 = vadd.f32 0.0, %v1052
    %v1054 = vpop.f32.mrb[0].mxu0
    %v1055 = vpop.f32.mrb[0].mxu0
    %v1056 = vadd.f32 0.0, %v1055
    %v1057 = vpop.f32.mrb[0].mxu0
    %1058 = vmatprep.mubr.bf16.mxu0 0
    %1059 = vmatmul.mubr.bf16.gmra.mrb[0].mxu0 %v890
    %v1060 = vpop.f32.mrb[0].mxu0
    %v1061 = vadd.f32 0.0, %v1060
    %v1062 = vpop.f32.mrb[0].mxu0
    %v1063 = vpop.f32.mrb[0].mxu0
    %v1064 = vadd.f32 0.0, %v1063
    %v1065 = vpop.f32.mrb[0].mxu0
    %1066 = vmatprep.mubr.bf16.mxu0 0
    %1067 = vmatmul.mubr.bf16.gmra.mrb[0].mxu0 %v891
    %v1068 = vpop.f32.mrb[0].mxu0
    %v1069 = vadd.f32 0.0, %v1068
    %v1070 = vpop.f32.mrb[0].mxu0
    %v1071 = vpop.f32.mrb[0].mxu0
    %v1072 = vadd.f32 0.0, %v1071
    %v1073 = vpop.f32.mrb[0].mxu0
    %1074 = vmatprep.mubr.bf16.mxu0 0
    %1075 = vmatmul.mubr.bf16.gmra.mrb[0].mxu0 %v892
    %v1076 = vpop.f32.mrb[0].mxu0
    %v1077 = vadd.f32 0.0, %v1076
    %v1078 = vpop.f32.mrb[0].mxu0
    %v1079 = vpop.f32.mrb[0].mxu0
    %v1080 = vadd.f32 0.0, %v1079
    %v1081 = vpop.f32.mrb[0].mxu0
    %1082 = vmatprep.mubr.bf16.mxu0 0
    %1083 = vmatmul.mubr.bf16.gmra.mrb[0].mxu0 %v893
    %v1084 = vpop.f32.mrb[0].mxu0
    %v1085 = vadd.f32 0.0, %v1084
    %v1086 = vpop.f32.mrb[0].mxu0
    %v1087 = vpop.f32.mrb[0].mxu0
    %v1088 = vadd.f32 0.0, %v1087
    %v1089 = vpop.f32.mrb[0].mxu0
    %1090 = vmatprep.mubr.bf16.mxu0 0
    %1091 = vmatmul.mubr.bf16.gmra.mrb[0].mxu0 %v894
    %v1092 = vpop.f32.mrb[0].mxu0
    %v1093 = vadd.f32 0.0, %v1092
    %v1094 = vpop.f32.mrb[0].mxu0
    %v1095 = vpop.f32.mrb[0].mxu0
    %v1096 = vadd.f32 0.0, %v1095
    %v1097 = vpop.f32.mrb[0].mxu0
    %1098 = vmatprep.mubr.bf16.mxu0 0
    %1099 = vmatmul.mubr.bf16.gmra.mrb[0].mxu0 %v895
    %v1100 = vpop.f32.mrb[0].mxu0
    %v1101 = vadd.f32 0.0, %v1100
    %v1102 = vpop.f32.mrb[0].mxu0
    %v1103 = vpop.f32.mrb[0].mxu0
    %v1104 = vadd.f32 0.0, %v1103
    %v1105 = vpop.f32.mrb[0].mxu0
    %1106 = vmatprep.mubr.bf16.mxu0 0
    %1107 = vmatmul.mubr.bf16.gmra.mrb[0].mxu0 %v896
    %v1108 = vpop.f32.mrb[0].mxu0
    %v1109 = vadd.f32 0.0, %v1108
    %v1110 = vpop.f32.mrb[0].mxu0
    %v1111 = vpop.f32.mrb[0].mxu0
    %v1112 = vadd.f32 0.0, %v1111
    %v1113 = vpop.f32.mrb[0].mxu0
    %1114 = vmatprep.mubr.bf16.mxu0 0
    %1115 = vmatmul.mubr.bf16.gmra.mrb[0].mxu0 %v897
    %v1116 = vpop.f32.mrb[0].mxu0
    %v1117 = vadd.f32 0.0, %v1116
    %v1118 = vpop.f32.mrb[0].mxu0
    %v1119 = vpop.f32.mrb[0].mxu0
    %v1120 = vadd.f32 0.0, %v1119
    %v1121 = vpop.f32.mrb[0].mxu0
    %1122 = vdwg.mxu0
    %v1123 = vmax.f32 %v997, 0.0
    %v1124 = vmax.f32 %v1000, 0.0
    %v1125 = vmax.f32 %v1005, 0.0
    %v1126 = vmax.f32 %v1008, 0.0
    %v1127 = vmax.f32 %v1013, 0.0
    %v1128 = vmax.f32 %v1016, 0.0
    %v1129 = vmax.f32 %v1021, 0.0
    %v1130 = vmax.f32 %v1024, 0.0
    %v1131 = vmax.f32 %v1029, 0.0
    %v1132 = vmax.f32 %v1032, 0.0
    %v1133 = vmax.f32 %v1037, 0.0
    %v1134 = vmax.f32 %v1040, 0.0
    %v1135 = vmax.f32 %v1045, 0.0
    %v1136 = vmax.f32 %v1048, 0.0
    %v1137 = vmax.f32 %v1053, 0.0
    %v1138 = vmax.f32 %v1056, 0.0
    %v1139 = vmax.f32 %v1061, 0.0
    %v1140 = vmax.f32 %v1064, 0.0
    %v1141 = vmax.f32 %v1069, 0.0
    %v1142 = vmax.f32 %v1072, 0.0
    %v1143 = vmax.f32 %v1077, 0.0
    %v1144 = vmax.f32 %v1080, 0.0
    %v1145 = vmax.f32 %v1085, 0.0
    %v1146 = vmax.f32 %v1088, 0.0
    %v1147 = vmax.f32 %v1093, 0.0
    %v1148 = vmax.f32 %v1096, 0.0
    %v1149 = vmax.f32 %v1101, 0.0
    %v1150 = vmax.f32 %v1104, 0.0
    %v1151 = vmax.f32 %v1109, 0.0
    %v1152 = vmax.f32 %v1112, 0.0
    %v1153 = vmax.f32 %v1117, 0.0
    %v1154 = vmax.f32 %v1120, 0.0
    %v1155 = vpack.c.bf16 %v1124, %v1123
    %v1156 = vpack.c.bf16 %v1126, %v1125
    %v1157 = vpack.c.bf16 %v1128, %v1127
    %v1158 = vpack.c.bf16 %v1130, %v1129
    %v1159 = vpack.c.bf16 %v1132, %v1131
    %v1160 = vpack.c.bf16 %v1134, %v1133
    %v1161 = vpack.c.bf16 %v1136, %v1135
    %v1162 = vpack.c.bf16 %v1138, %v1137
    %v1163 = vpack.c.bf16 %v1140, %v1139
    %v1164 = vpack.c.bf16 %v1142, %v1141
    %v1165 = vpack.c.bf16 %v1144, %v1143
    %v1166 = vpack.c.bf16 %v1146, %v1145
    %v1167 = vpack.c.bf16 %v1148, %v1147
    %v1168 = vpack.c.bf16 %v1150, %v1149
    %v1169 = vpack.c.bf16 %v1152, %v1151
    %v1170 = vpack.c.bf16 %v1154, %v1153
    %v1171 = vld [vmem:[#allocation5] sm:$0xff]
    %v1172 = vld [vmem:[#allocation5 + $0x8] sm:$0xff]
    %v1173 = vld [vmem:[#allocation5 + $0x10] sm:$0xff]
    %v1174 = vld [vmem:[#allocation5 + $0x18] sm:$0xff]
    %v1175 = vld [vmem:[#allocation5 + $0x20] sm:$0xff]
    %v1176 = vld [vmem:[#allocation5 + $0x28] sm:$0xff]
    %v1177 = vld [vmem:[#allocation5 + $0x30] sm:$0xff]
    %v1178 = vld [vmem:[#allocation5 + $0x38] sm:$0xff]
    %v1179 = vld [vmem:[#allocation5 + $0x40] sm:$0xff]
    %v1180 = vld [vmem:[#allocation5 + $0x48] sm:$0xff]
    %v1181 = vld [vmem:[#allocation5 + $0x50] sm:$0xff]
    %v1182 = vld [vmem:[#allocation5 + $0x58] sm:$0xff]
    %v1183 = vld [vmem:[#allocation5 + $0x60] sm:$0xff]
    %v1184 = vld [vmem:[#allocation5 + $0x68] sm:$0xff]
    %v1185 = vld [vmem:[#allocation5 + $0x70] sm:$0xff]
    %v1186 = vld [vmem:[#allocation5 + $0x78] sm:$0xff]
    %v1187 = vunpack.c.l.s8.bf16 %v1171
    %v1188 = vunpack.c.l.s8.bf16 %v1172
    %v1189 = vunpack.c.h.s8.bf16 %v1171
    %v1190 = vunpack.c.h.s8.bf16 %v1172
    %v1191 = vunpack.c.l.s8.bf16 %v1173
    %v1192 = vunpack.c.l.s8.bf16 %v1174
    %v1193 = vunpack.c.h.s8.bf16 %v1173
    %v1194 = vunpack.c.h.s8.bf16 %v1174
    %v1195 = vunpack.c.l.s8.bf16 %v1175
    %v1196 = vunpack.c.l.s8.bf16 %v1176
    %v1197 = vunpack.c.h.s8.bf16 %v1175
    %v1198 = vunpack.c.h.s8.bf16 %v1176
    %v1199 = vunpack.c.l.s8.bf16 %v1177
    %v1200 = vunpack.c.l.s8.bf16 %v1178
    %v1201 = vunpack.c.h.s8.bf16 %v1177
    %v1202 = vunpack.c.h.s8.bf16 %v1178
    %v1203 = vunpack.c.l.s8.bf16 %v1179
    %v1204 = vunpack.c.l.s8.bf16 %v1180
    %v1205 = vunpack.c.h.s8.bf16 %v1179
    %v1206 = vunpack.c.h.s8.bf16 %v1180
    %v1207 = vunpack.c.l.s8.bf16 %v1181
    %v1208 = vunpack.c.l.s8.bf16 %v1182
    %v1209 = vunpack.c.h.s8.bf16 %v1181
    %v1210 = vunpack.c.h.s8.bf16 %v1182
    %v1211 = vunpack.c.l.s8.bf16 %v1183
    %v1212 = vunpack.c.l.s8.bf16 %v1184
    %v1213 = vunpack.c.h.s8.bf16 %v1183
    %v1214 = vunpack.c.h.s8.bf16 %v1184
    %v1215 = vunpack.c.l.s8.bf16 %v1185
    %v1216 = vunpack.c.l.s8.bf16 %v1186
    %v1217 = vunpack.c.h.s8.bf16 %v1185
    %v1218 = vunpack.c.h.s8.bf16 %v1186
    %1219 = vmatprep.subr.bf16.mxu0 0
    %1220 = vmatpush1.bf16.msra.mxu0 %v1155
    %1221 = vmatprep.subr.bf16.mxu0 0
    %1222 = vmatpush1.bf16.msra.mxu0 %v1156
    %1223 = vmatprep.subr.bf16.mxu0 0
    %1224 = vmatpush1.bf16.msra.mxu0 %v1157
    %1225 = vmatprep.subr.bf16.mxu0 0
    %1226 = vmatpush1.bf16.msra.mxu0 %v1158
    %1227 = vmatprep.subr.bf16.mxu0 0
    %1228 = vmatpush1.bf16.msra.mxu0 %v1159
    %1229 = vmatprep.subr.bf16.mxu0 0
    %1230 = vmatpush1.bf16.msra.mxu0 %v1160
    %1231 = vmatprep.subr.bf16.mxu0 0
    %1232 = vmatpush1.bf16.msra.mxu0 %v1161
    %1233 = vmatprep.subr.bf16.mxu0 0
    %1234 = vmatpush1.bf16.msra.mxu0 %v1162
    %1235 = vmatprep.subr.bf16.mxu0 0
    %1236 = vmatpush1.bf16.msra.mxu0 %v1163
    %1237 = vmatprep.subr.bf16.mxu0 0
    %1238 = vmatpush1.bf16.msra.mxu0 %v1164
    %1239 = vmatprep.subr.bf16.mxu0 0
    %1240 = vmatpush1.bf16.msra.mxu0 %v1165
    %1241 = vmatprep.subr.bf16.mxu0 0
    %1242 = vmatpush1.bf16.msra.mxu0 %v1166
    %1243 = vmatprep.subr.bf16.mxu0 0
    %1244 = vmatpush1.bf16.msra.mxu0 %v1167
    %1245 = vmatprep.subr.bf16.mxu0 0
    %1246 = vmatpush1.bf16.msra.mxu0 %v1168
    %1247 = vmatprep.subr.bf16.mxu0 0
    %1248 = vmatpush1.bf16.msra.mxu0 %v1169
    %1249 = vmatprep.subr.bf16.mxu0 0
    %1250 = vmatpush1.bf16.msra.mxu0 %v1170
    %1251 = vmatprep.mubr.bf16.mxu0 %v1188
    %1252 = vmatmul.mubr.bf16.gmra.mrb[0].mxu0 %v1187
    %v1253 = vpop.f32.mrb[0].mxu0
    %v1254 = vadd.f32 0.0, %v1253
    %v1255 = vpop.f32.mrb[0].mxu0
    %v1256 = vpop.f32.mrb[0].mxu0
    %v1257 = vadd.f32 0.0, %v1256
    %v1258 = vpop.f32.mrb[0].mxu0
    %1259 = vmatprep.mubr.bf16.mxu0 %v1190
    %1260 = vmatmul.mubr.bf16.gmra.mrb[0].mxu0 %v1189
    %v1261 = vpop.f32.mrb[0].mxu0
    %v1262 = vadd.f32 0.0, %v1261
    %v1263 = vpop.f32.mrb[0].mxu0
    %v1264 = vpop.f32.mrb[0].mxu0
    %v1265 = vadd.f32 0.0, %v1264
    %v1266 = vpop.f32.mrb[0].mxu0
    %1267 = vmatprep.mubr.bf16.mxu0 %v1192
    %1268 = vmatmul.mubr.bf16.gmra.mrb[0].mxu0 %v1191
    %v1269 = vpop.f32.mrb[0].mxu0
    %v1270 = vadd.f32 0.0, %v1269
    %v1271 = vpop.f32.mrb[0].mxu0
    %v1272 = vpop.f32.mrb[0].mxu0
    %v1273 = vadd.f32 0.0, %v1272
    %v1274 = vpop.f32.mrb[0].mxu0
    %1275 = vmatprep.mubr.bf16.mxu0 %v1194
    %1276 = vmatmul.mubr.bf16.gmra.mrb[0].mxu0 %v1193
    %v1277 = vpop.f32.mrb[0].mxu0
    %v1278 = vadd.f32 0.0, %v1277
    %v1279 = vpop.f32.mrb[0].mxu0
    %v1280 = vpop.f32.mrb[0].mxu0
    %v1281 = vadd.f32 0.0, %v1280
    %v1282 = vpop.f32.mrb[0].mxu0
    %1283 = vmatprep.mubr.bf16.mxu0 %v1196
    %1284 = vmatmul.mubr.bf16.gmra.mrb[0].mxu0 %v1195
    %v1285 = vpop.f32.mrb[0].mxu0
    %v1286 = vadd.f32 0.0, %v1285
    %v1287 = vpop.f32.mrb[0].mxu0
    %v1288 = vpop.f32.mrb[0].mxu0
    %v1289 = vadd.f32 0.0, %v1288
    %v1290 = vpop.f32.mrb[0].mxu0
    %1291 = vmatprep.mubr.bf16.mxu0 %v1198
    %1292 = vmatmul.mubr.bf16.gmra.mrb[0].mxu0 %v1197
    %v1293 = vpop.f32.mrb[0].mxu0
    %v1294 = vadd.f32 0.0, %v1293
    %v1295 = vpop.f32.mrb[0].mxu0
    %v1296 = vpop.f32.mrb[0].mxu0
    %v1297 = vadd.f32 0.0, %v1296
    %v1298 = vpop.f32.mrb[0].mxu0
    %1299 = vmatprep.mubr.bf16.mxu0 %v1200
    %1300 = vmatmul.mubr.bf16.gmra.mrb[0].mxu0 %v1199
    %v1301 = vpop.f32.mrb[0].mxu0
    %v1302 = vadd.f32 0.0, %v1301
    %v1303 = vpop.f32.mrb[0].mxu0
    %v1304 = vpop.f32.mrb[0].mxu0
    %v1305 = vadd.f32 0.0, %v1304
    %v1306 = vpop.f32.mrb[0].mxu0
    %1307 = vmatprep.mubr.bf16.mxu0 %v1202
    %1308 = vmatmul.mubr.bf16.gmra.mrb[0].mxu0 %v1201
    %v1309 = vpop.f32.mrb[0].mxu0
    %v1310 = vadd.f32 0.0, %v1309
    %v1311 = vpop.f32.mrb[0].mxu0
    %v1312 = vpop.f32.mrb[0].mxu0
    %v1313 = vadd.f32 0.0, %v1312
    %v1314 = vpop.f32.mrb[0].mxu0
    %1315 = vmatprep.mubr.bf16.mxu0 %v1204
    %1316 = vmatmul.mubr.bf16.gmra.mrb[0].mxu0 %v1203
    %v1317 = vpop.f32.mrb[0].mxu0
    %v1318 = vadd.f32 0.0, %v1317
    %v1319 = vpop.f32.mrb[0].mxu0
    %v1320 = vpop.f32.mrb[0].mxu0
    %v1321 = vadd.f32 0.0, %v1320
    %v1322 = vpop.f32.mrb[0].mxu0
    %1323 = vmatprep.mubr.bf16.mxu0 %v1206
    %1324 = vmatmul.mubr.bf16.gmra.mrb[0].mxu0 %v1205
    %v1325 = vpop.f32.mrb[0].mxu0
    %v1326 = vadd.f32 0.0, %v1325
    %v1327 = vpop.f32.mrb[0].mxu0
    %v1328 = vpop.f32.mrb[0].mxu0
    %v1329 = vadd.f32 0.0, %v1328
    %v1330 = vpop.f32.mrb[0].mxu0
    %1331 = vmatprep.mubr.bf16.mxu0 %v1208
    %1332 = vmatmul.mubr.bf16.gmra.mrb[0].mxu0 %v1207
    %v1333 = vpop.f32.mrb[0].mxu0
    %v1334 = vadd.f32 0.0, %v1333
    %v1335 = vpop.f32.mrb[0].mxu0
    %v1336 = vpop.f32.mrb[0].mxu0
    %v1337 = vadd.f32 0.0, %v1336
    %v1338 = vpop.f32.mrb[0].mxu0
    %1339 = vmatprep.mubr.bf16.mxu0 %v1210
    %1340 = vmatmul.mubr.bf16.gmra.mrb[0].mxu0 %v1209
    %v1341 = vpop.f32.mrb[0].mxu0
    %v1342 = vadd.f32 0.0, %v1341
    %v1343 = vpop.f32.mrb[0].mxu0
    %v1344 = vpop.f32.mrb[0].mxu0
    %v1345 = vadd.f32 0.0, %v1344
    %v1346 = vpop.f32.mrb[0].mxu0
    %1347 = vmatprep.mubr.bf16.mxu0 %v1212
    %1348 = vmatmul.mubr.bf16.gmra.mrb[0].mxu0 %v1211
    %v1349 = vpop.f32.mrb[0].mxu0
    %v1350 = vadd.f32 0.0, %v1349
    %v1351 = vpop.f32.mrb[0].mxu0
    %v1352 = vpop.f32.mrb[0].mxu0
    %v1353 = vadd.f32 0.0, %v1352
    %v1354 = vpop.f32.mrb[0].mxu0
    %1355 = vmatprep.mubr.bf16.mxu0 %v1214
    %1356 = vmatmul.mubr.bf16.gmra.mrb[0].mxu0 %v1213
    %v1357 = vpop.f32.mrb[0].mxu0
    %v1358 = vadd.f32 0.0, %v1357
    %v1359 = vpop.f32.mrb[0].mxu0
    %v1360 = vpop.f32.mrb[0].mxu0
    %v1361 = vadd.f32 0.0, %v1360
    %v1362 = vpop.f32.mrb[0].mxu0
    %1363 = vmatprep.mubr.bf16.mxu0 %v1216
    %1364 = vmatmul.mubr.bf16.gmra.mrb[0].mxu0 %v1215
    %v1365 = vpop.f32.mrb[0].mxu0
    %v1366 = vadd.f32 0.0, %v1365
    %v1367 = vpop.f32.mrb[0].mxu0
    %v1368 = vpop.f32.mrb[0].mxu0
    %v1369 = vadd.f32 0.0, %v1368
    %v1370 = vpop.f32.mrb[0].mxu0
    %1371 = vmatprep.mubr.bf16.mxu0 %v1218
    %1372 = vmatmul.mubr.bf16.gmra.mrb[0].mxu0 %v1217
    %v1373 = vpop.f32.mrb[0].mxu0
    %v1374 = vadd.f32 0.0, %v1373
    %v1375 = vpop.f32.mrb[0].mxu0
    %v1376 = vpop.f32.mrb[0].mxu0
    %v1377 = vadd.f32 0.0, %v1376
    %v1378 = vpop.f32.mrb[0].mxu0
    %1379 = vdwg.mxu0
    %v1380 = vpack.c.bf16 %v1257, %v1254
    %v1381 = vpack.c.bf16 %v1265, %v1262
    %v1382 = vpack.c.bf16 %v1273, %v1270
    %v1383 = vpack.c.bf16 %v1281, %v1278
    %v1384 = vpack.c.bf16 %v1289, %v1286
    %v1385 = vpack.c.bf16 %v1297, %v1294
    %v1386 = vpack.c.bf16 %v1305, %v1302
    %v1387 = vpack.c.bf16 %v1313, %v1310
    %v1388 = vpack.c.bf16 %v1321, %v1318
    %v1389 = vpack.c.bf16 %v1329, %v1326
    %v1390 = vpack.c.bf16 %v1337, %v1334
    %v1391 = vpack.c.bf16 %v1345, %v1342
    %v1392 = vpack.c.bf16 %v1353, %v1350
    %v1393 = vpack.c.bf16 %v1361, %v1358
    %v1394 = vpack.c.bf16 %v1369, %v1366
    %v1395 = vpack.c.bf16 %v1377, %v1374
    %v1396 = vld [vmem:[#allocation16] sm:$0xf]
    %v1397 = vld [vmem:[#allocation16 + $0x4] sm:$0xf]
    %v1398 = vld [vmem:[#allocation16 + $0x8] sm:$0xf]
    %v1399 = vld [vmem:[#allocation16 + $0xc] sm:$0xf]
    %v1400 = vld [vmem:[#allocation16 + $0x10] sm:$0xf]
    %v1401 = vld [vmem:[#allocation16 + $0x14] sm:$0xf]
    %v1402 = vld [vmem:[#allocation16 + $0x18] sm:$0xf]
    %v1403 = vld [vmem:[#allocation16 + $0x1c] sm:$0xf]
    %v1404 = vld [vmem:[#allocation16 + $0x20] sm:$0xf]
    %v1405 = vld [vmem:[#allocation16 + $0x24] sm:$0xf]
    %v1406 = vld [vmem:[#allocation16 + $0x28] sm:$0xf]
    %v1407 = vld [vmem:[#allocation16 + $0x2c] sm:$0xf]
    %v1408 = vld [vmem:[#allocation16 + $0x30] sm:$0xf]
    %v1409 = vld [vmem:[#allocation16 + $0x34] sm:$0xf]
    %v1410 = vld [vmem:[#allocation16 + $0x38] sm:$0xf]
    %v1411 = vld [vmem:[#allocation16 + $0x3c] sm:$0xf]
    %v1428 = vunpack.c.l.b16 %v1396
    %v1429 = vunpack.c.l.b16 %v1397
    %v1430 = vunpack.c.l.b16 %v1398
    %v1431 = vunpack.c.l.b16 %v1399
    %v1432 = vunpack.c.l.b16 %v1400
    %v1433 = vunpack.c.l.b16 %v1401
    %v1434 = vunpack.c.l.b16 %v1402
    %v1435 = vunpack.c.l.b16 %v1403
    %v1436 = vunpack.c.l.b16 %v1404
    %v1437 = vunpack.c.l.b16 %v1405
    %v1438 = vunpack.c.l.b16 %v1406
    %v1439 = vunpack.c.l.b16 %v1407
    %v1440 = vunpack.c.l.b16 %v1408
    %v1441 = vunpack.c.l.b16 %v1409
    %v1442 = vunpack.c.l.b16 %v1410
    %v1443 = vunpack.c.l.b16 %v1411
    %v1444 = vpack.c.b16 %v1429, %v1428
    %v1445 = vpack.c.b16 %v1431, %v1430
    %v1446 = vpack.c.b16 %v1433, %v1432
    %v1447 = vpack.c.b16 %v1435, %v1434
    %v1448 = vpack.c.b16 %v1437, %v1436
    %v1449 = vpack.c.b16 %v1439, %v1438
    %v1450 = vpack.c.b16 %v1441, %v1440
    %v1451 = vpack.c.b16 %v1443, %v1442
    %1460 = vmatprep.subr.bf16.mxu0 0
    %1461 = vmatpush1.bf16.msra.mxu0 %v1444
    %1462 = vmatprep.subr.bf16.mxu0 0
    %1463 = vmatpush1.bf16.msra.mxu0 %v1445
    %1464 = vmatprep.subr.bf16.mxu0 0
    %1465 = vmatpush1.bf16.msra.mxu0 %v1446
    %1466 = vmatprep.subr.bf16.mxu0 0
    %1467 = vmatpush1.bf16.msra.mxu0 %v1447
    %1468 = vmatprep.subr.bf16.mxu0 0
    %1469 = vmatpush1.bf16.msra.mxu0 %v1448
    %1470 = vmatprep.subr.bf16.mxu0 0
    %1471 = vmatpush1.bf16.msra.mxu0 %v1449
    %1472 = vmatprep.subr.bf16.mxu0 0
    %1473 = vmatpush1.bf16.msra.mxu0 %v1450
    %1474 = vmatprep.subr.bf16.mxu0 0
    %1475 = vmatpush1.bf16.msra.mxu0 %v1451
    %1476 = vmatprep.subr.bf16.mxu0 0
    %1477 = vmatpush1.bf16.msra.mxu0 0
    %1478 = vmatprep.subr.bf16.mxu0 0
    %1479 = vmatpush1.bf16.msra.mxu0 0
    %1480 = vmatprep.subr.bf16.mxu0 0
    %1481 = vmatpush1.bf16.msra.mxu0 0
    %1482 = vmatprep.subr.bf16.mxu0 0
    %1483 = vmatpush1.bf16.msra.mxu0 0
    %1484 = vmatprep.subr.bf16.mxu0 0
    %1485 = vmatpush1.bf16.msra.mxu0 0
    %1486 = vmatprep.subr.bf16.mxu0 0
    %1487 = vmatpush1.bf16.msra.mxu0 0
    %1488 = vmatprep.subr.bf16.mxu0 0
    %1489 = vmatpush1.bf16.msra.mxu0 0
    %1490 = vmatprep.subr.bf16.mxu0 0
    %1491 = vmatpush1.bf16.msra.mxu0 0
    %1492 = vmatprep.mubr.bf16.mxu0 0
    %1493 = vmatmul.mubr.bf16.gmra.mrb[0].mxu0 %v1380
    %v1494 = vpop.f32.mrb[0].mxu0
    %v1495 = vadd.f32 0.0, %v1494
    %v1496 = vpop.f32.mrb[0].mxu0
    %v1497 = vpop.f32.mrb[0].mxu0
    %v1498 = vadd.f32 0.0, %v1497
    %v1499 = vpop.f32.mrb[0].mxu0
    %1500 = vmatprep.mubr.bf16.mxu0 0
    %1501 = vmatmul.mubr.bf16.gmra.mrb[0].mxu0 %v1381
    %v1502 = vpop.f32.mrb[0].mxu0
    %v1503 = vadd.f32 0.0, %v1502
    %v1504 = vpop.f32.mrb[0].mxu0
    %v1505 = vpop.f32.mrb[0].mxu0
    %v1506 = vadd.f32 0.0, %v1505
    %v1507 = vpop.f32.mrb[0].mxu0
    %1508 = vmatprep.mubr.bf16.mxu0 0
    %1509 = vmatmul.mubr.bf16.gmra.mrb[0].mxu0 %v1382
    %v1510 = vpop.f32.mrb[0].mxu0
    %v1511 = vadd.f32 0.0, %v1510
    %v1512 = vpop.f32.mrb[0].mxu0
    %v1513 = vpop.f32.mrb[0].mxu0
    %v1514 = vadd.f32 0.0, %v1513
    %v1515 = vpop.f32.mrb[0].mxu0
    %1516 = vmatprep.mubr.bf16.mxu0 0
    %1517 = vmatmul.mubr.bf16.gmra.mrb[0].mxu0 %v1383
    %v1518 = vpop.f32.mrb[0].mxu0
    %v1519 = vadd.f32 0.0, %v1518
    %v1520 = vpop.f32.mrb[0].mxu0
    %v1521 = vpop.f32.mrb[0].mxu0
    %v1522 = vadd.f32 0.0, %v1521
    %v1523 = vpop.f32.mrb[0].mxu0
    %1524 = vmatprep.mubr.bf16.mxu0 0
    %1525 = vmatmul.mubr.bf16.gmra.mrb[0].mxu0 %v1384
    %v1526 = vpop.f32.mrb[0].mxu0
    %v1527 = vadd.f32 0.0, %v1526
    %v1528 = vpop.f32.mrb[0].mxu0
    %v1529 = vpop.f32.mrb[0].mxu0
    %v1530 = vadd.f32 0.0, %v1529
    %v1531 = vpop.f32.mrb[0].mxu0
    %1532 = vmatprep.mubr.bf16.mxu0 0
    %1533 = vmatmul.mubr.bf16.gmra.mrb[0].mxu0 %v1385
    %v1534 = vpop.f32.mrb[0].mxu0
    %v1535 = vadd.f32 0.0, %v1534
    %v1536 = vpop.f32.mrb[0].mxu0
    %v1537 = vpop.f32.mrb[0].mxu0
    %v1538 = vadd.f32 0.0, %v1537
    %v1539 = vpop.f32.mrb[0].mxu0
    %1540 = vmatprep.mubr.bf16.mxu0 0
    %1541 = vmatmul.mubr.bf16.gmra.mrb[0].mxu0 %v1386
    %v1542 = vpop.f32.mrb[0].mxu0
    %v1543 = vadd.f32 0.0, %v1542
    %v1544 = vpop.f32.mrb[0].mxu0
    %v1545 = vpop.f32.mrb[0].mxu0
    %v1546 = vadd.f32 0.0, %v1545
    %v1547 = vpop.f32.mrb[0].mxu0
    %1548 = vmatprep.mubr.bf16.mxu0 0
    %1549 = vmatmul.mubr.bf16.gmra.mrb[0].mxu0 %v1387
    %v1550 = vpop.f32.mrb[0].mxu0
    %v1551 = vadd.f32 0.0, %v1550
    %v1552 = vpop.f32.mrb[0].mxu0
    %v1553 = vpop.f32.mrb[0].mxu0
    %v1554 = vadd.f32 0.0, %v1553
    %v1555 = vpop.f32.mrb[0].mxu0
    %1556 = vmatprep.mubr.bf16.mxu0 0
    %1557 = vmatmul.mubr.bf16.gmra.mrb[0].mxu0 %v1388
    %v1558 = vpop.f32.mrb[0].mxu0
    %v1559 = vadd.f32 0.0, %v1558
    %v1560 = vpop.f32.mrb[0].mxu0
    %v1561 = vpop.f32.mrb[0].mxu0
    %v1562 = vadd.f32 0.0, %v1561
    %v1563 = vpop.f32.mrb[0].mxu0
    %1564 = vmatprep.mubr.bf16.mxu0 0
    %1565 = vmatmul.mubr.bf16.gmra.mrb[0].mxu0 %v1389
    %v1566 = vpop.f32.mrb[0].mxu0
    %v1567 = vadd.f32 0.0, %v1566
    %v1568 = vpop.f32.mrb[0].mxu0
    %v1569 = vpop.f32.mrb[0].mxu0
    %v1570 = vadd.f32 0.0, %v1569
    %v1571 = vpop.f32.mrb[0].mxu0
    %1572 = vmatprep.mubr.bf16.mxu0 0
    %1573 = vmatmul.mubr.bf16.gmra.mrb[0].mxu0 %v1390
    %v1574 = vpop.f32.mrb[0].mxu0
    %v1575 = vadd.f32 0.0, %v1574
    %v1576 = vpop.f32.mrb[0].mxu0
    %v1577 = vpop.f32.mrb[0].mxu0
    %v1578 = vadd.f32 0.0, %v1577
    %v1579 = vpop.f32.mrb[0].mxu0
    %1580 = vmatprep.mubr.bf16.mxu0 0
    %1581 = vmatmul.mubr.bf16.gmra.mrb[0].mxu0 %v1391
    %v1582 = vpop.f32.mrb[0].mxu0
    %v1583 = vadd.f32 0.0, %v1582
    %v1584 = vpop.f32.mrb[0].mxu0
    %v1585 = vpop.f32.mrb[0].mxu0
    %v1586 = vadd.f32 0.0, %v1585
    %v1587 = vpop.f32.mrb[0].mxu0
    %1588 = vmatprep.mubr.bf16.mxu0 0
    %1589 = vmatmul.mubr.bf16.gmra.mrb[0].mxu0 %v1392
    %v1590 = vpop.f32.mrb[0].mxu0
    %v1591 = vadd.f32 0.0, %v1590
    %v1592 = vpop.f32.mrb[0].mxu0
    %v1593 = vpop.f32.mrb[0].mxu0
    %v1594 = vadd.f32 0.0, %v1593
    %v1595 = vpop.f32.mrb[0].mxu0
    %1596 = vmatprep.mubr.bf16.mxu0 0
    %1597 = vmatmul.mubr.bf16.gmra.mrb[0].mxu0 %v1393
    %v1598 = vpop.f32.mrb[0].mxu0
    %v1599 = vadd.f32 0.0, %v1598
    %v1600 = vpop.f32.mrb[0].mxu0
    %v1601 = vpop.f32.mrb[0].mxu0
    %v1602 = vadd.f32 0.0, %v1601
    %v1603 = vpop.f32.mrb[0].mxu0
    %1604 = vmatprep.mubr.bf16.mxu0 0
    %1605 = vmatmul.mubr.bf16.gmra.mrb[0].mxu0 %v1394
    %v1606 = vpop.f32.mrb[0].mxu0
    %v1607 = vadd.f32 0.0, %v1606
    %v1608 = vpop.f32.mrb[0].mxu0
    %v1609 = vpop.f32.mrb[0].mxu0
    %v1610 = vadd.f32 0.0, %v1609
    %v1611 = vpop.f32.mrb[0].mxu0
    %1612 = vmatprep.mubr.bf16.mxu0 0
    %1613 = vmatmul.mubr.bf16.gmra.mrb[0].mxu0 %v1395
    %v1614 = vpop.f32.mrb[0].mxu0
    %v1615 = vadd.f32 0.0, %v1614
    %v1616 = vpop.f32.mrb[0].mxu0
    %v1617 = vpop.f32.mrb[0].mxu0
    %v1618 = vadd.f32 0.0, %v1617
    %v1619 = vpop.f32.mrb[0].mxu0
    %1620 = vdwg.mxu0
    %v1621 = vmax.f32 %v1495, 0.0
    %v1622 = vmax.f32 %v1498, 0.0
    %v1623 = vmax.f32 %v1503, 0.0
    %v1624 = vmax.f32 %v1506, 0.0
    %v1625 = vmax.f32 %v1511, 0.0
    %v1626 = vmax.f32 %v1514, 0.0
    %v1627 = vmax.f32 %v1519, 0.0
    %v1628 = vmax.f32 %v1522, 0.0
    %v1629 = vmax.f32 %v1527, 0.0
    %v1630 = vmax.f32 %v1530, 0.0
    %v1631 = vmax.f32 %v1535, 0.0
    %v1632 = vmax.f32 %v1538, 0.0
    %v1633 = vmax.f32 %v1543, 0.0
    %v1634 = vmax.f32 %v1546, 0.0
    %v1635 = vmax.f32 %v1551, 0.0
    %v1636 = vmax.f32 %v1554, 0.0
    %v1637 = vmax.f32 %v1559, 0.0
    %v1638 = vmax.f32 %v1562, 0.0
    %v1639 = vmax.f32 %v1567, 0.0
    %v1640 = vmax.f32 %v1570, 0.0
    %v1641 = vmax.f32 %v1575, 0.0
    %v1642 = vmax.f32 %v1578, 0.0
    %v1643 = vmax.f32 %v1583, 0.0
    %v1644 = vmax.f32 %v1586, 0.0
    %v1645 = vmax.f32 %v1591, 0.0
    %v1646 = vmax.f32 %v1594, 0.0
    %v1647 = vmax.f32 %v1599, 0.0
    %v1648 = vmax.f32 %v1602, 0.0
    %v1649 = vmax.f32 %v1607, 0.0
    %v1650 = vmax.f32 %v1610, 0.0
    %v1651 = vmax.f32 %v1615, 0.0
    %v1652 = vmax.f32 %v1618, 0.0
    %v1653 = vpack.c.bf16 %v1622, %v1621
    %v1654 = vpack.c.bf16 %v1624, %v1623
    %v1655 = vpack.c.bf16 %v1626, %v1625
    %v1656 = vpack.c.bf16 %v1628, %v1627
    %v1657 = vpack.c.bf16 %v1630, %v1629
    %v1658 = vpack.c.bf16 %v1632, %v1631
    %v1659 = vpack.c.bf16 %v1634, %v1633
    %v1660 = vpack.c.bf16 %v1636, %v1635
    %v1661 = vpack.c.bf16 %v1638, %v1637
    %v1662 = vpack.c.bf16 %v1640, %v1639
    %v1663 = vpack.c.bf16 %v1642, %v1641
    %v1664 = vpack.c.bf16 %v1644, %v1643
    %v1665 = vpack.c.bf16 %v1646, %v1645
    %v1666 = vpack.c.bf16 %v1648, %v1647
    %v1667 = vpack.c.bf16 %v1650, %v1649
    %v1668 = vpack.c.bf16 %v1652, %v1651
    %v1669 = vld [vmem:[#allocation17] sm:$0xf]
    %v1670 = vld [vmem:[#allocation17 + $0x4] sm:$0xf]
    %v1671 = vld [vmem:[#allocation17 + $0x8] sm:$0xf]
    %v1672 = vld [vmem:[#allocation17 + $0xc] sm:$0xf]
    %v1673 = vld [vmem:[#allocation17 + $0x10] sm:$0xf]
    %v1674 = vld [vmem:[#allocation17 + $0x14] sm:$0xf]
    %v1675 = vld [vmem:[#allocation17 + $0x18] sm:$0xf]
    %v1676 = vld [vmem:[#allocation17 + $0x1c] sm:$0xf]
    %v1677 = vld [vmem:[#allocation17 + $0x20] sm:$0xf]
    %v1678 = vld [vmem:[#allocation17 + $0x24] sm:$0xf]
    %v1679 = vld [vmem:[#allocation17 + $0x28] sm:$0xf]
    %v1680 = vld [vmem:[#allocation17 + $0x2c] sm:$0xf]
    %v1681 = vld [vmem:[#allocation17 + $0x30] sm:$0xf]
    %v1682 = vld [vmem:[#allocation17 + $0x34] sm:$0xf]
    %v1683 = vld [vmem:[#allocation17 + $0x38] sm:$0xf]
    %v1684 = vld [vmem:[#allocation17 + $0x3c] sm:$0xf]
    %v1701 = vunpack.c.l.b16 %v1669
    %v1702 = vunpack.c.l.b16 %v1670
    %v1703 = vunpack.c.l.b16 %v1671
    %v1704 = vunpack.c.l.b16 %v1672
    %v1705 = vunpack.c.l.b16 %v1673
    %v1706 = vunpack.c.l.b16 %v1674
    %v1707 = vunpack.c.l.b16 %v1675
    %v1708 = vunpack.c.l.b16 %v1676
    %v1709 = vunpack.c.l.b16 %v1677
    %v1710 = vunpack.c.l.b16 %v1678
    %v1711 = vunpack.c.l.b16 %v1679
    %v1712 = vunpack.c.l.b16 %v1680
    %v1713 = vunpack.c.l.b16 %v1681
    %v1714 = vunpack.c.l.b16 %v1682
    %v1715 = vunpack.c.l.b16 %v1683
    %v1716 = vunpack.c.l.b16 %v1684
    %v1717 = vpack.c.b16 %v1702, %v1701
    %v1718 = vpack.c.b16 %v1704, %v1703
    %v1719 = vpack.c.b16 %v1706, %v1705
    %v1720 = vpack.c.b16 %v1708, %v1707
    %v1721 = vpack.c.b16 %v1710, %v1709
    %v1722 = vpack.c.b16 %v1712, %v1711
    %v1723 = vpack.c.b16 %v1714, %v1713
    %v1724 = vpack.c.b16 %v1716, %v1715
    %1733 = vmatprep.subr.bf16.mxu0 0
    %1734 = vmatpush1.bf16.msra.mxu0 %v1717
    %1735 = vmatprep.subr.bf16.mxu0 0
    %1736 = vmatpush1.bf16.msra.mxu0 %v1718
    %1737 = vmatprep.subr.bf16.mxu0 0
    %1738 = vmatpush1.bf16.msra.mxu0 %v1719
    %1739 = vmatprep.subr.bf16.mxu0 0
    %1740 = vmatpush1.bf16.msra.mxu0 %v1720
    %1741 = vmatprep.subr.bf16.mxu0 0
    %1742 = vmatpush1.bf16.msra.mxu0 %v1721
    %1743 = vmatprep.subr.bf16.mxu0 0
    %1744 = vmatpush1.bf16.msra.mxu0 %v1722
    %1745 = vmatprep.subr.bf16.mxu0 0
    %1746 = vmatpush1.bf16.msra.mxu0 %v1723
    %1747 = vmatprep.subr.bf16.mxu0 0
    %1748 = vmatpush1.bf16.msra.mxu0 %v1724
    %1749 = vmatprep.subr.bf16.mxu0 0
    %1750 = vmatpush1.bf16.msra.mxu0 0
    %1751 = vmatprep.subr.bf16.mxu0 0
    %1752 = vmatpush1.bf16.msra.mxu0 0
    %1753 = vmatprep.subr.bf16.mxu0 0
    %1754 = vmatpush1.bf16.msra.mxu0 0
    %1755 = vmatprep.subr.bf16.mxu0 0
    %1756 = vmatpush1.bf16.msra.mxu0 0
    %1757 = vmatprep.subr.bf16.mxu0 0
    %1758 = vmatpush1.bf16.msra.mxu0 0
    %1759 = vmatprep.subr.bf16.mxu0 0
    %1760 = vmatpush1.bf16.msra.mxu0 0
    %1761 = vmatprep.subr.bf16.mxu0 0
    %1762 = vmatpush1.bf16.msra.mxu0 0
    %1763 = vmatprep.subr.bf16.mxu0 0
    %1764 = vmatpush1.bf16.msra.mxu0 0
    %1765 = vmatprep.mubr.bf16.mxu0 0
    %1766 = vmatmul.mubr.bf16.gmra.mrb[0].mxu0 %v1653
    %v1767 = vpop.f32.mrb[0].mxu0
    %v1768 = vadd.f32 0.0, %v1767
    %v1769 = vpop.f32.mrb[0].mxu0
    %v1770 = vpop.f32.mrb[0].mxu0
    %v1771 = vadd.f32 0.0, %v1770
    %v1772 = vpop.f32.mrb[0].mxu0
    %1773 = vmatprep.mubr.bf16.mxu0 0
    %1774 = vmatmul.mubr.bf16.gmra.mrb[0].mxu0 %v1654
    %v1775 = vpop.f32.mrb[0].mxu0
    %v1776 = vadd.f32 0.0, %v1775
    %v1777 = vpop.f32.mrb[0].mxu0
    %v1778 = vpop.f32.mrb[0].mxu0
    %v1779 = vadd.f32 0.0, %v1778
    %v1780 = vpop.f32.mrb[0].mxu0
    %1781 = vmatprep.mubr.bf16.mxu0 0
    %1782 = vmatmul.mubr.bf16.gmra.mrb[0].mxu0 %v1655
    %v1783 = vpop.f32.mrb[0].mxu0
    %v1784 = vadd.f32 0.0, %v1783
    %v1785 = vpop.f32.mrb[0].mxu0
    %v1786 = vpop.f32.mrb[0].mxu0
    %v1787 = vadd.f32 0.0, %v1786
    %v1788 = vpop.f32.mrb[0].mxu0
    %1789 = vmatprep.mubr.bf16.mxu0 0
    %1790 = vmatmul.mubr.bf16.gmra.mrb[0].mxu0 %v1656
    %v1791 = vpop.f32.mrb[0].mxu0
    %v1792 = vadd.f32 0.0, %v1791
    %v1793 = vpop.f32.mrb[0].mxu0
    %v1794 = vpop.f32.mrb[0].mxu0
    %v1795 = vadd.f32 0.0, %v1794
    %v1796 = vpop.f32.mrb[0].mxu0
    %1797 = vmatprep.mubr.bf16.mxu0 0
    %1798 = vmatmul.mubr.bf16.gmra.mrb[0].mxu0 %v1657
    %v1799 = vpop.f32.mrb[0].mxu0
    %v1800 = vadd.f32 0.0, %v1799
    %v1801 = vpop.f32.mrb[0].mxu0
    %v1802 = vpop.f32.mrb[0].mxu0
    %v1803 = vadd.f32 0.0, %v1802
    %v1804 = vpop.f32.mrb[0].mxu0
    %1805 = vmatprep.mubr.bf16.mxu0 0
    %1806 = vmatmul.mubr.bf16.gmra.mrb[0].mxu0 %v1658
    %v1807 = vpop.f32.mrb[0].mxu0
    %v1808 = vadd.f32 0.0, %v1807
    %v1809 = vpop.f32.mrb[0].mxu0
    %v1810 = vpop.f32.mrb[0].mxu0
    %v1811 = vadd.f32 0.0, %v1810
    %v1812 = vpop.f32.mrb[0].mxu0
    %1813 = vmatprep.mubr.bf16.mxu0 0
    %1814 = vmatmul.mubr.bf16.gmra.mrb[0].mxu0 %v1659
    %v1815 = vpop.f32.mrb[0].mxu0
    %v1816 = vadd.f32 0.0, %v1815
    %v1817 = vpop.f32.mrb[0].mxu0
    %v1818 = vpop.f32.mrb[0].mxu0
    %v1819 = vadd.f32 0.0, %v1818
    %v1820 = vpop.f32.mrb[0].mxu0
    %1821 = vmatprep.mubr.bf16.mxu0 0
    %1822 = vmatmul.mubr.bf16.gmra.mrb[0].mxu0 %v1660
    %v1823 = vpop.f32.mrb[0].mxu0
    %v1824 = vadd.f32 0.0, %v1823
    %v1825 = vpop.f32.mrb[0].mxu0
    %v1826 = vpop.f32.mrb[0].mxu0
    %v1827 = vadd.f32 0.0, %v1826
    %v1828 = vpop.f32.mrb[0].mxu0
    %1829 = vmatprep.mubr.bf16.mxu0 0
    %1830 = vmatmul.mubr.bf16.gmra.mrb[0].mxu0 %v1661
    %v1831 = vpop.f32.mrb[0].mxu0
    %v1832 = vadd.f32 0.0, %v1831
    %v1833 = vpop.f32.mrb[0].mxu0
    %v1834 = vpop.f32.mrb[0].mxu0
    %v1835 = vadd.f32 0.0, %v1834
    %v1836 = vpop.f32.mrb[0].mxu0
    %1837 = vmatprep.mubr.bf16.mxu0 0
    %1838 = vmatmul.mubr.bf16.gmra.mrb[0].mxu0 %v1662
    %v1839 = vpop.f32.mrb[0].mxu0
    %v1840 = vadd.f32 0.0, %v1839
    %v1841 = vpop.f32.mrb[0].mxu0
    %v1842 = vpop.f32.mrb[0].mxu0
    %v1843 = vadd.f32 0.0, %v1842
    %v1844 = vpop.f32.mrb[0].mxu0
    %1845 = vmatprep.mubr.bf16.mxu0 0
    %1846 = vmatmul.mubr.bf16.gmra.mrb[0].mxu0 %v1663
    %v1847 = vpop.f32.mrb[0].mxu0
    %v1848 = vadd.f32 0.0, %v1847
    %v1849 = vpop.f32.mrb[0].mxu0
    %v1850 = vpop.f32.mrb[0].mxu0
    %v1851 = vadd.f32 0.0, %v1850
    %v1852 = vpop.f32.mrb[0].mxu0
    %1853 = vmatprep.mubr.bf16.mxu0 0
    %1854 = vmatmul.mubr.bf16.gmra.mrb[0].mxu0 %v1664
    %v1855 = vpop.f32.mrb[0].mxu0
    %v1856 = vadd.f32 0.0, %v1855
    %v1857 = vpop.f32.mrb[0].mxu0
    %v1858 = vpop.f32.mrb[0].mxu0
    %v1859 = vadd.f32 0.0, %v1858
    %v1860 = vpop.f32.mrb[0].mxu0
    %1861 = vmatprep.mubr.bf16.mxu0 0
    %1862 = vmatmul.mubr.bf16.gmra.mrb[0].mxu0 %v1665
    %v1863 = vpop.f32.mrb[0].mxu0
    %v1864 = vadd.f32 0.0, %v1863
    %v1865 = vpop.f32.mrb[0].mxu0
    %v1866 = vpop.f32.mrb[0].mxu0
    %v1867 = vadd.f32 0.0, %v1866
    %v1868 = vpop.f32.mrb[0].mxu0
    %1869 = vmatprep.mubr.bf16.mxu0 0
    %1870 = vmatmul.mubr.bf16.gmra.mrb[0].mxu0 %v1666
    %v1871 = vpop.f32.mrb[0].mxu0
    %v1872 = vadd.f32 0.0, %v1871
    %v1873 = vpop.f32.mrb[0].mxu0
    %v1874 = vpop.f32.mrb[0].mxu0
    %v1875 = vadd.f32 0.0, %v1874
    %v1876 = vpop.f32.mrb[0].mxu0
    %1877 = vmatprep.mubr.bf16.mxu0 0
    %1878 = vmatmul.mubr.bf16.gmra.mrb[0].mxu0 %v1667
    %v1879 = vpop.f32.mrb[0].mxu0
    %v1880 = vadd.f32 0.0, %v1879
    %v1881 = vpop.f32.mrb[0].mxu0
    %v1882 = vpop.f32.mrb[0].mxu0
    %v1883 = vadd.f32 0.0, %v1882
    %v1884 = vpop.f32.mrb[0].mxu0
    %1885 = vmatprep.mubr.bf16.mxu0 0
    %1886 = vmatmul.mubr.bf16.gmra.mrb[0].mxu0 %v1668
    %v1887 = vpop.f32.mrb[0].mxu0
    %v1888 = vadd.f32 0.0, %v1887
    %v1889 = vpop.f32.mrb[0].mxu0
    %v1890 = vpop.f32.mrb[0].mxu0
    %v1891 = vadd.f32 0.0, %v1890
    %v1892 = vpop.f32.mrb[0].mxu0
    %1893 = vdwg.mxu0
    %v1894 = vmax.f32 %v1768, 0.0
    %v1895 = vmax.f32 %v1771, 0.0
    %v1896 = vmax.f32 %v1776, 0.0
    %v1897 = vmax.f32 %v1779, 0.0
    %v1898 = vmax.f32 %v1784, 0.0
    %v1899 = vmax.f32 %v1787, 0.0
    %v1900 = vmax.f32 %v1792, 0.0
    %v1901 = vmax.f32 %v1795, 0.0
    %v1902 = vmax.f32 %v1800, 0.0
    %v1903 = vmax.f32 %v1803, 0.0
    %v1904 = vmax.f32 %v1808, 0.0
    %v1905 = vmax.f32 %v1811, 0.0
    %v1906 = vmax.f32 %v1816, 0.0
    %v1907 = vmax.f32 %v1819, 0.0
    %v1908 = vmax.f32 %v1824, 0.0
    %v1909 = vmax.f32 %v1827, 0.0
    %v1910 = vmax.f32 %v1832, 0.0
    %v1911 = vmax.f32 %v1835, 0.0
    %v1912 = vmax.f32 %v1840, 0.0
    %v1913 = vmax.f32 %v1843, 0.0
    %v1914 = vmax.f32 %v1848, 0.0
    %v1915 = vmax.f32 %v1851, 0.0
    %v1916 = vmax.f32 %v1856, 0.0
    %v1917 = vmax.f32 %v1859, 0.0
    %v1918 = vmax.f32 %v1864, 0.0
    %v1919 = vmax.f32 %v1867, 0.0
    %v1920 = vmax.f32 %v1872, 0.0
    %v1921 = vmax.f32 %v1875, 0.0
    %v1922 = vmax.f32 %v1880, 0.0
    %v1923 = vmax.f32 %v1883, 0.0
    %v1924 = vmax.f32 %v1888, 0.0
    %v1925 = vmax.f32 %v1891, 0.0
    %v1926 = vpack.c.bf16 %v1895, %v1894
    %v1927 = vpack.c.bf16 %v1897, %v1896
    %v1928 = vpack.c.bf16 %v1899, %v1898
    %v1929 = vpack.c.bf16 %v1901, %v1900
    %v1930 = vpack.c.bf16 %v1903, %v1902
    %v1931 = vpack.c.bf16 %v1905, %v1904
    %v1932 = vpack.c.bf16 %v1907, %v1906
    %v1933 = vpack.c.bf16 %v1909, %v1908
    %v1934 = vpack.c.bf16 %v1911, %v1910
    %v1935 = vpack.c.bf16 %v1913, %v1912
    %v1936 = vpack.c.bf16 %v1915, %v1914
    %v1937 = vpack.c.bf16 %v1917, %v1916
    %v1938 = vpack.c.bf16 %v1919, %v1918
    %v1939 = vpack.c.bf16 %v1921, %v1920
    %v1940 = vpack.c.bf16 %v1923, %v1922
    %v1941 = vpack.c.bf16 %v1925, %v1924
    %v1942 = vld [vmem:[#allocation7] sm:$0xff]
    %v1943 = vld [vmem:[#allocation7 + $0x8] sm:$0xff]
    %v1944 = vld [vmem:[#allocation7 + $0x10] sm:$0xff]
    %v1945 = vld [vmem:[#allocation7 + $0x18] sm:$0xff]
    %v1946 = vld [vmem:[#allocation7 + $0x20] sm:$0xff]
    %v1947 = vld [vmem:[#allocation7 + $0x28] sm:$0xff]
    %v1948 = vld [vmem:[#allocation7 + $0x30] sm:$0xff]
    %v1949 = vld [vmem:[#allocation7 + $0x38] sm:$0xff]
    %v1950 = vld [vmem:[#allocation7 + $0x40] sm:$0xff]
    %v1951 = vld [vmem:[#allocation7 + $0x48] sm:$0xff]
    %v1952 = vld [vmem:[#allocation7 + $0x50] sm:$0xff]
    %v1953 = vld [vmem:[#allocation7 + $0x58] sm:$0xff]
    %v1954 = vld [vmem:[#allocation7 + $0x60] sm:$0xff]
    %v1955 = vld [vmem:[#allocation7 + $0x68] sm:$0xff]
    %v1956 = vld [vmem:[#allocation7 + $0x70] sm:$0xff]
    %v1957 = vld [vmem:[#allocation7 + $0x78] sm:$0xff]
    %v1958 = vunpack.c.l.s8.bf16 %v1942
    %v1959 = vunpack.c.l.s8.bf16 %v1943
    %v1960 = vunpack.c.h.s8.bf16 %v1942
    %v1961 = vunpack.c.h.s8.bf16 %v1943
    %v1962 = vunpack.c.l.s8.bf16 %v1944
    %v1963 = vunpack.c.l.s8.bf16 %v1945
    %v1964 = vunpack.c.h.s8.bf16 %v1944
    %v1965 = vunpack.c.h.s8.bf16 %v1945
    %v1966 = vunpack.c.l.s8.bf16 %v1946
    %v1967 = vunpack.c.l.s8.bf16 %v1947
    %v1968 = vunpack.c.h.s8.bf16 %v1946
    %v1969 = vunpack.c.h.s8.bf16 %v1947
    %v1970 = vunpack.c.l.s8.bf16 %v1948
    %v1971 = vunpack.c.l.s8.bf16 %v1949
    %v1972 = vunpack.c.h.s8.bf16 %v1948
    %v1973 = vunpack.c.h.s8.bf16 %v1949
    %v1974 = vunpack.c.l.s8.bf16 %v1950
    %v1975 = vunpack.c.l.s8.bf16 %v1951
    %v1976 = vunpack.c.h.s8.bf16 %v1950
    %v1977 = vunpack.c.h.s8.bf16 %v1951
    %v1978 = vunpack.c.l.s8.bf16 %v1952
    %v1979 = vunpack.c.l.s8.bf16 %v1953
    %v1980 = vunpack.c.h.s8.bf16 %v1952
    %v1981 = vunpack.c.h.s8.bf16 %v1953
    %v1982 = vunpack.c.l.s8.bf16 %v1954
    %v1983 = vunpack.c.l.s8.bf16 %v1955
    %v1984 = vunpack.c.h.s8.bf16 %v1954
    %v1985 = vunpack.c.h.s8.bf16 %v1955
    %v1986 = vunpack.c.l.s8.bf16 %v1956
    %v1987 = vunpack.c.l.s8.bf16 %v1957
    %v1988 = vunpack.c.h.s8.bf16 %v1956
    %v1989 = vunpack.c.h.s8.bf16 %v1957
    %1990 = vmatprep.subr.bf16.mxu0 0
    %1991 = vmatpush1.bf16.msra.mxu0 %v1926
    %1992 = vmatprep.subr.bf16.mxu0 0
    %1993 = vmatpush1.bf16.msra.mxu0 %v1927
    %1994 = vmatprep.subr.bf16.mxu0 0
    %1995 = vmatpush1.bf16.msra.mxu0 %v1928
    %1996 = vmatprep.subr.bf16.mxu0 0
    %1997 = vmatpush1.bf16.msra.mxu0 %v1929
    %1998 = vmatprep.subr.bf16.mxu0 0
    %1999 = vmatpush1.bf16.msra.mxu0 %v1930
    %2000 = vmatprep.subr.bf16.mxu0 0
    %2001 = vmatpush1.bf16.msra.mxu0 %v1931
    %2002 = vmatprep.subr.bf16.mxu0 0
    %2003 = vmatpush1.bf16.msra.mxu0 %v1932
    %2004 = vmatprep.subr.bf16.mxu0 0
    %2005 = vmatpush1.bf16.msra.mxu0 %v1933
    %2006 = vmatprep.subr.bf16.mxu0 0
    %2007 = vmatpush1.bf16.msra.mxu0 %v1934
    %2008 = vmatprep.subr.bf16.mxu0 0
    %2009 = vmatpush1.bf16.msra.mxu0 %v1935
    %2010 = vmatprep.subr.bf16.mxu0 0
    %2011 = vmatpush1.bf16.msra.mxu0 %v1936
    %2012 = vmatprep.subr.bf16.mxu0 0
    %2013 = vmatpush1.bf16.msra.mxu0 %v1937
    %2014 = vmatprep.subr.bf16.mxu0 0
    %2015 = vmatpush1.bf16.msra.mxu0 %v1938
    %2016 = vmatprep.subr.bf16.mxu0 0
    %2017 = vmatpush1.bf16.msra.mxu0 %v1939
    %2018 = vmatprep.subr.bf16.mxu0 0
    %2019 = vmatpush1.bf16.msra.mxu0 %v1940
    %2020 = vmatprep.subr.bf16.mxu0 0
    %2021 = vmatpush1.bf16.msra.mxu0 %v1941
    %2022 = vmatprep.mubr.bf16.mxu0 %v1959
    %2023 = vmatmul.mubr.bf16.gmra.mrb[0].mxu0 %v1958
    %v2024 = vpop.f32.mrb[0].mxu0
    %v2025 = vadd.f32 0.0, %v2024
    %v2026 = vpop.f32.mrb[0].mxu0
    %v2027 = vpop.f32.mrb[0].mxu0
    %v2028 = vadd.f32 0.0, %v2027
    %v2029 = vpop.f32.mrb[0].mxu0
    %2030 = vmatprep.mubr.bf16.mxu0 %v1961
    %2031 = vmatmul.mubr.bf16.gmra.mrb[0].mxu0 %v1960
    %v2032 = vpop.f32.mrb[0].mxu0
    %v2033 = vadd.f32 0.0, %v2032
    %v2034 = vpop.f32.mrb[0].mxu0
    %v2035 = vpop.f32.mrb[0].mxu0
    %v2036 = vadd.f32 0.0, %v2035
    %v2037 = vpop.f32.mrb[0].mxu0
    %2038 = vmatprep.mubr.bf16.mxu0 %v1963
    %2039 = vmatmul.mubr.bf16.gmra.mrb[0].mxu0 %v1962
    %v2040 = vpop.f32.mrb[0].mxu0
    %v2041 = vadd.f32 0.0, %v2040
    %v2042 = vpop.f32.mrb[0].mxu0
    %v2043 = vpop.f32.mrb[0].mxu0
    %v2044 = vadd.f32 0.0, %v2043
    %v2045 = vpop.f32.mrb[0].mxu0
    %2046 = vmatprep.mubr.bf16.mxu0 %v1965
    %2047 = vmatmul.mubr.bf16.gmra.mrb[0].mxu0 %v1964
    %v2048 = vpop.f32.mrb[0].mxu0
    %v2049 = vadd.f32 0.0, %v2048
    %v2050 = vpop.f32.mrb[0].mxu0
    %v2051 = vpop.f32.mrb[0].mxu0
    %v2052 = vadd.f32 0.0, %v2051
    %v2053 = vpop.f32.mrb[0].mxu0
    %2054 = vmatprep.mubr.bf16.mxu0 %v1967
    %2055 = vmatmul.mubr.bf16.gmra.mrb[0].mxu0 %v1966
    %v2056 = vpop.f32.mrb[0].mxu0
    %v2057 = vadd.f32 0.0, %v2056
    %v2058 = vpop.f32.mrb[0].mxu0
    %v2059 = vpop.f32.mrb[0].mxu0
    %v2060 = vadd.f32 0.0, %v2059
    %v2061 = vpop.f32.mrb[0].mxu0
    %2062 = vmatprep.mubr.bf16.mxu0 %v1969
    %2063 = vmatmul.mubr.bf16.gmra.mrb[0].mxu0 %v1968
    %v2064 = vpop.f32.mrb[0].mxu0
    %v2065 = vadd.f32 0.0, %v2064
    %v2066 = vpop.f32.mrb[0].mxu0
    %v2067 = vpop.f32.mrb[0].mxu0
    %v2068 = vadd.f32 0.0, %v2067
    %v2069 = vpop.f32.mrb[0].mxu0
    %2070 = vmatprep.mubr.bf16.mxu0 %v1971
    %2071 = vmatmul.mubr.bf16.gmra.mrb[0].mxu0 %v1970
    %v2072 = vpop.f32.mrb[0].mxu0
    %v2073 = vadd.f32 0.0, %v2072
    %v2074 = vpop.f32.mrb[0].mxu0
    %v2075 = vpop.f32.mrb[0].mxu0
    %v2076 = vadd.f32 0.0, %v2075
    %v2077 = vpop.f32.mrb[0].mxu0
    %2078 = vmatprep.mubr.bf16.mxu0 %v1973
    %2079 = vmatmul.mubr.bf16.gmra.mrb[0].mxu0 %v1972
    %v2080 = vpop.f32.mrb[0].mxu0
    %v2081 = vadd.f32 0.0, %v2080
    %v2082 = vpop.f32.mrb[0].mxu0
    %v2083 = vpop.f32.mrb[0].mxu0
    %v2084 = vadd.f32 0.0, %v2083
    %v2085 = vpop.f32.mrb[0].mxu0
    %2086 = vmatprep.mubr.bf16.mxu0 %v1975
    %2087 = vmatmul.mubr.bf16.gmra.mrb[0].mxu0 %v1974
    %v2088 = vpop.f32.mrb[0].mxu0
    %v2089 = vadd.f32 0.0, %v2088
    %v2090 = vpop.f32.mrb[0].mxu0
    %v2091 = vpop.f32.mrb[0].mxu0
    %v2092 = vadd.f32 0.0, %v2091
    %v2093 = vpop.f32.mrb[0].mxu0
    %2094 = vmatprep.mubr.bf16.mxu0 %v1977
    %2095 = vmatmul.mubr.bf16.gmra.mrb[0].mxu0 %v1976
    %v2096 = vpop.f32.mrb[0].mxu0
    %v2097 = vadd.f32 0.0, %v2096
    %v2098 = vpop.f32.mrb[0].mxu0
    %v2099 = vpop.f32.mrb[0].mxu0
    %v2100 = vadd.f32 0.0, %v2099
    %v2101 = vpop.f32.mrb[0].mxu0
    %2102 = vmatprep.mubr.bf16.mxu0 %v1979
    %2103 = vmatmul.mubr.bf16.gmra.mrb[0].mxu0 %v1978
    %v2104 = vpop.f32.mrb[0].mxu0
    %v2105 = vadd.f32 0.0, %v2104
    %v2106 = vpop.f32.mrb[0].mxu0
    %v2107 = vpop.f32.mrb[0].mxu0
    %v2108 = vadd.f32 0.0, %v2107
    %v2109 = vpop.f32.mrb[0].mxu0
    %2110 = vmatprep.mubr.bf16.mxu0 %v1981
    %2111 = vmatmul.mubr.bf16.gmra.mrb[0].mxu0 %v1980
    %v2112 = vpop.f32.mrb[0].mxu0
    %v2113 = vadd.f32 0.0, %v2112
    %v2114 = vpop.f32.mrb[0].mxu0
    %v2115 = vpop.f32.mrb[0].mxu0
    %v2116 = vadd.f32 0.0, %v2115
    %v2117 = vpop.f32.mrb[0].mxu0
    %2118 = vmatprep.mubr.bf16.mxu0 %v1983
    %2119 = vmatmul.mubr.bf16.gmra.mrb[0].mxu0 %v1982
    %v2120 = vpop.f32.mrb[0].mxu0
    %v2121 = vadd.f32 0.0, %v2120
    %v2122 = vpop.f32.mrb[0].mxu0
    %v2123 = vpop.f32.mrb[0].mxu0
    %v2124 = vadd.f32 0.0, %v2123
    %v2125 = vpop.f32.mrb[0].mxu0
    %2126 = vmatprep.mubr.bf16.mxu0 %v1985
    %2127 = vmatmul.mubr.bf16.gmra.mrb[0].mxu0 %v1984
    %v2128 = vpop.f32.mrb[0].mxu0
    %v2129 = vadd.f32 0.0, %v2128
    %v2130 = vpop.f32.mrb[0].mxu0
    %v2131 = vpop.f32.mrb[0].mxu0
    %v2132 = vadd.f32 0.0, %v2131
    %v2133 = vpop.f32.mrb[0].mxu0
    %2134 = vmatprep.mubr.bf16.mxu0 %v1987
    %2135 = vmatmul.mubr.bf16.gmra.mrb[0].mxu0 %v1986
    %v2136 = vpop.f32.mrb[0].mxu0
    %v2137 = vadd.f32 0.0, %v2136
    %v2138 = vpop.f32.mrb[0].mxu0
    %v2139 = vpop.f32.mrb[0].mxu0
    %v2140 = vadd.f32 0.0, %v2139
    %v2141 = vpop.f32.mrb[0].mxu0
    %2142 = vmatprep.mubr.bf16.mxu0 %v1989
    %2143 = vmatmul.mubr.bf16.gmra.mrb[0].mxu0 %v1988
    %v2144 = vpop.f32.mrb[0].mxu0
    %v2145 = vadd.f32 0.0, %v2144
    %v2146 = vpop.f32.mrb[0].mxu0
    %v2147 = vpop.f32.mrb[0].mxu0
    %v2148 = vadd.f32 0.0, %v2147
    %v2149 = vpop.f32.mrb[0].mxu0
    %2150 = vdwg.mxu0
    %v2151 = vpack.c.bf16 %v2028, %v2025
    %v2152 = vpack.c.bf16 %v2036, %v2033
    %v2153 = vpack.c.bf16 %v2044, %v2041
    %v2154 = vpack.c.bf16 %v2052, %v2049
    %v2155 = vpack.c.bf16 %v2060, %v2057
    %v2156 = vpack.c.bf16 %v2068, %v2065
    %v2157 = vpack.c.bf16 %v2076, %v2073
    %v2158 = vpack.c.bf16 %v2084, %v2081
    %v2159 = vpack.c.bf16 %v2092, %v2089
    %v2160 = vpack.c.bf16 %v2100, %v2097
    %v2161 = vpack.c.bf16 %v2108, %v2105
    %v2162 = vpack.c.bf16 %v2116, %v2113
    %v2163 = vpack.c.bf16 %v2124, %v2121
    %v2164 = vpack.c.bf16 %v2132, %v2129
    %v2165 = vpack.c.bf16 %v2140, %v2137
    %v2166 = vpack.c.bf16 %v2148, %v2145
    %v2167 = vld [vmem:[#allocation19] sm:$0xf]
    %v2168 = vld [vmem:[#allocation19 + $0x4] sm:$0xf]
    %v2169 = vld [vmem:[#allocation19 + $0x8] sm:$0xf]
    %v2170 = vld [vmem:[#allocation19 + $0xc] sm:$0xf]
    %v2171 = vld [vmem:[#allocation19 + $0x10] sm:$0xf]
    %v2172 = vld [vmem:[#allocation19 + $0x14] sm:$0xf]
    %v2173 = vld [vmem:[#allocation19 + $0x18] sm:$0xf]
    %v2174 = vld [vmem:[#allocation19 + $0x1c] sm:$0xf]
    %v2175 = vld [vmem:[#allocation19 + $0x20] sm:$0xf]
    %v2176 = vld [vmem:[#allocation19 + $0x24] sm:$0xf]
    %v2177 = vld [vmem:[#allocation19 + $0x28] sm:$0xf]
    %v2178 = vld [vmem:[#allocation19 + $0x2c] sm:$0xf]
    %v2179 = vld [vmem:[#allocation19 + $0x30] sm:$0xf]
    %v2180 = vld [vmem:[#allocation19 + $0x34] sm:$0xf]
    %v2181 = vld [vmem:[#allocation19 + $0x38] sm:$0xf]
    %v2182 = vld [vmem:[#allocation19 + $0x3c] sm:$0xf]
    %v2199 = vunpack.c.l.b16 %v2167
    %v2200 = vunpack.c.l.b16 %v2168
    %v2201 = vunpack.c.l.b16 %v2169
    %v2202 = vunpack.c.l.b16 %v2170
    %v2203 = vunpack.c.l.b16 %v2171
    %v2204 = vunpack.c.l.b16 %v2172
    %v2205 = vunpack.c.l.b16 %v2173
    %v2206 = vunpack.c.l.b16 %v2174
    %v2207 = vunpack.c.l.b16 %v2175
    %v2208 = vunpack.c.l.b16 %v2176
    %v2209 = vunpack.c.l.b16 %v2177
    %v2210 = vunpack.c.l.b16 %v2178
    %v2211 = vunpack.c.l.b16 %v2179
    %v2212 = vunpack.c.l.b16 %v2180
    %v2213 = vunpack.c.l.b16 %v2181
    %v2214 = vunpack.c.l.b16 %v2182
    %v2215 = vpack.c.b16 %v2200, %v2199
    %v2216 = vpack.c.b16 %v2202, %v2201
    %v2217 = vpack.c.b16 %v2204, %v2203
    %v2218 = vpack.c.b16 %v2206, %v2205
    %v2219 = vpack.c.b16 %v2208, %v2207
    %v2220 = vpack.c.b16 %v2210, %v2209
    %v2221 = vpack.c.b16 %v2212, %v2211
    %v2222 = vpack.c.b16 %v2214, %v2213
    %2231 = vmatprep.subr.bf16.mxu0 0
    %2232 = vmatpush1.bf16.msra.mxu0 %v2215
    %2233 = vmatprep.subr.bf16.mxu0 0
    %2234 = vmatpush1.bf16.msra.mxu0 %v2216
    %2235 = vmatprep.subr.bf16.mxu0 0
    %2236 = vmatpush1.bf16.msra.mxu0 %v2217
    %2237 = vmatprep.subr.bf16.mxu0 0
    %2238 = vmatpush1.bf16.msra.mxu0 %v2218
    %2239 = vmatprep.subr.bf16.mxu0 0
    %2240 = vmatpush1.bf16.msra.mxu0 %v2219
    %2241 = vmatprep.subr.bf16.mxu0 0
    %2242 = vmatpush1.bf16.msra.mxu0 %v2220
    %2243 = vmatprep.subr.bf16.mxu0 0
    %2244 = vmatpush1.bf16.msra.mxu0 %v2221
    %2245 = vmatprep.subr.bf16.mxu0 0
    %2246 = vmatpush1.bf16.msra.mxu0 %v2222
    %2247 = vmatprep.subr.bf16.mxu0 0
    %2248 = vmatpush1.bf16.msra.mxu0 0
    %2249 = vmatprep.subr.bf16.mxu0 0
    %2250 = vmatpush1.bf16.msra.mxu0 0
    %2251 = vmatprep.subr.bf16.mxu0 0
    %2252 = vmatpush1.bf16.msra.mxu0 0
    %2253 = vmatprep.subr.bf16.mxu0 0
    %2254 = vmatpush1.bf16.msra.mxu0 0
    %2255 = vmatprep.subr.bf16.mxu0 0
    %2256 = vmatpush1.bf16.msra.mxu0 0
    %2257 = vmatprep.subr.bf16.mxu0 0
    %2258 = vmatpush1.bf16.msra.mxu0 0
    %2259 = vmatprep.subr.bf16.mxu0 0
    %2260 = vmatpush1.bf16.msra.mxu0 0
    %2261 = vmatprep.subr.bf16.mxu0 0
    %2262 = vmatpush1.bf16.msra.mxu0 0
    %2263 = vmatprep.mubr.bf16.mxu0 0
    %2264 = vmatmul.mubr.bf16.gmra.mrb[0].mxu0 %v2151
    %v2265 = vpop.f32.mrb[0].mxu0
    %v2266 = vadd.f32 0.0, %v2265
    %v2267 = vpop.f32.mrb[0].mxu0
    %v2268 = vpop.f32.mrb[0].mxu0
    %v2269 = vadd.f32 0.0, %v2268
    %v2270 = vpop.f32.mrb[0].mxu0
    %2271 = vmatprep.mubr.bf16.mxu0 0
    %2272 = vmatmul.mubr.bf16.gmra.mrb[0].mxu0 %v2152
    %v2273 = vpop.f32.mrb[0].mxu0
    %v2274 = vadd.f32 0.0, %v2273
    %v2275 = vpop.f32.mrb[0].mxu0
    %v2276 = vpop.f32.mrb[0].mxu0
    %v2277 = vadd.f32 0.0, %v2276
    %v2278 = vpop.f32.mrb[0].mxu0
    %2279 = vmatprep.mubr.bf16.mxu0 0
    %2280 = vmatmul.mubr.bf16.gmra.mrb[0].mxu0 %v2153
    %v2281 = vpop.f32.mrb[0].mxu0
    %v2282 = vadd.f32 0.0, %v2281
    %v2283 = vpop.f32.mrb[0].mxu0
    %v2284 = vpop.f32.mrb[0].mxu0
    %v2285 = vadd.f32 0.0, %v2284
    %v2286 = vpop.f32.mrb[0].mxu0
    %2287 = vmatprep.mubr.bf16.mxu0 0
    %2288 = vmatmul.mubr.bf16.gmra.mrb[0].mxu0 %v2154
    %v2289 = vpop.f32.mrb[0].mxu0
    %v2290 = vadd.f32 0.0, %v2289
    %v2291 = vpop.f32.mrb[0].mxu0
    %v2292 = vpop.f32.mrb[0].mxu0
    %v2293 = vadd.f32 0.0, %v2292
    %v2294 = vpop.f32.mrb[0].mxu0
    %2295 = vmatprep.mubr.bf16.mxu0 0
    %2296 = vmatmul.mubr.bf16.gmra.mrb[0].mxu0 %v2155
    %v2297 = vpop.f32.mrb[0].mxu0
    %v2298 = vadd.f32 0.0, %v2297
    %v2299 = vpop.f32.mrb[0].mxu0
    %v2300 = vpop.f32.mrb[0].mxu0
    %v2301 = vadd.f32 0.0, %v2300
    %v2302 = vpop.f32.mrb[0].mxu0
    %2303 = vmatprep.mubr.bf16.mxu0 0
    %2304 = vmatmul.mubr.bf16.gmra.mrb[0].mxu0 %v2156
    %v2305 = vpop.f32.mrb[0].mxu0
    %v2306 = vadd.f32 0.0, %v2305
    %v2307 = vpop.f32.mrb[0].mxu0
    %v2308 = vpop.f32.mrb[0].mxu0
    %v2309 = vadd.f32 0.0, %v2308
    %v2310 = vpop.f32.mrb[0].mxu0
    %2311 = vmatprep.mubr.bf16.mxu0 0
    %2312 = vmatmul.mubr.bf16.gmra.mrb[0].mxu0 %v2157
    %v2313 = vpop.f32.mrb[0].mxu0
    %v2314 = vadd.f32 0.0, %v2313
    %v2315 = vpop.f32.mrb[0].mxu0
    %v2316 = vpop.f32.mrb[0].mxu0
    %v2317 = vadd.f32 0.0, %v2316
    %v2318 = vpop.f32.mrb[0].mxu0
    %2319 = vmatprep.mubr.bf16.mxu0 0
    %2320 = vmatmul.mubr.bf16.gmra.mrb[0].mxu0 %v2158
    %v2321 = vpop.f32.mrb[0].mxu0
    %v2322 = vadd.f32 0.0, %v2321
    %v2323 = vpop.f32.mrb[0].mxu0
    %v2324 = vpop.f32.mrb[0].mxu0
    %v2325 = vadd.f32 0.0, %v2324
    %v2326 = vpop.f32.mrb[0].mxu0
    %2327 = vmatprep.mubr.bf16.mxu0 0
    %2328 = vmatmul.mubr.bf16.gmra.mrb[0].mxu0 %v2159
    %v2329 = vpop.f32.mrb[0].mxu0
    %v2330 = vadd.f32 0.0, %v2329
    %v2331 = vpop.f32.mrb[0].mxu0
    %v2332 = vpop.f32.mrb[0].mxu0
    %v2333 = vadd.f32 0.0, %v2332
    %v2334 = vpop.f32.mrb[0].mxu0
    %2335 = vmatprep.mubr.bf16.mxu0 0
    %2336 = vmatmul.mubr.bf16.gmra.mrb[0].mxu0 %v2160
    %v2337 = vpop.f32.mrb[0].mxu0
    %v2338 = vadd.f32 0.0, %v2337
    %v2339 = vpop.f32.mrb[0].mxu0
    %v2340 = vpop.f32.mrb[0].mxu0
    %v2341 = vadd.f32 0.0, %v2340
    %v2342 = vpop.f32.mrb[0].mxu0
    %2343 = vmatprep.mubr.bf16.mxu0 0
    %2344 = vmatmul.mubr.bf16.gmra.mrb[0].mxu0 %v2161
    %v2345 = vpop.f32.mrb[0].mxu0
    %v2346 = vadd.f32 0.0, %v2345
    %v2347 = vpop.f32.mrb[0].mxu0
    %v2348 = vpop.f32.mrb[0].mxu0
    %v2349 = vadd.f32 0.0, %v2348
    %v2350 = vpop.f32.mrb[0].mxu0
    %2351 = vmatprep.mubr.bf16.mxu0 0
    %2352 = vmatmul.mubr.bf16.gmra.mrb[0].mxu0 %v2162
    %v2353 = vpop.f32.mrb[0].mxu0
    %v2354 = vadd.f32 0.0, %v2353
    %v2355 = vpop.f32.mrb[0].mxu0
    %v2356 = vpop.f32.mrb[0].mxu0
    %v2357 = vadd.f32 0.0, %v2356
    %v2358 = vpop.f32.mrb[0].mxu0
    %2359 = vmatprep.mubr.bf16.mxu0 0
    %2360 = vmatmul.mubr.bf16.gmra.mrb[0].mxu0 %v2163
    %v2361 = vpop.f32.mrb[0].mxu0
    %v2362 = vadd.f32 0.0, %v2361
    %v2363 = vpop.f32.mrb[0].mxu0
    %v2364 = vpop.f32.mrb[0].mxu0
    %v2365 = vadd.f32 0.0, %v2364
    %v2366 = vpop.f32.mrb[0].mxu0
    %2367 = vmatprep.mubr.bf16.mxu0 0
    %2368 = vmatmul.mubr.bf16.gmra.mrb[0].mxu0 %v2164
    %v2369 = vpop.f32.mrb[0].mxu0
    %v2370 = vadd.f32 0.0, %v2369
    %v2371 = vpop.f32.mrb[0].mxu0
    %v2372 = vpop.f32.mrb[0].mxu0
    %v2373 = vadd.f32 0.0, %v2372
    %v2374 = vpop.f32.mrb[0].mxu0
    %2375 = vmatprep.mubr.bf16.mxu0 0
    %2376 = vmatmul.mubr.bf16.gmra.mrb[0].mxu0 %v2165
    %v2377 = vpop.f32.mrb[0].mxu0
    %v2378 = vadd.f32 0.0, %v2377
    %v2379 = vpop.f32.mrb[0].mxu0
    %v2380 = vpop.f32.mrb[0].mxu0
    %v2381 = vadd.f32 0.0, %v2380
    %v2382 = vpop.f32.mrb[0].mxu0
    %2383 = vmatprep.mubr.bf16.mxu0 0
    %2384 = vmatmul.mubr.bf16.gmra.mrb[0].mxu0 %v2166
    %v2385 = vpop.f32.mrb[0].mxu0
    %v2386 = vadd.f32 0.0, %v2385
    %v2387 = vpop.f32.mrb[0].mxu0
    %v2388 = vpop.f32.mrb[0].mxu0
    %v2389 = vadd.f32 0.0, %v2388
    %v2390 = vpop.f32.mrb[0].mxu0
    %2391 = vdwg.mxu0
    %v2392 = vmax.f32 %v2266, 0.0
    %v2393 = vmax.f32 %v2269, 0.0
    %v2394 = vmax.f32 %v2274, 0.0
    %v2395 = vmax.f32 %v2277, 0.0
    %v2396 = vmax.f32 %v2282, 0.0
    %v2397 = vmax.f32 %v2285, 0.0
    %v2398 = vmax.f32 %v2290, 0.0
    %v2399 = vmax.f32 %v2293, 0.0
    %v2400 = vmax.f32 %v2298, 0.0
    %v2401 = vmax.f32 %v2301, 0.0
    %v2402 = vmax.f32 %v2306, 0.0
    %v2403 = vmax.f32 %v2309, 0.0
    %v2404 = vmax.f32 %v2314, 0.0
    %v2405 = vmax.f32 %v2317, 0.0
    %v2406 = vmax.f32 %v2322, 0.0
    %v2407 = vmax.f32 %v2325, 0.0
    %v2408 = vmax.f32 %v2330, 0.0
    %v2409 = vmax.f32 %v2333, 0.0
    %v2410 = vmax.f32 %v2338, 0.0
    %v2411 = vmax.f32 %v2341, 0.0
    %v2412 = vmax.f32 %v2346, 0.0
    %v2413 = vmax.f32 %v2349, 0.0
    %v2414 = vmax.f32 %v2354, 0.0
    %v2415 = vmax.f32 %v2357, 0.0
    %v2416 = vmax.f32 %v2362, 0.0
    %v2417 = vmax.f32 %v2365, 0.0
    %v2418 = vmax.f32 %v2370, 0.0
    %v2419 = vmax.f32 %v2373, 0.0
    %v2420 = vmax.f32 %v2378, 0.0
    %v2421 = vmax.f32 %v2381, 0.0
    %v2422 = vmax.f32 %v2386, 0.0
    %v2423 = vmax.f32 %v2389, 0.0
    %v2424 = vpack.c.bf16 %v2393, %v2392
    %v2425 = vpack.c.bf16 %v2395, %v2394
    %v2426 = vpack.c.bf16 %v2397, %v2396
    %v2427 = vpack.c.bf16 %v2399, %v2398
    %v2428 = vpack.c.bf16 %v2401, %v2400
    %v2429 = vpack.c.bf16 %v2403, %v2402
    %v2430 = vpack.c.bf16 %v2405, %v2404
    %v2431 = vpack.c.bf16 %v2407, %v2406
    %v2432 = vpack.c.bf16 %v2409, %v2408
    %v2433 = vpack.c.bf16 %v2411, %v2410
    %v2434 = vpack.c.bf16 %v2413, %v2412
    %v2435 = vpack.c.bf16 %v2415, %v2414
    %v2436 = vpack.c.bf16 %v2417, %v2416
    %v2437 = vpack.c.bf16 %v2419, %v2418
    %v2438 = vpack.c.bf16 %v2421, %v2420
    %v2439 = vpack.c.bf16 %v2423, %v2422
    %v2440 = vld [vmem:[#allocation20] sm:$0xf]
    %v2441 = vld [vmem:[#allocation20 + $0x4] sm:$0xf]
    %v2442 = vld [vmem:[#allocation20 + $0x8] sm:$0xf]
    %v2443 = vld [vmem:[#allocation20 + $0xc] sm:$0xf]
    %v2444 = vld [vmem:[#allocation20 + $0x10] sm:$0xf]
    %v2445 = vld [vmem:[#allocation20 + $0x14] sm:$0xf]
    %v2446 = vld [vmem:[#allocation20 + $0x18] sm:$0xf]
    %v2447 = vld [vmem:[#allocation20 + $0x1c] sm:$0xf]
    %v2448 = vld [vmem:[#allocation20 + $0x20] sm:$0xf]
    %v2449 = vld [vmem:[#allocation20 + $0x24] sm:$0xf]
    %v2450 = vld [vmem:[#allocation20 + $0x28] sm:$0xf]
    %v2451 = vld [vmem:[#allocation20 + $0x2c] sm:$0xf]
    %v2452 = vld [vmem:[#allocation20 + $0x30] sm:$0xf]
    %v2453 = vld [vmem:[#allocation20 + $0x34] sm:$0xf]
    %v2454 = vld [vmem:[#allocation20 + $0x38] sm:$0xf]
    %v2455 = vld [vmem:[#allocation20 + $0x3c] sm:$0xf]
    %v2472 = vunpack.c.l.b16 %v2440
    %v2473 = vunpack.c.l.b16 %v2441
    %v2474 = vunpack.c.l.b16 %v2442
    %v2475 = vunpack.c.l.b16 %v2443
    %v2476 = vunpack.c.l.b16 %v2444
    %v2477 = vunpack.c.l.b16 %v2445
    %v2478 = vunpack.c.l.b16 %v2446
    %v2479 = vunpack.c.l.b16 %v2447
    %v2480 = vunpack.c.l.b16 %v2448
    %v2481 = vunpack.c.l.b16 %v2449
    %v2482 = vunpack.c.l.b16 %v2450
    %v2483 = vunpack.c.l.b16 %v2451
    %v2484 = vunpack.c.l.b16 %v2452
    %v2485 = vunpack.c.l.b16 %v2453
    %v2486 = vunpack.c.l.b16 %v2454
    %v2487 = vunpack.c.l.b16 %v2455
    %v2488 = vpack.c.b16 %v2473, %v2472
    %v2489 = vpack.c.b16 %v2475, %v2474
    %v2490 = vpack.c.b16 %v2477, %v2476
    %v2491 = vpack.c.b16 %v2479, %v2478
    %v2492 = vpack.c.b16 %v2481, %v2480
    %v2493 = vpack.c.b16 %v2483, %v2482
    %v2494 = vpack.c.b16 %v2485, %v2484
    %v2495 = vpack.c.b16 %v2487, %v2486
    %2504 = vmatprep.subr.bf16.mxu0 0
    %2505 = vmatpush1.bf16.msra.mxu0 %v2488
    %2506 = vmatprep.subr.bf16.mxu0 0
    %2507 = vmatpush1.bf16.msra.mxu0 %v2489
    %2508 = vmatprep.subr.bf16.mxu0 0
    %2509 = vmatpush1.bf16.msra.mxu0 %v2490
    %2510 = vmatprep.subr.bf16.mxu0 0
    %2511 = vmatpush1.bf16.msra.mxu0 %v2491
    %2512 = vmatprep.subr.bf16.mxu0 0
    %2513 = vmatpush1.bf16.msra.mxu0 %v2492
    %2514 = vmatprep.subr.bf16.mxu0 0
    %2515 = vmatpush1.bf16.msra.mxu0 %v2493
    %2516 = vmatprep.subr.bf16.mxu0 0
    %2517 = vmatpush1.bf16.msra.mxu0 %v2494
    %2518 = vmatprep.subr.bf16.mxu0 0
    %2519 = vmatpush1.bf16.msra.mxu0 %v2495
    %2520 = vmatprep.subr.bf16.mxu0 0
    %2521 = vmatpush1.bf16.msra.mxu0 0
    %2522 = vmatprep.subr.bf16.mxu0 0
    %2523 = vmatpush1.bf16.msra.mxu0 0
    %2524 = vmatprep.subr.bf16.mxu0 0
    %2525 = vmatpush1.bf16.msra.mxu0 0
    %2526 = vmatprep.subr.bf16.mxu0 0
    %2527 = vmatpush1.bf16.msra.mxu0 0
    %2528 = vmatprep.subr.bf16.mxu0 0
    %2529 = vmatpush1.bf16.msra.mxu0 0
    %2530 = vmatprep.subr.bf16.mxu0 0
    %2531 = vmatpush1.bf16.msra.mxu0 0
    %2532 = vmatprep.subr.bf16.mxu0 0
    %2533 = vmatpush1.bf16.msra.mxu0 0
    %2534 = vmatprep.subr.bf16.mxu0 0
    %2535 = vmatpush1.bf16.msra.mxu0 0
    %2536 = vmatprep.mubr.bf16.mxu0 0
    %2537 = vmatmul.mubr.bf16.gmra.mrb[0].mxu0 %v2424
    %v2538 = vpop.f32.mrb[0].mxu0
    %v2539 = vadd.f32 0.0, %v2538
    %v2540 = vpop.f32.mrb[0].mxu0
    %v2541 = vpop.f32.mrb[0].mxu0
    %v2542 = vadd.f32 0.0, %v2541
    %v2543 = vpop.f32.mrb[0].mxu0
    %2544 = vmatprep.mubr.bf16.mxu0 0
    %2545 = vmatmul.mubr.bf16.gmra.mrb[0].mxu0 %v2425
    %v2546 = vpop.f32.mrb[0].mxu0
    %v2547 = vadd.f32 0.0, %v2546
    %v2548 = vpop.f32.mrb[0].mxu0
    %v2549 = vpop.f32.mrb[0].mxu0
    %v2550 = vadd.f32 0.0, %v2549
    %v2551 = vpop.f32.mrb[0].mxu0
    %2552 = vmatprep.mubr.bf16.mxu0 0
    %2553 = vmatmul.mubr.bf16.gmra.mrb[0].mxu0 %v2426
    %v2554 = vpop.f32.mrb[0].mxu0
    %v2555 = vadd.f32 0.0, %v2554
    %v2556 = vpop.f32.mrb[0].mxu0
    %v2557 = vpop.f32.mrb[0].mxu0
    %v2558 = vadd.f32 0.0, %v2557
    %v2559 = vpop.f32.mrb[0].mxu0
    %2560 = vmatprep.mubr.bf16.mxu0 0
    %2561 = vmatmul.mubr.bf16.gmra.mrb[0].mxu0 %v2427
    %v2562 = vpop.f32.mrb[0].mxu0
    %v2563 = vadd.f32 0.0, %v2562
    %v2564 = vpop.f32.mrb[0].mxu0
    %v2565 = vpop.f32.mrb[0].mxu0
    %v2566 = vadd.f32 0.0, %v2565
    %v2567 = vpop.f32.mrb[0].mxu0
    %2568 = vmatprep.mubr.bf16.mxu0 0
    %2569 = vmatmul.mubr.bf16.gmra.mrb[0].mxu0 %v2428
    %v2570 = vpop.f32.mrb[0].mxu0
    %v2571 = vadd.f32 0.0, %v2570
    %v2572 = vpop.f32.mrb[0].mxu0
    %v2573 = vpop.f32.mrb[0].mxu0
    %v2574 = vadd.f32 0.0, %v2573
    %v2575 = vpop.f32.mrb[0].mxu0
    %2576 = vmatprep.mubr.bf16.mxu0 0
    %2577 = vmatmul.mubr.bf16.gmra.mrb[0].mxu0 %v2429
    %v2578 = vpop.f32.mrb[0].mxu0
    %v2579 = vadd.f32 0.0, %v2578
    %v2580 = vpop.f32.mrb[0].mxu0
    %v2581 = vpop.f32.mrb[0].mxu0
    %v2582 = vadd.f32 0.0, %v2581
    %v2583 = vpop.f32.mrb[0].mxu0
    %2584 = vmatprep.mubr.bf16.mxu0 0
    %2585 = vmatmul.mubr.bf16.gmra.mrb[0].mxu0 %v2430
    %v2586 = vpop.f32.mrb[0].mxu0
    %v2587 = vadd.f32 0.0, %v2586
    %v2588 = vpop.f32.mrb[0].mxu0
    %v2589 = vpop.f32.mrb[0].mxu0
    %v2590 = vadd.f32 0.0, %v2589
    %v2591 = vpop.f32.mrb[0].mxu0
    %2592 = vmatprep.mubr.bf16.mxu0 0
    %2593 = vmatmul.mubr.bf16.gmra.mrb[0].mxu0 %v2431
    %v2594 = vpop.f32.mrb[0].mxu0
    %v2595 = vadd.f32 0.0, %v2594
    %v2596 = vpop.f32.mrb[0].mxu0
    %v2597 = vpop.f32.mrb[0].mxu0
    %v2598 = vadd.f32 0.0, %v2597
    %v2599 = vpop.f32.mrb[0].mxu0
    %2600 = vmatprep.mubr.bf16.mxu0 0
    %2601 = vmatmul.mubr.bf16.gmra.mrb[0].mxu0 %v2432
    %v2602 = vpop.f32.mrb[0].mxu0
    %v2603 = vadd.f32 0.0, %v2602
    %v2604 = vpop.f32.mrb[0].mxu0
    %v2605 = vpop.f32.mrb[0].mxu0
    %v2606 = vadd.f32 0.0, %v2605
    %v2607 = vpop.f32.mrb[0].mxu0
    %2608 = vmatprep.mubr.bf16.mxu0 0
    %2609 = vmatmul.mubr.bf16.gmra.mrb[0].mxu0 %v2433
    %v2610 = vpop.f32.mrb[0].mxu0
    %v2611 = vadd.f32 0.0, %v2610
    %v2612 = vpop.f32.mrb[0].mxu0
    %v2613 = vpop.f32.mrb[0].mxu0
    %v2614 = vadd.f32 0.0, %v2613
    %v2615 = vpop.f32.mrb[0].mxu0
    %2616 = vmatprep.mubr.bf16.mxu0 0
    %2617 = vmatmul.mubr.bf16.gmra.mrb[0].mxu0 %v2434
    %v2618 = vpop.f32.mrb[0].mxu0
    %v2619 = vadd.f32 0.0, %v2618
    %v2620 = vpop.f32.mrb[0].mxu0
    %v2621 = vpop.f32.mrb[0].mxu0
    %v2622 = vadd.f32 0.0, %v2621
    %v2623 = vpop.f32.mrb[0].mxu0
    %2624 = vmatprep.mubr.bf16.mxu0 0
    %2625 = vmatmul.mubr.bf16.gmra.mrb[0].mxu0 %v2435
    %v2626 = vpop.f32.mrb[0].mxu0
    %v2627 = vadd.f32 0.0, %v2626
    %v2628 = vpop.f32.mrb[0].mxu0
    %v2629 = vpop.f32.mrb[0].mxu0
    %v2630 = vadd.f32 0.0, %v2629
    %v2631 = vpop.f32.mrb[0].mxu0
    %2632 = vmatprep.mubr.bf16.mxu0 0
    %2633 = vmatmul.mubr.bf16.gmra.mrb[0].mxu0 %v2436
    %v2634 = vpop.f32.mrb[0].mxu0
    %v2635 = vadd.f32 0.0, %v2634
    %v2636 = vpop.f32.mrb[0].mxu0
    %v2637 = vpop.f32.mrb[0].mxu0
    %v2638 = vadd.f32 0.0, %v2637
    %v2639 = vpop.f32.mrb[0].mxu0
    %2640 = vmatprep.mubr.bf16.mxu0 0
    %2641 = vmatmul.mubr.bf16.gmra.mrb[0].mxu0 %v2437
    %v2642 = vpop.f32.mrb[0].mxu0
    %v2643 = vadd.f32 0.0, %v2642
    %v2644 = vpop.f32.mrb[0].mxu0
    %v2645 = vpop.f32.mrb[0].mxu0
    %v2646 = vadd.f32 0.0, %v2645
    %v2647 = vpop.f32.mrb[0].mxu0
    %2648 = vmatprep.mubr.bf16.mxu0 0
    %2649 = vmatmul.mubr.bf16.gmra.mrb[0].mxu0 %v2438
    %v2650 = vpop.f32.mrb[0].mxu0
    %v2651 = vadd.f32 0.0, %v2650
    %v2652 = vpop.f32.mrb[0].mxu0
    %v2653 = vpop.f32.mrb[0].mxu0
    %v2654 = vadd.f32 0.0, %v2653
    %v2655 = vpop.f32.mrb[0].mxu0
    %2656 = vmatprep.mubr.bf16.mxu0 0
    %2657 = vmatmul.mubr.bf16.gmra.mrb[0].mxu0 %v2439
    %v2658 = vpop.f32.mrb[0].mxu0
    %v2659 = vadd.f32 0.0, %v2658
    %v2660 = vpop.f32.mrb[0].mxu0
    %v2661 = vpop.f32.mrb[0].mxu0
    %v2662 = vadd.f32 0.0, %v2661
    %v2663 = vpop.f32.mrb[0].mxu0
    %2664 = vdwg.mxu0
    %v2665 = vmax.f32 %v2539, 0.0
    %v2666 = vmax.f32 %v2542, 0.0
    %v2667 = vmax.f32 %v2547, 0.0
    %v2668 = vmax.f32 %v2550, 0.0
    %v2669 = vmax.f32 %v2555, 0.0
    %v2670 = vmax.f32 %v2558, 0.0
    %v2671 = vmax.f32 %v2563, 0.0
    %v2672 = vmax.f32 %v2566, 0.0
    %v2673 = vmax.f32 %v2571, 0.0
    %v2674 = vmax.f32 %v2574, 0.0
    %v2675 = vmax.f32 %v2579, 0.0
    %v2676 = vmax.f32 %v2582, 0.0
    %v2677 = vmax.f32 %v2587, 0.0
    %v2678 = vmax.f32 %v2590, 0.0
    %v2679 = vmax.f32 %v2595, 0.0
    %v2680 = vmax.f32 %v2598, 0.0
    %v2681 = vmax.f32 %v2603, 0.0
    %v2682 = vmax.f32 %v2606, 0.0
    %v2683 = vmax.f32 %v2611, 0.0
    %v2684 = vmax.f32 %v2614, 0.0
    %v2685 = vmax.f32 %v2619, 0.0
    %v2686 = vmax.f32 %v2622, 0.0
    %v2687 = vmax.f32 %v2627, 0.0
    %v2688 = vmax.f32 %v2630, 0.0
    %v2689 = vmax.f32 %v2635, 0.0
    %v2690 = vmax.f32 %v2638, 0.0
    %v2691 = vmax.f32 %v2643, 0.0
    %v2692 = vmax.f32 %v2646, 0.0
    %v2693 = vmax.f32 %v2651, 0.0
    %v2694 = vmax.f32 %v2654, 0.0
    %v2695 = vmax.f32 %v2659, 0.0
    %v2696 = vmax.f32 %v2662, 0.0
    %v2697 = vpack.c.bf16 %v2666, %v2665
    %v2698 = vpack.c.bf16 %v2668, %v2667
    %v2699 = vpack.c.bf16 %v2670, %v2669
    %v2700 = vpack.c.bf16 %v2672, %v2671
    %v2701 = vpack.c.bf16 %v2674, %v2673
    %v2702 = vpack.c.bf16 %v2676, %v2675
    %v2703 = vpack.c.bf16 %v2678, %v2677
    %v2704 = vpack.c.bf16 %v2680, %v2679
    %v2705 = vpack.c.bf16 %v2682, %v2681
    %v2706 = vpack.c.bf16 %v2684, %v2683
    %v2707 = vpack.c.bf16 %v2686, %v2685
    %v2708 = vpack.c.bf16 %v2688, %v2687
    %v2709 = vpack.c.bf16 %v2690, %v2689
    %v2710 = vpack.c.bf16 %v2692, %v2691
    %v2711 = vpack.c.bf16 %v2694, %v2693
    %v2712 = vpack.c.bf16 %v2696, %v2695
    %v2713 = vld [vmem:[#allocation8] sm:$0xff]
    %v2714 = vld [vmem:[#allocation8 + $0x8] sm:$0xff]
    %v2715 = vld [vmem:[#allocation8 + $0x10] sm:$0xff]
    %v2716 = vld [vmem:[#allocation8 + $0x18] sm:$0xff]
    %v2717 = vld [vmem:[#allocation8 + $0x20] sm:$0xff]
    %v2718 = vld [vmem:[#allocation8 + $0x28] sm:$0xff]
    %v2719 = vld [vmem:[#allocation8 + $0x30] sm:$0xff]
    %v2720 = vld [vmem:[#allocation8 + $0x38] sm:$0xff]
    %v2721 = vld [vmem:[#allocation8 + $0x40] sm:$0xff]
    %v2722 = vld [vmem:[#allocation8 + $0x48] sm:$0xff]
    %v2723 = vld [vmem:[#allocation8 + $0x50] sm:$0xff]
    %v2724 = vld [vmem:[#allocation8 + $0x58] sm:$0xff]
    %v2725 = vld [vmem:[#allocation8 + $0x60] sm:$0xff]
    %v2726 = vld [vmem:[#allocation8 + $0x68] sm:$0xff]
    %v2727 = vld [vmem:[#allocation8 + $0x70] sm:$0xff]
    %v2728 = vld [vmem:[#allocation8 + $0x78] sm:$0xff]
    %v2729 = vunpack.c.l.s8.bf16 %v2713
    %v2730 = vunpack.c.l.s8.bf16 %v2714
    %v2731 = vunpack.c.h.s8.bf16 %v2713
    %v2732 = vunpack.c.h.s8.bf16 %v2714
    %v2733 = vunpack.c.l.s8.bf16 %v2715
    %v2734 = vunpack.c.l.s8.bf16 %v2716
    %v2735 = vunpack.c.h.s8.bf16 %v2715
    %v2736 = vunpack.c.h.s8.bf16 %v2716
    %v2737 = vunpack.c.l.s8.bf16 %v2717
    %v2738 = vunpack.c.l.s8.bf16 %v2718
    %v2739 = vunpack.c.h.s8.bf16 %v2717
    %v2740 = vunpack.c.h.s8.bf16 %v2718
    %v2741 = vunpack.c.l.s8.bf16 %v2719
    %v2742 = vunpack.c.l.s8.bf16 %v2720
    %v2743 = vunpack.c.h.s8.bf16 %v2719
    %v2744 = vunpack.c.h.s8.bf16 %v2720
    %v2745 = vunpack.c.l.s8.bf16 %v2721
    %v2746 = vunpack.c.l.s8.bf16 %v2722
    %v2747 = vunpack.c.h.s8.bf16 %v2721
    %v2748 = vunpack.c.h.s8.bf16 %v2722
    %v2749 = vunpack.c.l.s8.bf16 %v2723
    %v2750 = vunpack.c.l.s8.bf16 %v2724
    %v2751 = vunpack.c.h.s8.bf16 %v2723
    %v2752 = vunpack.c.h.s8.bf16 %v2724
    %v2753 = vunpack.c.l.s8.bf16 %v2725
    %v2754 = vunpack.c.l.s8.bf16 %v2726
    %v2755 = vunpack.c.h.s8.bf16 %v2725
    %v2756 = vunpack.c.h.s8.bf16 %v2726
    %v2757 = vunpack.c.l.s8.bf16 %v2727
    %v2758 = vunpack.c.l.s8.bf16 %v2728
    %v2759 = vunpack.c.h.s8.bf16 %v2727
    %v2760 = vunpack.c.h.s8.bf16 %v2728
    %2761 = vmatprep.subr.bf16.mxu0 0
    %2762 = vmatpush1.bf16.msra.mxu0 %v2697
    %2763 = vmatprep.subr.bf16.mxu0 0
    %2764 = vmatpush1.bf16.msra.mxu0 %v2698
    %2765 = vmatprep.subr.bf16.mxu0 0
    %2766 = vmatpush1.bf16.msra.mxu0 %v2699
    %2767 = vmatprep.subr.bf16.mxu0 0
    %2768 = vmatpush1.bf16.msra.mxu0 %v2700
    %2769 = vmatprep.subr.bf16.mxu0 0
    %2770 = vmatpush1.bf16.msra.mxu0 %v2701
    %2771 = vmatprep.subr.bf16.mxu0 0
    %2772 = vmatpush1.bf16.msra.mxu0 %v2702
    %2773 = vmatprep.subr.bf16.mxu0 0
    %2774 = vmatpush1.bf16.msra.mxu0 %v2703
    %2775 = vmatprep.subr.bf16.mxu0 0
    %2776 = vmatpush1.bf16.msra.mxu0 %v2704
    %2777 = vmatprep.subr.bf16.mxu0 0
    %2778 = vmatpush1.bf16.msra.mxu0 %v2705
    %2779 = vmatprep.subr.bf16.mxu0 0
    %2780 = vmatpush1.bf16.msra.mxu0 %v2706
    %2781 = vmatprep.subr.bf16.mxu0 0
    %2782 = vmatpush1.bf16.msra.mxu0 %v2707
    %2783 = vmatprep.subr.bf16.mxu0 0
    %2784 = vmatpush1.bf16.msra.mxu0 %v2708
    %2785 = vmatprep.subr.bf16.mxu0 0
    %2786 = vmatpush1.bf16.msra.mxu0 %v2709
    %2787 = vmatprep.subr.bf16.mxu0 0
    %2788 = vmatpush1.bf16.msra.mxu0 %v2710
    %2789 = vmatprep.subr.bf16.mxu0 0
    %2790 = vmatpush1.bf16.msra.mxu0 %v2711
    %2791 = vmatprep.subr.bf16.mxu0 0
    %2792 = vmatpush1.bf16.msra.mxu0 %v2712
    %2793 = vmatprep.mubr.bf16.mxu0 %v2730
    %2794 = vmatmul.mubr.bf16.gmra.mrb[0].mxu0 %v2729
    %v2795 = vpop.f32.mrb[0].mxu0
    %v2796 = vadd.f32 0.0, %v2795
    %v2797 = vpop.f32.mrb[0].mxu0
    %v2798 = vpop.f32.mrb[0].mxu0
    %v2799 = vadd.f32 0.0, %v2798
    %v2800 = vpop.f32.mrb[0].mxu0
    %2801 = vmatprep.mubr.bf16.mxu0 %v2732
    %2802 = vmatmul.mubr.bf16.gmra.mrb[0].mxu0 %v2731
    %v2803 = vpop.f32.mrb[0].mxu0
    %v2804 = vadd.f32 0.0, %v2803
    %v2805 = vpop.f32.mrb[0].mxu0
    %v2806 = vpop.f32.mrb[0].mxu0
    %v2807 = vadd.f32 0.0, %v2806
    %v2808 = vpop.f32.mrb[0].mxu0
    %2809 = vmatprep.mubr.bf16.mxu0 %v2734
    %2810 = vmatmul.mubr.bf16.gmra.mrb[0].mxu0 %v2733
    %v2811 = vpop.f32.mrb[0].mxu0
    %v2812 = vadd.f32 0.0, %v2811
    %v2813 = vpop.f32.mrb[0].mxu0
    %v2814 = vpop.f32.mrb[0].mxu0
    %v2815 = vadd.f32 0.0, %v2814
    %v2816 = vpop.f32.mrb[0].mxu0
    %2817 = vmatprep.mubr.bf16.mxu0 %v2736
    %2818 = vmatmul.mubr.bf16.gmra.mrb[0].mxu0 %v2735
    %v2819 = vpop.f32.mrb[0].mxu0
    %v2820 = vadd.f32 0.0, %v2819
    %v2821 = vpop.f32.mrb[0].mxu0
    %v2822 = vpop.f32.mrb[0].mxu0
    %v2823 = vadd.f32 0.0, %v2822
    %v2824 = vpop.f32.mrb[0].mxu0
    %2825 = vmatprep.mubr.bf16.mxu0 %v2738
    %2826 = vmatmul.mubr.bf16.gmra.mrb[0].mxu0 %v2737
    %v2827 = vpop.f32.mrb[0].mxu0
    %v2828 = vadd.f32 0.0, %v2827
    %v2829 = vpop.f32.mrb[0].mxu0
    %v2830 = vpop.f32.mrb[0].mxu0
    %v2831 = vadd.f32 0.0, %v2830
    %v2832 = vpop.f32.mrb[0].mxu0
    %2833 = vmatprep.mubr.bf16.mxu0 %v2740
    %2834 = vmatmul.mubr.bf16.gmra.mrb[0].mxu0 %v2739
    %v2835 = vpop.f32.mrb[0].mxu0
    %v2836 = vadd.f32 0.0, %v2835
    %v2837 = vpop.f32.mrb[0].mxu0
    %v2838 = vpop.f32.mrb[0].mxu0
    %v2839 = vadd.f32 0.0, %v2838
    %v2840 = vpop.f32.mrb[0].mxu0
    %2841 = vmatprep.mubr.bf16.mxu0 %v2742
    %2842 = vmatmul.mubr.bf16.gmra.mrb[0].mxu0 %v2741
    %v2843 = vpop.f32.mrb[0].mxu0
    %v2844 = vadd.f32 0.0, %v2843
    %v2845 = vpop.f32.mrb[0].mxu0
    %v2846 = vpop.f32.mrb[0].mxu0
    %v2847 = vadd.f32 0.0, %v2846
    %v2848 = vpop.f32.mrb[0].mxu0
    %2849 = vmatprep.mubr.bf16.mxu0 %v2744
    %2850 = vmatmul.mubr.bf16.gmra.mrb[0].mxu0 %v2743
    %v2851 = vpop.f32.mrb[0].mxu0
    %v2852 = vadd.f32 0.0, %v2851
    %v2853 = vpop.f32.mrb[0].mxu0
    %v2854 = vpop.f32.mrb[0].mxu0
    %v2855 = vadd.f32 0.0, %v2854
    %v2856 = vpop.f32.mrb[0].mxu0
    %2857 = vmatprep.mubr.bf16.mxu0 %v2746
    %2858 = vmatmul.mubr.bf16.gmra.mrb[0].mxu0 %v2745
    %v2859 = vpop.f32.mrb[0].mxu0
    %v2860 = vadd.f32 0.0, %v2859
    %v2861 = vpop.f32.mrb[0].mxu0
    %v2862 = vpop.f32.mrb[0].mxu0
    %v2863 = vadd.f32 0.0, %v2862
    %v2864 = vpop.f32.mrb[0].mxu0
    %2865 = vmatprep.mubr.bf16.mxu0 %v2748
    %2866 = vmatmul.mubr.bf16.gmra.mrb[0].mxu0 %v2747
    %v2867 = vpop.f32.mrb[0].mxu0
    %v2868 = vadd.f32 0.0, %v2867
    %v2869 = vpop.f32.mrb[0].mxu0
    %v2870 = vpop.f32.mrb[0].mxu0
    %v2871 = vadd.f32 0.0, %v2870
    %v2872 = vpop.f32.mrb[0].mxu0
    %2873 = vmatprep.mubr.bf16.mxu0 %v2750
    %2874 = vmatmul.mubr.bf16.gmra.mrb[0].mxu0 %v2749
    %v2875 = vpop.f32.mrb[0].mxu0
    %v2876 = vadd.f32 0.0, %v2875
    %v2877 = vpop.f32.mrb[0].mxu0
    %v2878 = vpop.f32.mrb[0].mxu0
    %v2879 = vadd.f32 0.0, %v2878
    %v2880 = vpop.f32.mrb[0].mxu0
    %2881 = vmatprep.mubr.bf16.mxu0 %v2752
    %2882 = vmatmul.mubr.bf16.gmra.mrb[0].mxu0 %v2751
    %v2883 = vpop.f32.mrb[0].mxu0
    %v2884 = vadd.f32 0.0, %v2883
    %v2885 = vpop.f32.mrb[0].mxu0
    %v2886 = vpop.f32.mrb[0].mxu0
    %v2887 = vadd.f32 0.0, %v2886
    %v2888 = vpop.f32.mrb[0].mxu0
    %2889 = vmatprep.mubr.bf16.mxu0 %v2754
    %2890 = vmatmul.mubr.bf16.gmra.mrb[0].mxu0 %v2753
    %v2891 = vpop.f32.mrb[0].mxu0
    %v2892 = vadd.f32 0.0, %v2891
    %v2893 = vpop.f32.mrb[0].mxu0
    %v2894 = vpop.f32.mrb[0].mxu0
    %v2895 = vadd.f32 0.0, %v2894
    %v2896 = vpop.f32.mrb[0].mxu0
    %2897 = vmatprep.mubr.bf16.mxu0 %v2756
    %2898 = vmatmul.mubr.bf16.gmra.mrb[0].mxu0 %v2755
    %v2899 = vpop.f32.mrb[0].mxu0
    %v2900 = vadd.f32 0.0, %v2899
    %v2901 = vpop.f32.mrb[0].mxu0
    %v2902 = vpop.f32.mrb[0].mxu0
    %v2903 = vadd.f32 0.0, %v2902
    %v2904 = vpop.f32.mrb[0].mxu0
    %2905 = vmatprep.mubr.bf16.mxu0 %v2758
    %2906 = vmatmul.mubr.bf16.gmra.mrb[0].mxu0 %v2757
    %v2907 = vpop.f32.mrb[0].mxu0
    %v2908 = vadd.f32 0.0, %v2907
    %v2909 = vpop.f32.mrb[0].mxu0
    %v2910 = vpop.f32.mrb[0].mxu0
    %v2911 = vadd.f32 0.0, %v2910
    %v2912 = vpop.f32.mrb[0].mxu0
    %2913 = vmatprep.mubr.bf16.mxu0 %v2760
    %2914 = vmatmul.mubr.bf16.gmra.mrb[0].mxu0 %v2759
    %v2915 = vpop.f32.mrb[0].mxu0
    %v2916 = vadd.f32 0.0, %v2915
    %v2917 = vpop.f32.mrb[0].mxu0
    %v2918 = vpop.f32.mrb[0].mxu0
    %v2919 = vadd.f32 0.0, %v2918
    %v2920 = vpop.f32.mrb[0].mxu0
    %2921 = vdwg.mxu0
    %v2922 = vpack.c.bf16 %v2799, %v2796
    %v2923 = vpack.c.bf16 %v2807, %v2804
    %v2924 = vpack.c.bf16 %v2815, %v2812
    %v2925 = vpack.c.bf16 %v2823, %v2820
    %v2926 = vpack.c.bf16 %v2831, %v2828
    %v2927 = vpack.c.bf16 %v2839, %v2836
    %v2928 = vpack.c.bf16 %v2847, %v2844
    %v2929 = vpack.c.bf16 %v2855, %v2852
    %v2930 = vpack.c.bf16 %v2863, %v2860
    %v2931 = vpack.c.bf16 %v2871, %v2868
    %v2932 = vpack.c.bf16 %v2879, %v2876
    %v2933 = vpack.c.bf16 %v2887, %v2884
    %v2934 = vpack.c.bf16 %v2895, %v2892
    %v2935 = vpack.c.bf16 %v2903, %v2900
    %v2936 = vpack.c.bf16 %v2911, %v2908
    %v2937 = vpack.c.bf16 %v2919, %v2916
    %v2938 = vld [vmem:[#allocation22] sm:$0xf]
    %v2939 = vld [vmem:[#allocation22 + $0x4] sm:$0xf]
    %v2940 = vld [vmem:[#allocation22 + $0x8] sm:$0xf]
    %v2941 = vld [vmem:[#allocation22 + $0xc] sm:$0xf]
    %v2942 = vld [vmem:[#allocation22 + $0x10] sm:$0xf]
    %v2943 = vld [vmem:[#allocation22 + $0x14] sm:$0xf]
    %v2944 = vld [vmem:[#allocation22 + $0x18] sm:$0xf]
    %v2945 = vld [vmem:[#allocation22 + $0x1c] sm:$0xf]
    %v2946 = vld [vmem:[#allocation22 + $0x20] sm:$0xf]
    %v2947 = vld [vmem:[#allocation22 + $0x24] sm:$0xf]
    %v2948 = vld [vmem:[#allocation22 + $0x28] sm:$0xf]
    %v2949 = vld [vmem:[#allocation22 + $0x2c] sm:$0xf]
    %v2950 = vld [vmem:[#allocation22 + $0x30] sm:$0xf]
    %v2951 = vld [vmem:[#allocation22 + $0x34] sm:$0xf]
    %v2952 = vld [vmem:[#allocation22 + $0x38] sm:$0xf]
    %v2953 = vld [vmem:[#allocation22 + $0x3c] sm:$0xf]
    %v2970 = vunpack.c.l.b16 %v2938
    %v2971 = vunpack.c.l.b16 %v2939
    %v2972 = vunpack.c.l.b16 %v2940
    %v2973 = vunpack.c.l.b16 %v2941
    %v2974 = vunpack.c.l.b16 %v2942
    %v2975 = vunpack.c.l.b16 %v2943
    %v2976 = vunpack.c.l.b16 %v2944
    %v2977 = vunpack.c.l.b16 %v2945
    %v2978 = vunpack.c.l.b16 %v2946
    %v2979 = vunpack.c.l.b16 %v2947
    %v2980 = vunpack.c.l.b16 %v2948
    %v2981 = vunpack.c.l.b16 %v2949
    %v2982 = vunpack.c.l.b16 %v2950
    %v2983 = vunpack.c.l.b16 %v2951
    %v2984 = vunpack.c.l.b16 %v2952
    %v2985 = vunpack.c.l.b16 %v2953
    %v2986 = vpack.c.b16 %v2971, %v2970
    %v2987 = vpack.c.b16 %v2973, %v2972
    %v2988 = vpack.c.b16 %v2975, %v2974
    %v2989 = vpack.c.b16 %v2977, %v2976
    %v2990 = vpack.c.b16 %v2979, %v2978
    %v2991 = vpack.c.b16 %v2981, %v2980
    %v2992 = vpack.c.b16 %v2983, %v2982
    %v2993 = vpack.c.b16 %v2985, %v2984
    %3002 = vmatprep.subr.bf16.mxu0 0
    %3003 = vmatpush1.bf16.msra.mxu0 %v2986
    %3004 = vmatprep.subr.bf16.mxu0 0
    %3005 = vmatpush1.bf16.msra.mxu0 %v2987
    %3006 = vmatprep.subr.bf16.mxu0 0
    %3007 = vmatpush1.bf16.msra.mxu0 %v2988
    %3008 = vmatprep.subr.bf16.mxu0 0
    %3009 = vmatpush1.bf16.msra.mxu0 %v2989
    %3010 = vmatprep.subr.bf16.mxu0 0
    %3011 = vmatpush1.bf16.msra.mxu0 %v2990
    %3012 = vmatprep.subr.bf16.mxu0 0
    %3013 = vmatpush1.bf16.msra.mxu0 %v2991
    %3014 = vmatprep.subr.bf16.mxu0 0
    %3015 = vmatpush1.bf16.msra.mxu0 %v2992
    %3016 = vmatprep.subr.bf16.mxu0 0
    %3017 = vmatpush1.bf16.msra.mxu0 %v2993
    %3018 = vmatprep.subr.bf16.mxu0 0
    %3019 = vmatpush1.bf16.msra.mxu0 0
    %3020 = vmatprep.subr.bf16.mxu0 0
    %3021 = vmatpush1.bf16.msra.mxu0 0
    %3022 = vmatprep.subr.bf16.mxu0 0
    %3023 = vmatpush1.bf16.msra.mxu0 0
    %3024 = vmatprep.subr.bf16.mxu0 0
    %3025 = vmatpush1.bf16.msra.mxu0 0
    %3026 = vmatprep.subr.bf16.mxu0 0
    %3027 = vmatpush1.bf16.msra.mxu0 0
    %3028 = vmatprep.subr.bf16.mxu0 0
    %3029 = vmatpush1.bf16.msra.mxu0 0
    %3030 = vmatprep.subr.bf16.mxu0 0
    %3031 = vmatpush1.bf16.msra.mxu0 0
    %3032 = vmatprep.subr.bf16.mxu0 0
    %3033 = vmatpush1.bf16.msra.mxu0 0
    %3034 = vmatprep.mubr.bf16.mxu0 0
    %3035 = vmatmul.mubr.bf16.gmra.mrb[0].mxu0 %v2922
    %v3036 = vpop.f32.mrb[0].mxu0
    %v3037 = vadd.f32 0.0, %v3036
    %v3038 = vpop.f32.mrb[0].mxu0
    %v3039 = vpop.f32.mrb[0].mxu0
    %v3040 = vadd.f32 0.0, %v3039
    %v3041 = vpop.f32.mrb[0].mxu0
    %3042 = vmatprep.mubr.bf16.mxu0 0
    %3043 = vmatmul.mubr.bf16.gmra.mrb[0].mxu0 %v2923
    %v3044 = vpop.f32.mrb[0].mxu0
    %v3045 = vadd.f32 0.0, %v3044
    %v3046 = vpop.f32.mrb[0].mxu0
    %v3047 = vpop.f32.mrb[0].mxu0
    %v3048 = vadd.f32 0.0, %v3047
    %v3049 = vpop.f32.mrb[0].mxu0
    %3050 = vmatprep.mubr.bf16.mxu0 0
    %3051 = vmatmul.mubr.bf16.gmra.mrb[0].mxu0 %v2924
    %v3052 = vpop.f32.mrb[0].mxu0
    %v3053 = vadd.f32 0.0, %v3052
    %v3054 = vpop.f32.mrb[0].mxu0
    %v3055 = vpop.f32.mrb[0].mxu0
    %v3056 = vadd.f32 0.0, %v3055
    %v3057 = vpop.f32.mrb[0].mxu0
    %3058 = vmatprep.mubr.bf16.mxu0 0
    %3059 = vmatmul.mubr.bf16.gmra.mrb[0].mxu0 %v2925
    %v3060 = vpop.f32.mrb[0].mxu0
    %v3061 = vadd.f32 0.0, %v3060
    %v3062 = vpop.f32.mrb[0].mxu0
    %v3063 = vpop.f32.mrb[0].mxu0
    %v3064 = vadd.f32 0.0, %v3063
    %v3065 = vpop.f32.mrb[0].mxu0
    %3066 = vmatprep.mubr.bf16.mxu0 0
    %3067 = vmatmul.mubr.bf16.gmra.mrb[0].mxu0 %v2926
    %v3068 = vpop.f32.mrb[0].mxu0
    %v3069 = vadd.f32 0.0, %v3068
    %v3070 = vpop.f32.mrb[0].mxu0
    %v3071 = vpop.f32.mrb[0].mxu0
    %v3072 = vadd.f32 0.0, %v3071
    %v3073 = vpop.f32.mrb[0].mxu0
    %3074 = vmatprep.mubr.bf16.mxu0 0
    %3075 = vmatmul.mubr.bf16.gmra.mrb[0].mxu0 %v2927
    %v3076 = vpop.f32.mrb[0].mxu0
    %v3077 = vadd.f32 0.0, %v3076
    %v3078 = vpop.f32.mrb[0].mxu0
    %v3079 = vpop.f32.mrb[0].mxu0
    %v3080 = vadd.f32 0.0, %v3079
    %v3081 = vpop.f32.mrb[0].mxu0
    %3082 = vmatprep.mubr.bf16.mxu0 0
    %3083 = vmatmul.mubr.bf16.gmra.mrb[0].mxu0 %v2928
    %v3084 = vpop.f32.mrb[0].mxu0
    %v3085 = vadd.f32 0.0, %v3084
    %v3086 = vpop.f32.mrb[0].mxu0
    %v3087 = vpop.f32.mrb[0].mxu0
    %v3088 = vadd.f32 0.0, %v3087
    %v3089 = vpop.f32.mrb[0].mxu0
    %3090 = vmatprep.mubr.bf16.mxu0 0
    %3091 = vmatmul.mubr.bf16.gmra.mrb[0].mxu0 %v2929
    %v3092 = vpop.f32.mrb[0].mxu0
    %v3093 = vadd.f32 0.0, %v3092
    %v3094 = vpop.f32.mrb[0].mxu0
    %v3095 = vpop.f32.mrb[0].mxu0
    %v3096 = vadd.f32 0.0, %v3095
    %v3097 = vpop.f32.mrb[0].mxu0
    %3098 = vmatprep.mubr.bf16.mxu0 0
    %3099 = vmatmul.mubr.bf16.gmra.mrb[0].mxu0 %v2930
    %v3100 = vpop.f32.mrb[0].mxu0
    %v3101 = vadd.f32 0.0, %v3100
    %v3102 = vpop.f32.mrb[0].mxu0
    %v3103 = vpop.f32.mrb[0].mxu0
    %v3104 = vadd.f32 0.0, %v3103
    %v3105 = vpop.f32.mrb[0].mxu0
    %3106 = vmatprep.mubr.bf16.mxu0 0
    %3107 = vmatmul.mubr.bf16.gmra.mrb[0].mxu0 %v2931
    %v3108 = vpop.f32.mrb[0].mxu0
    %v3109 = vadd.f32 0.0, %v3108
    %v3110 = vpop.f32.mrb[0].mxu0
    %v3111 = vpop.f32.mrb[0].mxu0
    %v3112 = vadd.f32 0.0, %v3111
    %v3113 = vpop.f32.mrb[0].mxu0
    %3114 = vmatprep.mubr.bf16.mxu0 0
    %3115 = vmatmul.mubr.bf16.gmra.mrb[0].mxu0 %v2932
    %v3116 = vpop.f32.mrb[0].mxu0
    %v3117 = vadd.f32 0.0, %v3116
    %v3118 = vpop.f32.mrb[0].mxu0
    %v3119 = vpop.f32.mrb[0].mxu0
    %v3120 = vadd.f32 0.0, %v3119
    %v3121 = vpop.f32.mrb[0].mxu0
    %3122 = vmatprep.mubr.bf16.mxu0 0
    %3123 = vmatmul.mubr.bf16.gmra.mrb[0].mxu0 %v2933
    %v3124 = vpop.f32.mrb[0].mxu0
    %v3125 = vadd.f32 0.0, %v3124
    %v3126 = vpop.f32.mrb[0].mxu0
    %v3127 = vpop.f32.mrb[0].mxu0
    %v3128 = vadd.f32 0.0, %v3127
    %v3129 = vpop.f32.mrb[0].mxu0
    %3130 = vmatprep.mubr.bf16.mxu0 0
    %3131 = vmatmul.mubr.bf16.gmra.mrb[0].mxu0 %v2934
    %v3132 = vpop.f32.mrb[0].mxu0
    %v3133 = vadd.f32 0.0, %v3132
    %v3134 = vpop.f32.mrb[0].mxu0
    %v3135 = vpop.f32.mrb[0].mxu0
    %v3136 = vadd.f32 0.0, %v3135
    %v3137 = vpop.f32.mrb[0].mxu0
    %3138 = vmatprep.mubr.bf16.mxu0 0
    %3139 = vmatmul.mubr.bf16.gmra.mrb[0].mxu0 %v2935
    %v3140 = vpop.f32.mrb[0].mxu0
    %v3141 = vadd.f32 0.0, %v3140
    %v3142 = vpop.f32.mrb[0].mxu0
    %v3143 = vpop.f32.mrb[0].mxu0
    %v3144 = vadd.f32 0.0, %v3143
    %v3145 = vpop.f32.mrb[0].mxu0
    %3146 = vmatprep.mubr.bf16.mxu0 0
    %3147 = vmatmul.mubr.bf16.gmra.mrb[0].mxu0 %v2936
    %v3148 = vpop.f32.mrb[0].mxu0
    %v3149 = vadd.f32 0.0, %v3148
    %v3150 = vpop.f32.mrb[0].mxu0
    %v3151 = vpop.f32.mrb[0].mxu0
    %v3152 = vadd.f32 0.0, %v3151
    %v3153 = vpop.f32.mrb[0].mxu0
    %3154 = vmatprep.mubr.bf16.mxu0 0
    %3155 = vmatmul.mubr.bf16.gmra.mrb[0].mxu0 %v2937
    %v3156 = vpop.f32.mrb[0].mxu0
    %v3157 = vadd.f32 0.0, %v3156
    %v3158 = vpop.f32.mrb[0].mxu0
    %v3159 = vpop.f32.mrb[0].mxu0
    %v3160 = vadd.f32 0.0, %v3159
    %v3161 = vpop.f32.mrb[0].mxu0
    %3162 = vdwg.mxu0
    %v3163 = vmax.f32 %v3037, 0.0
    %v3164 = vmax.f32 %v3040, 0.0
    %v3165 = vmax.f32 %v3045, 0.0
    %v3166 = vmax.f32 %v3048, 0.0
    %v3167 = vmax.f32 %v3053, 0.0
    %v3168 = vmax.f32 %v3056, 0.0
    %v3169 = vmax.f32 %v3061, 0.0
    %v3170 = vmax.f32 %v3064, 0.0
    %v3171 = vmax.f32 %v3069, 0.0
    %v3172 = vmax.f32 %v3072, 0.0
    %v3173 = vmax.f32 %v3077, 0.0
    %v3174 = vmax.f32 %v3080, 0.0
    %v3175 = vmax.f32 %v3085, 0.0
    %v3176 = vmax.f32 %v3088, 0.0
    %v3177 = vmax.f32 %v3093, 0.0
    %v3178 = vmax.f32 %v3096, 0.0
    %v3179 = vmax.f32 %v3101, 0.0
    %v3180 = vmax.f32 %v3104, 0.0
    %v3181 = vmax.f32 %v3109, 0.0
    %v3182 = vmax.f32 %v3112, 0.0
    %v3183 = vmax.f32 %v3117, 0.0
    %v3184 = vmax.f32 %v3120, 0.0
    %v3185 = vmax.f32 %v3125, 0.0
    %v3186 = vmax.f32 %v3128, 0.0
    %v3187 = vmax.f32 %v3133, 0.0
    %v3188 = vmax.f32 %v3136, 0.0
    %v3189 = vmax.f32 %v3141, 0.0
    %v3190 = vmax.f32 %v3144, 0.0
    %v3191 = vmax.f32 %v3149, 0.0
    %v3192 = vmax.f32 %v3152, 0.0
    %v3193 = vmax.f32 %v3157, 0.0
    %v3194 = vmax.f32 %v3160, 0.0
    %v3195 = vpack.c.bf16 %v3164, %v3163
    %v3196 = vpack.c.bf16 %v3166, %v3165
    %v3197 = vpack.c.bf16 %v3168, %v3167
    %v3198 = vpack.c.bf16 %v3170, %v3169
    %v3199 = vpack.c.bf16 %v3172, %v3171
    %v3200 = vpack.c.bf16 %v3174, %v3173
    %v3201 = vpack.c.bf16 %v3176, %v3175
    %v3202 = vpack.c.bf16 %v3178, %v3177
    %v3203 = vpack.c.bf16 %v3180, %v3179
    %v3204 = vpack.c.bf16 %v3182, %v3181
    %v3205 = vpack.c.bf16 %v3184, %v3183
    %v3206 = vpack.c.bf16 %v3186, %v3185
    %v3207 = vpack.c.bf16 %v3188, %v3187
    %v3208 = vpack.c.bf16 %v3190, %v3189
    %v3209 = vpack.c.bf16 %v3192, %v3191
    %v3210 = vpack.c.bf16 %v3194, %v3193
    %v3211 = vld [vmem:[#allocation23] sm:$0xf]
    %v3212 = vld [vmem:[#allocation23 + $0x4] sm:$0xf]
    %v3213 = vld [vmem:[#allocation23 + $0x8] sm:$0xf]
    %v3214 = vld [vmem:[#allocation23 + $0xc] sm:$0xf]
    %v3215 = vld [vmem:[#allocation23 + $0x10] sm:$0xf]
    %v3216 = vld [vmem:[#allocation23 + $0x14] sm:$0xf]
    %v3217 = vld [vmem:[#allocation23 + $0x18] sm:$0xf]
    %v3218 = vld [vmem:[#allocation23 + $0x1c] sm:$0xf]
    %v3219 = vld [vmem:[#allocation23 + $0x20] sm:$0xf]
    %v3220 = vld [vmem:[#allocation23 + $0x24] sm:$0xf]
    %v3221 = vld [vmem:[#allocation23 + $0x28] sm:$0xf]
    %v3222 = vld [vmem:[#allocation23 + $0x2c] sm:$0xf]
    %v3223 = vld [vmem:[#allocation23 + $0x30] sm:$0xf]
    %v3224 = vld [vmem:[#allocation23 + $0x34] sm:$0xf]
    %v3225 = vld [vmem:[#allocation23 + $0x38] sm:$0xf]
    %v3226 = vld [vmem:[#allocation23 + $0x3c] sm:$0xf]
    %v3243 = vunpack.c.l.b16 %v3211
    %v3244 = vunpack.c.l.b16 %v3212
    %v3245 = vunpack.c.l.b16 %v3213
    %v3246 = vunpack.c.l.b16 %v3214
    %v3247 = vunpack.c.l.b16 %v3215
    %v3248 = vunpack.c.l.b16 %v3216
    %v3249 = vunpack.c.l.b16 %v3217
    %v3250 = vunpack.c.l.b16 %v3218
    %v3251 = vunpack.c.l.b16 %v3219
    %v3252 = vunpack.c.l.b16 %v3220
    %v3253 = vunpack.c.l.b16 %v3221
    %v3254 = vunpack.c.l.b16 %v3222
    %v3255 = vunpack.c.l.b16 %v3223
    %v3256 = vunpack.c.l.b16 %v3224
    %v3257 = vunpack.c.l.b16 %v3225
    %v3258 = vunpack.c.l.b16 %v3226
    %v3259 = vpack.c.b16 %v3244, %v3243
    %v3260 = vpack.c.b16 %v3246, %v3245
    %v3261 = vpack.c.b16 %v3248, %v3247
    %v3262 = vpack.c.b16 %v3250, %v3249
    %v3263 = vpack.c.b16 %v3252, %v3251
    %v3264 = vpack.c.b16 %v3254, %v3253
    %v3265 = vpack.c.b16 %v3256, %v3255
    %v3266 = vpack.c.b16 %v3258, %v3257
    %3275 = vmatprep.subr.bf16.mxu0 0
    %3276 = vmatpush1.bf16.msra.mxu0 %v3259
    %3277 = vmatprep.subr.bf16.mxu0 0
    %3278 = vmatpush1.bf16.msra.mxu0 %v3260
    %3279 = vmatprep.subr.bf16.mxu0 0
    %3280 = vmatpush1.bf16.msra.mxu0 %v3261
    %3281 = vmatprep.subr.bf16.mxu0 0
    %3282 = vmatpush1.bf16.msra.mxu0 %v3262
    %3283 = vmatprep.subr.bf16.mxu0 0
    %3284 = vmatpush1.bf16.msra.mxu0 %v3263
    %3285 = vmatprep.subr.bf16.mxu0 0
    %3286 = vmatpush1.bf16.msra.mxu0 %v3264
    %3287 = vmatprep.subr.bf16.mxu0 0
    %3288 = vmatpush1.bf16.msra.mxu0 %v3265
    %3289 = vmatprep.subr.bf16.mxu0 0
    %3290 = vmatpush1.bf16.msra.mxu0 %v3266
    %3291 = vmatprep.subr.bf16.mxu0 0
    %3292 = vmatpush1.bf16.msra.mxu0 0
    %3293 = vmatprep.subr.bf16.mxu0 0
    %3294 = vmatpush1.bf16.msra.mxu0 0
    %3295 = vmatprep.subr.bf16.mxu0 0
    %3296 = vmatpush1.bf16.msra.mxu0 0
    %3297 = vmatprep.subr.bf16.mxu0 0
    %3298 = vmatpush1.bf16.msra.mxu0 0
    %3299 = vmatprep.subr.bf16.mxu0 0
    %3300 = vmatpush1.bf16.msra.mxu0 0
    %3301 = vmatprep.subr.bf16.mxu0 0
    %3302 = vmatpush1.bf16.msra.mxu0 0
    %3303 = vmatprep.subr.bf16.mxu0 0
    %3304 = vmatpush1.bf16.msra.mxu0 0
    %3305 = vmatprep.subr.bf16.mxu0 0
    %3306 = vmatpush1.bf16.msra.mxu0 0
    %3307 = vmatprep.mubr.bf16.mxu0 0
    %3308 = vmatmul.mubr.bf16.gmra.mrb[0].mxu0 %v3195
    %v3309 = vpop.f32.mrb[0].mxu0
    %v3310 = vadd.f32 0.0, %v3309
    %v3311 = vpop.f32.mrb[0].mxu0
    %v3312 = vpop.f32.mrb[0].mxu0
    %v3313 = vadd.f32 0.0, %v3312
    %v3314 = vpop.f32.mrb[0].mxu0
    %3315 = vmatprep.mubr.bf16.mxu0 0
    %3316 = vmatmul.mubr.bf16.gmra.mrb[0].mxu0 %v3196
    %v3317 = vpop.f32.mrb[0].mxu0
    %v3318 = vadd.f32 0.0, %v3317
    %v3319 = vpop.f32.mrb[0].mxu0
    %v3320 = vpop.f32.mrb[0].mxu0
    %v3321 = vadd.f32 0.0, %v3320
    %v3322 = vpop.f32.mrb[0].mxu0
    %3323 = vmatprep.mubr.bf16.mxu0 0
    %3324 = vmatmul.mubr.bf16.gmra.mrb[0].mxu0 %v3197
    %v3325 = vpop.f32.mrb[0].mxu0
    %v3326 = vadd.f32 0.0, %v3325
    %v3327 = vpop.f32.mrb[0].mxu0
    %v3328 = vpop.f32.mrb[0].mxu0
    %v3329 = vadd.f32 0.0, %v3328
    %v3330 = vpop.f32.mrb[0].mxu0
    %3331 = vmatprep.mubr.bf16.mxu0 0
    %3332 = vmatmul.mubr.bf16.gmra.mrb[0].mxu0 %v3198
    %v3333 = vpop.f32.mrb[0].mxu0
    %v3334 = vadd.f32 0.0, %v3333
    %v3335 = vpop.f32.mrb[0].mxu0
    %v3336 = vpop.f32.mrb[0].mxu0
    %v3337 = vadd.f32 0.0, %v3336
    %v3338 = vpop.f32.mrb[0].mxu0
    %3339 = vmatprep.mubr.bf16.mxu0 0
    %3340 = vmatmul.mubr.bf16.gmra.mrb[0].mxu0 %v3199
    %v3341 = vpop.f32.mrb[0].mxu0
    %v3342 = vadd.f32 0.0, %v3341
    %v3343 = vpop.f32.mrb[0].mxu0
    %v3344 = vpop.f32.mrb[0].mxu0
    %v3345 = vadd.f32 0.0, %v3344
    %v3346 = vpop.f32.mrb[0].mxu0
    %3347 = vmatprep.mubr.bf16.mxu0 0
    %3348 = vmatmul.mubr.bf16.gmra.mrb[0].mxu0 %v3200
    %v3349 = vpop.f32.mrb[0].mxu0
    %v3350 = vadd.f32 0.0, %v3349
    %v3351 = vpop.f32.mrb[0].mxu0
    %v3352 = vpop.f32.mrb[0].mxu0
    %v3353 = vadd.f32 0.0, %v3352
    %v3354 = vpop.f32.mrb[0].mxu0
    %3355 = vmatprep.mubr.bf16.mxu0 0
    %3356 = vmatmul.mubr.bf16.gmra.mrb[0].mxu0 %v3201
    %v3357 = vpop.f32.mrb[0].mxu0
    %v3358 = vadd.f32 0.0, %v3357
    %v3359 = vpop.f32.mrb[0].mxu0
    %v3360 = vpop.f32.mrb[0].mxu0
    %v3361 = vadd.f32 0.0, %v3360
    %v3362 = vpop.f32.mrb[0].mxu0
    %3363 = vmatprep.mubr.bf16.mxu0 0
    %3364 = vmatmul.mubr.bf16.gmra.mrb[0].mxu0 %v3202
    %v3365 = vpop.f32.mrb[0].mxu0
    %v3366 = vadd.f32 0.0, %v3365
    %v3367 = vpop.f32.mrb[0].mxu0
    %v3368 = vpop.f32.mrb[0].mxu0
    %v3369 = vadd.f32 0.0, %v3368
    %v3370 = vpop.f32.mrb[0].mxu0
    %3371 = vmatprep.mubr.bf16.mxu0 0
    %3372 = vmatmul.mubr.bf16.gmra.mrb[0].mxu0 %v3203
    %v3373 = vpop.f32.mrb[0].mxu0
    %v3374 = vadd.f32 0.0, %v3373
    %v3375 = vpop.f32.mrb[0].mxu0
    %v3376 = vpop.f32.mrb[0].mxu0
    %v3377 = vadd.f32 0.0, %v3376
    %v3378 = vpop.f32.mrb[0].mxu0
    %3379 = vmatprep.mubr.bf16.mxu0 0
    %3380 = vmatmul.mubr.bf16.gmra.mrb[0].mxu0 %v3204
    %v3381 = vpop.f32.mrb[0].mxu0
    %v3382 = vadd.f32 0.0, %v3381
    %v3383 = vpop.f32.mrb[0].mxu0
    %v3384 = vpop.f32.mrb[0].mxu0
    %v3385 = vadd.f32 0.0, %v3384
    %v3386 = vpop.f32.mrb[0].mxu0
    %3387 = vmatprep.mubr.bf16.mxu0 0
    %3388 = vmatmul.mubr.bf16.gmra.mrb[0].mxu0 %v3205
    %v3389 = vpop.f32.mrb[0].mxu0
    %v3390 = vadd.f32 0.0, %v3389
    %v3391 = vpop.f32.mrb[0].mxu0
    %v3392 = vpop.f32.mrb[0].mxu0
    %v3393 = vadd.f32 0.0, %v3392
    %v3394 = vpop.f32.mrb[0].mxu0
    %3395 = vmatprep.mubr.bf16.mxu0 0
    %3396 = vmatmul.mubr.bf16.gmra.mrb[0].mxu0 %v3206
    %v3397 = vpop.f32.mrb[0].mxu0
    %v3398 = vadd.f32 0.0, %v3397
    %v3399 = vpop.f32.mrb[0].mxu0
    %v3400 = vpop.f32.mrb[0].mxu0
    %v3401 = vadd.f32 0.0, %v3400
    %v3402 = vpop.f32.mrb[0].mxu0
    %3403 = vmatprep.mubr.bf16.mxu0 0
    %3404 = vmatmul.mubr.bf16.gmra.mrb[0].mxu0 %v3207
    %v3405 = vpop.f32.mrb[0].mxu0
    %v3406 = vadd.f32 0.0, %v3405
    %v3407 = vpop.f32.mrb[0].mxu0
    %v3408 = vpop.f32.mrb[0].mxu0
    %v3409 = vadd.f32 0.0, %v3408
    %v3410 = vpop.f32.mrb[0].mxu0
    %3411 = vmatprep.mubr.bf16.mxu0 0
    %3412 = vmatmul.mubr.bf16.gmra.mrb[0].mxu0 %v3208
    %v3413 = vpop.f32.mrb[0].mxu0
    %v3414 = vadd.f32 0.0, %v3413
    %v3415 = vpop.f32.mrb[0].mxu0
    %v3416 = vpop.f32.mrb[0].mxu0
    %v3417 = vadd.f32 0.0, %v3416
    %v3418 = vpop.f32.mrb[0].mxu0
    %3419 = vmatprep.mubr.bf16.mxu0 0
    %3420 = vmatmul.mubr.bf16.gmra.mrb[0].mxu0 %v3209
    %v3421 = vpop.f32.mrb[0].mxu0
    %v3422 = vadd.f32 0.0, %v3421
    %v3423 = vpop.f32.mrb[0].mxu0
    %v3424 = vpop.f32.mrb[0].mxu0
    %v3425 = vadd.f32 0.0, %v3424
    %v3426 = vpop.f32.mrb[0].mxu0
    %3427 = vmatprep.mubr.bf16.mxu0 0
    %3428 = vmatmul.mubr.bf16.gmra.mrb[0].mxu0 %v3210
    %v3429 = vpop.f32.mrb[0].mxu0
    %v3430 = vadd.f32 0.0, %v3429
    %v3431 = vpop.f32.mrb[0].mxu0
    %v3432 = vpop.f32.mrb[0].mxu0
    %v3433 = vadd.f32 0.0, %v3432
    %v3434 = vpop.f32.mrb[0].mxu0
    %3435 = vdwg.mxu0
    %v3436 = vmax.f32 %v3310, 0.0
    %v3437 = vmax.f32 %v3313, 0.0
    %v3438 = vmax.f32 %v3318, 0.0
    %v3439 = vmax.f32 %v3321, 0.0
    %v3440 = vmax.f32 %v3326, 0.0
    %v3441 = vmax.f32 %v3329, 0.0
    %v3442 = vmax.f32 %v3334, 0.0
    %v3443 = vmax.f32 %v3337, 0.0
    %v3444 = vmax.f32 %v3342, 0.0
    %v3445 = vmax.f32 %v3345, 0.0
    %v3446 = vmax.f32 %v3350, 0.0
    %v3447 = vmax.f32 %v3353, 0.0
    %v3448 = vmax.f32 %v3358, 0.0
    %v3449 = vmax.f32 %v3361, 0.0
    %v3450 = vmax.f32 %v3366, 0.0
    %v3451 = vmax.f32 %v3369, 0.0
    %v3452 = vmax.f32 %v3374, 0.0
    %v3453 = vmax.f32 %v3377, 0.0
    %v3454 = vmax.f32 %v3382, 0.0
    %v3455 = vmax.f32 %v3385, 0.0
    %v3456 = vmax.f32 %v3390, 0.0
    %v3457 = vmax.f32 %v3393, 0.0
    %v3458 = vmax.f32 %v3398, 0.0
    %v3459 = vmax.f32 %v3401, 0.0
    %v3460 = vmax.f32 %v3406, 0.0
    %v3461 = vmax.f32 %v3409, 0.0
    %v3462 = vmax.f32 %v3414, 0.0
    %v3463 = vmax.f32 %v3417, 0.0
    %v3464 = vmax.f32 %v3422, 0.0
    %v3465 = vmax.f32 %v3425, 0.0
    %v3466 = vmax.f32 %v3430, 0.0
    %v3467 = vmax.f32 %v3433, 0.0
    %v3468 = vpack.c.bf16 %v3437, %v3436
    %v3469 = vpack.c.bf16 %v3439, %v3438
    %v3470 = vpack.c.bf16 %v3441, %v3440
    %v3471 = vpack.c.bf16 %v3443, %v3442
    %v3472 = vpack.c.bf16 %v3445, %v3444
    %v3473 = vpack.c.bf16 %v3447, %v3446
    %v3474 = vpack.c.bf16 %v3449, %v3448
    %v3475 = vpack.c.bf16 %v3451, %v3450
    %v3476 = vpack.c.bf16 %v3453, %v3452
    %v3477 = vpack.c.bf16 %v3455, %v3454
    %v3478 = vpack.c.bf16 %v3457, %v3456
    %v3479 = vpack.c.bf16 %v3459, %v3458
    %v3480 = vpack.c.bf16 %v3461, %v3460
    %v3481 = vpack.c.bf16 %v3463, %v3462
    %v3482 = vpack.c.bf16 %v3465, %v3464
    %v3483 = vpack.c.bf16 %v3467, %v3466
    %v3484 = vld [vmem:[#allocation10] sm:$0xff]
    %v3485 = vld [vmem:[#allocation10 + $0x8] sm:$0xff]
    %v3486 = vld [vmem:[#allocation10 + $0x10] sm:$0xff]
    %v3487 = vld [vmem:[#allocation10 + $0x18] sm:$0xff]
    %v3488 = vld [vmem:[#allocation10 + $0x20] sm:$0xff]
    %v3489 = vld [vmem:[#allocation10 + $0x28] sm:$0xff]
    %v3490 = vld [vmem:[#allocation10 + $0x30] sm:$0xff]
    %v3491 = vld [vmem:[#allocation10 + $0x38] sm:$0xff]
    %v3492 = vld [vmem:[#allocation10 + $0x40] sm:$0xff]
    %v3493 = vld [vmem:[#allocation10 + $0x48] sm:$0xff]
    %v3494 = vld [vmem:[#allocation10 + $0x50] sm:$0xff]
    %v3495 = vld [vmem:[#allocation10 + $0x58] sm:$0xff]
    %v3496 = vld [vmem:[#allocation10 + $0x60] sm:$0xff]
    %v3497 = vld [vmem:[#allocation10 + $0x68] sm:$0xff]
    %v3498 = vld [vmem:[#allocation10 + $0x70] sm:$0xff]
    %v3499 = vld [vmem:[#allocation10 + $0x78] sm:$0xff]
    %v3500 = vunpack.c.l.s8.bf16 %v3484
    %v3501 = vunpack.c.l.s8.bf16 %v3485
    %v3502 = vunpack.c.h.s8.bf16 %v3484
    %v3503 = vunpack.c.h.s8.bf16 %v3485
    %v3504 = vunpack.c.l.s8.bf16 %v3486
    %v3505 = vunpack.c.l.s8.bf16 %v3487
    %v3506 = vunpack.c.h.s8.bf16 %v3486
    %v3507 = vunpack.c.h.s8.bf16 %v3487
    %v3508 = vunpack.c.l.s8.bf16 %v3488
    %v3509 = vunpack.c.l.s8.bf16 %v3489
    %v3510 = vunpack.c.h.s8.bf16 %v3488
    %v3511 = vunpack.c.h.s8.bf16 %v3489
    %v3512 = vunpack.c.l.s8.bf16 %v3490
    %v3513 = vunpack.c.l.s8.bf16 %v3491
    %v3514 = vunpack.c.h.s8.bf16 %v3490
    %v3515 = vunpack.c.h.s8.bf16 %v3491
    %v3516 = vunpack.c.l.s8.bf16 %v3492
    %v3517 = vunpack.c.l.s8.bf16 %v3493
    %v3518 = vunpack.c.h.s8.bf16 %v3492
    %v3519 = vunpack.c.h.s8.bf16 %v3493
    %v3520 = vunpack.c.l.s8.bf16 %v3494
    %v3521 = vunpack.c.l.s8.bf16 %v3495
    %v3522 = vunpack.c.h.s8.bf16 %v3494
    %v3523 = vunpack.c.h.s8.bf16 %v3495
    %v3524 = vunpack.c.l.s8.bf16 %v3496
    %v3525 = vunpack.c.l.s8.bf16 %v3497
    %v3526 = vunpack.c.h.s8.bf16 %v3496
    %v3527 = vunpack.c.h.s8.bf16 %v3497
    %v3528 = vunpack.c.l.s8.bf16 %v3498
    %v3529 = vunpack.c.l.s8.bf16 %v3499
    %v3530 = vunpack.c.h.s8.bf16 %v3498
    %v3531 = vunpack.c.h.s8.bf16 %v3499
    %3532 = vmatprep.subr.bf16.mxu0 0
    %3533 = vmatpush1.bf16.msra.mxu0 %v3468
    %3534 = vmatprep.subr.bf16.mxu0 0
    %3535 = vmatpush1.bf16.msra.mxu0 %v3469
    %3536 = vmatprep.subr.bf16.mxu0 0
    %3537 = vmatpush1.bf16.msra.mxu0 %v3470
    %3538 = vmatprep.subr.bf16.mxu0 0
    %3539 = vmatpush1.bf16.msra.mxu0 %v3471
    %3540 = vmatprep.subr.bf16.mxu0 0
    %3541 = vmatpush1.bf16.msra.mxu0 %v3472
    %3542 = vmatprep.subr.bf16.mxu0 0
    %3543 = vmatpush1.bf16.msra.mxu0 %v3473
    %3544 = vmatprep.subr.bf16.mxu0 0
    %3545 = vmatpush1.bf16.msra.mxu0 %v3474
    %3546 = vmatprep.subr.bf16.mxu0 0
    %3547 = vmatpush1.bf16.msra.mxu0 %v3475
    %3548 = vmatprep.subr.bf16.mxu0 0
    %3549 = vmatpush1.bf16.msra.mxu0 %v3476
    %3550 = vmatprep.subr.bf16.mxu0 0
    %3551 = vmatpush1.bf16.msra.mxu0 %v3477
    %3552 = vmatprep.subr.bf16.mxu0 0
    %3553 = vmatpush1.bf16.msra.mxu0 %v3478
    %3554 = vmatprep.subr.bf16.mxu0 0
    %3555 = vmatpush1.bf16.msra.mxu0 %v3479
    %3556 = vmatprep.subr.bf16.mxu0 0
    %3557 = vmatpush1.bf16.msra.mxu0 %v3480
    %3558 = vmatprep.subr.bf16.mxu0 0
    %3559 = vmatpush1.bf16.msra.mxu0 %v3481
    %3560 = vmatprep.subr.bf16.mxu0 0
    %3561 = vmatpush1.bf16.msra.mxu0 %v3482
    %3562 = vmatprep.subr.bf16.mxu0 0
    %3563 = vmatpush1.bf16.msra.mxu0 %v3483
    %3564 = vmatprep.mubr.bf16.mxu0 %v3501
    %3565 = vmatmul.mubr.bf16.gmra.mrb[0].mxu0 %v3500
    %v3566 = vpop.f32.mrb[0].mxu0
    %v3567 = vadd.f32 0.0, %v3566
    %v3568 = vpop.f32.mrb[0].mxu0
    %v3569 = vpop.f32.mrb[0].mxu0
    %v3570 = vadd.f32 0.0, %v3569
    %v3571 = vpop.f32.mrb[0].mxu0
    %3572 = vmatprep.mubr.bf16.mxu0 %v3503
    %3573 = vmatmul.mubr.bf16.gmra.mrb[0].mxu0 %v3502
    %v3574 = vpop.f32.mrb[0].mxu0
    %v3575 = vadd.f32 0.0, %v3574
    %v3576 = vpop.f32.mrb[0].mxu0
    %v3577 = vpop.f32.mrb[0].mxu0
    %v3578 = vadd.f32 0.0, %v3577
    %v3579 = vpop.f32.mrb[0].mxu0
    %3580 = vmatprep.mubr.bf16.mxu0 %v3505
    %3581 = vmatmul.mubr.bf16.gmra.mrb[0].mxu0 %v3504
    %v3582 = vpop.f32.mrb[0].mxu0
    %v3583 = vadd.f32 0.0, %v3582
    %v3584 = vpop.f32.mrb[0].mxu0
    %v3585 = vpop.f32.mrb[0].mxu0
    %v3586 = vadd.f32 0.0, %v3585
    %v3587 = vpop.f32.mrb[0].mxu0
    %3588 = vmatprep.mubr.bf16.mxu0 %v3507
    %3589 = vmatmul.mubr.bf16.gmra.mrb[0].mxu0 %v3506
    %v3590 = vpop.f32.mrb[0].mxu0
    %v3591 = vadd.f32 0.0, %v3590
    %v3592 = vpop.f32.mrb[0].mxu0
    %v3593 = vpop.f32.mrb[0].mxu0
    %v3594 = vadd.f32 0.0, %v3593
    %v3595 = vpop.f32.mrb[0].mxu0
    %3596 = vmatprep.mubr.bf16.mxu0 %v3509
    %3597 = vmatmul.mubr.bf16.gmra.mrb[0].mxu0 %v3508
    %v3598 = vpop.f32.mrb[0].mxu0
    %v3599 = vadd.f32 0.0, %v3598
    %v3600 = vpop.f32.mrb[0].mxu0
    %v3601 = vpop.f32.mrb[0].mxu0
    %v3602 = vadd.f32 0.0, %v3601
    %v3603 = vpop.f32.mrb[0].mxu0
    %3604 = vmatprep.mubr.bf16.mxu0 %v3511
    %3605 = vmatmul.mubr.bf16.gmra.mrb[0].mxu0 %v3510
    %v3606 = vpop.f32.mrb[0].mxu0
    %v3607 = vadd.f32 0.0, %v3606
    %v3608 = vpop.f32.mrb[0].mxu0
    %v3609 = vpop.f32.mrb[0].mxu0
    %v3610 = vadd.f32 0.0, %v3609
    %v3611 = vpop.f32.mrb[0].mxu0
    %3612 = vmatprep.mubr.bf16.mxu0 %v3513
    %3613 = vmatmul.mubr.bf16.gmra.mrb[0].mxu0 %v3512
    %v3614 = vpop.f32.mrb[0].mxu0
    %v3615 = vadd.f32 0.0, %v3614
    %v3616 = vpop.f32.mrb[0].mxu0
    %v3617 = vpop.f32.mrb[0].mxu0
    %v3618 = vadd.f32 0.0, %v3617
    %v3619 = vpop.f32.mrb[0].mxu0
    %3620 = vmatprep.mubr.bf16.mxu0 %v3515
    %3621 = vmatmul.mubr.bf16.gmra.mrb[0].mxu0 %v3514
    %v3622 = vpop.f32.mrb[0].mxu0
    %v3623 = vadd.f32 0.0, %v3622
    %v3624 = vpop.f32.mrb[0].mxu0
    %v3625 = vpop.f32.mrb[0].mxu0
    %v3626 = vadd.f32 0.0, %v3625
    %v3627 = vpop.f32.mrb[0].mxu0
    %3628 = vmatprep.mubr.bf16.mxu0 %v3517
    %3629 = vmatmul.mubr.bf16.gmra.mrb[0].mxu0 %v3516
    %v3630 = vpop.f32.mrb[0].mxu0
    %v3631 = vadd.f32 0.0, %v3630
    %v3632 = vpop.f32.mrb[0].mxu0
    %v3633 = vpop.f32.mrb[0].mxu0
    %v3634 = vadd.f32 0.0, %v3633
    %v3635 = vpop.f32.mrb[0].mxu0
    %3636 = vmatprep.mubr.bf16.mxu0 %v3519
    %3637 = vmatmul.mubr.bf16.gmra.mrb[0].mxu0 %v3518
    %v3638 = vpop.f32.mrb[0].mxu0
    %v3639 = vadd.f32 0.0, %v3638
    %v3640 = vpop.f32.mrb[0].mxu0
    %v3641 = vpop.f32.mrb[0].mxu0
    %v3642 = vadd.f32 0.0, %v3641
    %v3643 = vpop.f32.mrb[0].mxu0
    %3644 = vmatprep.mubr.bf16.mxu0 %v3521
    %3645 = vmatmul.mubr.bf16.gmra.mrb[0].mxu0 %v3520
    %v3646 = vpop.f32.mrb[0].mxu0
    %v3647 = vadd.f32 0.0, %v3646
    %v3648 = vpop.f32.mrb[0].mxu0
    %v3649 = vpop.f32.mrb[0].mxu0
    %v3650 = vadd.f32 0.0, %v3649
    %v3651 = vpop.f32.mrb[0].mxu0
    %3652 = vmatprep.mubr.bf16.mxu0 %v3523
    %3653 = vmatmul.mubr.bf16.gmra.mrb[0].mxu0 %v3522
    %v3654 = vpop.f32.mrb[0].mxu0
    %v3655 = vadd.f32 0.0, %v3654
    %v3656 = vpop.f32.mrb[0].mxu0
    %v3657 = vpop.f32.mrb[0].mxu0
    %v3658 = vadd.f32 0.0, %v3657
    %v3659 = vpop.f32.mrb[0].mxu0
    %3660 = vmatprep.mubr.bf16.mxu0 %v3525
    %3661 = vmatmul.mubr.bf16.gmra.mrb[0].mxu0 %v3524
    %v3662 = vpop.f32.mrb[0].mxu0
    %v3663 = vadd.f32 0.0, %v3662
    %v3664 = vpop.f32.mrb[0].mxu0
    %v3665 = vpop.f32.mrb[0].mxu0
    %v3666 = vadd.f32 0.0, %v3665
    %v3667 = vpop.f32.mrb[0].mxu0
    %3668 = vmatprep.mubr.bf16.mxu0 %v3527
    %3669 = vmatmul.mubr.bf16.gmra.mrb[0].mxu0 %v3526
    %v3670 = vpop.f32.mrb[0].mxu0
    %v3671 = vadd.f32 0.0, %v3670
    %v3672 = vpop.f32.mrb[0].mxu0
    %v3673 = vpop.f32.mrb[0].mxu0
    %v3674 = vadd.f32 0.0, %v3673
    %v3675 = vpop.f32.mrb[0].mxu0
    %3676 = vmatprep.mubr.bf16.mxu0 %v3529
    %3677 = vmatmul.mubr.bf16.gmra.mrb[0].mxu0 %v3528
    %v3678 = vpop.f32.mrb[0].mxu0
    %v3679 = vadd.f32 0.0, %v3678
    %v3680 = vpop.f32.mrb[0].mxu0
    %v3681 = vpop.f32.mrb[0].mxu0
    %v3682 = vadd.f32 0.0, %v3681
    %v3683 = vpop.f32.mrb[0].mxu0
    %3684 = vmatprep.mubr.bf16.mxu0 %v3531
    %3685 = vmatmul.mubr.bf16.gmra.mrb[0].mxu0 %v3530
    %v3686 = vpop.f32.mrb[0].mxu0
    %v3687 = vadd.f32 0.0, %v3686
    %v3688 = vpop.f32.mrb[0].mxu0
    %v3689 = vpop.f32.mrb[0].mxu0
    %v3690 = vadd.f32 0.0, %v3689
    %v3691 = vpop.f32.mrb[0].mxu0
    %3692 = vdwg.mxu0
    %v3693 = vpack.c.bf16 %v3570, %v3567
    %v3694 = vpack.c.bf16 %v3578, %v3575
    %v3695 = vpack.c.bf16 %v3586, %v3583
    %v3696 = vpack.c.bf16 %v3594, %v3591
    %v3697 = vpack.c.bf16 %v3602, %v3599
    %v3698 = vpack.c.bf16 %v3610, %v3607
    %v3699 = vpack.c.bf16 %v3618, %v3615
    %v3700 = vpack.c.bf16 %v3626, %v3623
    %v3701 = vpack.c.bf16 %v3634, %v3631
    %v3702 = vpack.c.bf16 %v3642, %v3639
    %v3703 = vpack.c.bf16 %v3650, %v3647
    %v3704 = vpack.c.bf16 %v3658, %v3655
    %v3705 = vpack.c.bf16 %v3666, %v3663
    %v3706 = vpack.c.bf16 %v3674, %v3671
    %v3707 = vpack.c.bf16 %v3682, %v3679
    %v3708 = vpack.c.bf16 %v3690, %v3687
    %v3709 = vld [vmem:[#allocation25] sm:$0xf]
    %v3710 = vld [vmem:[#allocation25 + $0x4] sm:$0xf]
    %v3711 = vld [vmem:[#allocation25 + $0x8] sm:$0xf]
    %v3712 = vld [vmem:[#allocation25 + $0xc] sm:$0xf]
    %v3713 = vld [vmem:[#allocation25 + $0x10] sm:$0xf]
    %v3714 = vld [vmem:[#allocation25 + $0x14] sm:$0xf]
    %v3715 = vld [vmem:[#allocation25 + $0x18] sm:$0xf]
    %v3716 = vld [vmem:[#allocation25 + $0x1c] sm:$0xf]
    %v3717 = vld [vmem:[#allocation25 + $0x20] sm:$0xf]
    %v3718 = vld [vmem:[#allocation25 + $0x24] sm:$0xf]
    %v3719 = vld [vmem:[#allocation25 + $0x28] sm:$0xf]
    %v3720 = vld [vmem:[#allocation25 + $0x2c] sm:$0xf]
    %v3721 = vld [vmem:[#allocation25 + $0x30] sm:$0xf]
    %v3722 = vld [vmem:[#allocation25 + $0x34] sm:$0xf]
    %v3723 = vld [vmem:[#allocation25 + $0x38] sm:$0xf]
    %v3724 = vld [vmem:[#allocation25 + $0x3c] sm:$0xf]
    %v3741 = vunpack.c.l.b16 %v3709
    %v3742 = vunpack.c.l.b16 %v3710
    %v3743 = vunpack.c.l.b16 %v3711
    %v3744 = vunpack.c.l.b16 %v3712
    %v3745 = vunpack.c.l.b16 %v3713
    %v3746 = vunpack.c.l.b16 %v3714
    %v3747 = vunpack.c.l.b16 %v3715
    %v3748 = vunpack.c.l.b16 %v3716
    %v3749 = vunpack.c.l.b16 %v3717
    %v3750 = vunpack.c.l.b16 %v3718
    %v3751 = vunpack.c.l.b16 %v3719
    %v3752 = vunpack.c.l.b16 %v3720
    %v3753 = vunpack.c.l.b16 %v3721
    %v3754 = vunpack.c.l.b16 %v3722
    %v3755 = vunpack.c.l.b16 %v3723
    %v3756 = vunpack.c.l.b16 %v3724
    %v3757 = vpack.c.b16 %v3742, %v3741
    %v3758 = vpack.c.b16 %v3744, %v3743
    %v3759 = vpack.c.b16 %v3746, %v3745
    %v3760 = vpack.c.b16 %v3748, %v3747
    %v3761 = vpack.c.b16 %v3750, %v3749
    %v3762 = vpack.c.b16 %v3752, %v3751
    %v3763 = vpack.c.b16 %v3754, %v3753
    %v3764 = vpack.c.b16 %v3756, %v3755
    %3773 = vmatprep.subr.bf16.mxu0 0
    %3774 = vmatpush1.bf16.msra.mxu0 %v3757
    %3775 = vmatprep.subr.bf16.mxu0 0
    %3776 = vmatpush1.bf16.msra.mxu0 %v3758
    %3777 = vmatprep.subr.bf16.mxu0 0
    %3778 = vmatpush1.bf16.msra.mxu0 %v3759
    %3779 = vmatprep.subr.bf16.mxu0 0
    %3780 = vmatpush1.bf16.msra.mxu0 %v3760
    %3781 = vmatprep.subr.bf16.mxu0 0
    %3782 = vmatpush1.bf16.msra.mxu0 %v3761
    %3783 = vmatprep.subr.bf16.mxu0 0
    %3784 = vmatpush1.bf16.msra.mxu0 %v3762
    %3785 = vmatprep.subr.bf16.mxu0 0
    %3786 = vmatpush1.bf16.msra.mxu0 %v3763
    %3787 = vmatprep.subr.bf16.mxu0 0
    %3788 = vmatpush1.bf16.msra.mxu0 %v3764
    %3789 = vmatprep.subr.bf16.mxu0 0
    %3790 = vmatpush1.bf16.msra.mxu0 0
    %3791 = vmatprep.subr.bf16.mxu0 0
    %3792 = vmatpush1.bf16.msra.mxu0 0
    %3793 = vmatprep.subr.bf16.mxu0 0
    %3794 = vmatpush1.bf16.msra.mxu0 0
    %3795 = vmatprep.subr.bf16.mxu0 0
    %3796 = vmatpush1.bf16.msra.mxu0 0
    %3797 = vmatprep.subr.bf16.mxu0 0
    %3798 = vmatpush1.bf16.msra.mxu0 0
    %3799 = vmatprep.subr.bf16.mxu0 0
    %3800 = vmatpush1.bf16.msra.mxu0 0
    %3801 = vmatprep.subr.bf16.mxu0 0
    %3802 = vmatpush1.bf16.msra.mxu0 0
    %3803 = vmatprep.subr.bf16.mxu0 0
    %3804 = vmatpush1.bf16.msra.mxu0 0
    %3805 = vmatprep.mubr.bf16.mxu0 0
    %3806 = vmatmul.mubr.bf16.gmra.mrb[0].mxu0 %v3693
    %v3807 = vpop.f32.mrb[0].mxu0
    %v3808 = vadd.f32 0.0, %v3807
    %v3809 = vpop.f32.mrb[0].mxu0
    %v3810 = vpop.f32.mrb[0].mxu0
    %v3811 = vadd.f32 0.0, %v3810
    %v3812 = vpop.f32.mrb[0].mxu0
    %3813 = vmatprep.mubr.bf16.mxu0 0
    %3814 = vmatmul.mubr.bf16.gmra.mrb[0].mxu0 %v3694
    %v3815 = vpop.f32.mrb[0].mxu0
    %v3816 = vadd.f32 0.0, %v3815
    %v3817 = vpop.f32.mrb[0].mxu0
    %v3818 = vpop.f32.mrb[0].mxu0
    %v3819 = vadd.f32 0.0, %v3818
    %v3820 = vpop.f32.mrb[0].mxu0
    %3821 = vmatprep.mubr.bf16.mxu0 0
    %3822 = vmatmul.mubr.bf16.gmra.mrb[0].mxu0 %v3695
    %v3823 = vpop.f32.mrb[0].mxu0
    %v3824 = vadd.f32 0.0, %v3823
    %v3825 = vpop.f32.mrb[0].mxu0
    %v3826 = vpop.f32.mrb[0].mxu0
    %v3827 = vadd.f32 0.0, %v3826
    %v3828 = vpop.f32.mrb[0].mxu0
    %3829 = vmatprep.mubr.bf16.mxu0 0
    %3830 = vmatmul.mubr.bf16.gmra.mrb[0].mxu0 %v3696
    %v3831 = vpop.f32.mrb[0].mxu0
    %v3832 = vadd.f32 0.0, %v3831
    %v3833 = vpop.f32.mrb[0].mxu0
    %v3834 = vpop.f32.mrb[0].mxu0
    %v3835 = vadd.f32 0.0, %v3834
    %v3836 = vpop.f32.mrb[0].mxu0
    %3837 = vmatprep.mubr.bf16.mxu0 0
    %3838 = vmatmul.mubr.bf16.gmra.mrb[0].mxu0 %v3697
    %v3839 = vpop.f32.mrb[0].mxu0
    %v3840 = vadd.f32 0.0, %v3839
    %v3841 = vpop.f32.mrb[0].mxu0
    %v3842 = vpop.f32.mrb[0].mxu0
    %v3843 = vadd.f32 0.0, %v3842
    %v3844 = vpop.f32.mrb[0].mxu0
    %3845 = vmatprep.mubr.bf16.mxu0 0
    %3846 = vmatmul.mubr.bf16.gmra.mrb[0].mxu0 %v3698
    %v3847 = vpop.f32.mrb[0].mxu0
    %v3848 = vadd.f32 0.0, %v3847
    %v3849 = vpop.f32.mrb[0].mxu0
    %v3850 = vpop.f32.mrb[0].mxu0
    %v3851 = vadd.f32 0.0, %v3850
    %v3852 = vpop.f32.mrb[0].mxu0
    %3853 = vmatprep.mubr.bf16.mxu0 0
    %3854 = vmatmul.mubr.bf16.gmra.mrb[0].mxu0 %v3699
    %v3855 = vpop.f32.mrb[0].mxu0
    %v3856 = vadd.f32 0.0, %v3855
    %v3857 = vpop.f32.mrb[0].mxu0
    %v3858 = vpop.f32.mrb[0].mxu0
    %v3859 = vadd.f32 0.0, %v3858
    %v3860 = vpop.f32.mrb[0].mxu0
    %3861 = vmatprep.mubr.bf16.mxu0 0
    %3862 = vmatmul.mubr.bf16.gmra.mrb[0].mxu0 %v3700
    %v3863 = vpop.f32.mrb[0].mxu0
    %v3864 = vadd.f32 0.0, %v3863
    %v3865 = vpop.f32.mrb[0].mxu0
    %v3866 = vpop.f32.mrb[0].mxu0
    %v3867 = vadd.f32 0.0, %v3866
    %v3868 = vpop.f32.mrb[0].mxu0
    %3869 = vmatprep.mubr.bf16.mxu0 0
    %3870 = vmatmul.mubr.bf16.gmra.mrb[0].mxu0 %v3701
    %v3871 = vpop.f32.mrb[0].mxu0
    %v3872 = vadd.f32 0.0, %v3871
    %v3873 = vpop.f32.mrb[0].mxu0
    %v3874 = vpop.f32.mrb[0].mxu0
    %v3875 = vadd.f32 0.0, %v3874
    %v3876 = vpop.f32.mrb[0].mxu0
    %3877 = vmatprep.mubr.bf16.mxu0 0
    %3878 = vmatmul.mubr.bf16.gmra.mrb[0].mxu0 %v3702
    %v3879 = vpop.f32.mrb[0].mxu0
    %v3880 = vadd.f32 0.0, %v3879
    %v3881 = vpop.f32.mrb[0].mxu0
    %v3882 = vpop.f32.mrb[0].mxu0
    %v3883 = vadd.f32 0.0, %v3882
    %v3884 = vpop.f32.mrb[0].mxu0
    %3885 = vmatprep.mubr.bf16.mxu0 0
    %3886 = vmatmul.mubr.bf16.gmra.mrb[0].mxu0 %v3703
    %v3887 = vpop.f32.mrb[0].mxu0
    %v3888 = vadd.f32 0.0, %v3887
    %v3889 = vpop.f32.mrb[0].mxu0
    %v3890 = vpop.f32.mrb[0].mxu0
    %v3891 = vadd.f32 0.0, %v3890
    %v3892 = vpop.f32.mrb[0].mxu0
    %3893 = vmatprep.mubr.bf16.mxu0 0
    %3894 = vmatmul.mubr.bf16.gmra.mrb[0].mxu0 %v3704
    %v3895 = vpop.f32.mrb[0].mxu0
    %v3896 = vadd.f32 0.0, %v3895
    %v3897 = vpop.f32.mrb[0].mxu0
    %v3898 = vpop.f32.mrb[0].mxu0
    %v3899 = vadd.f32 0.0, %v3898
    %v3900 = vpop.f32.mrb[0].mxu0
    %3901 = vmatprep.mubr.bf16.mxu0 0
    %3902 = vmatmul.mubr.bf16.gmra.mrb[0].mxu0 %v3705
    %v3903 = vpop.f32.mrb[0].mxu0
    %v3904 = vadd.f32 0.0, %v3903
    %v3905 = vpop.f32.mrb[0].mxu0
    %v3906 = vpop.f32.mrb[0].mxu0
    %v3907 = vadd.f32 0.0, %v3906
    %v3908 = vpop.f32.mrb[0].mxu0
    %3909 = vmatprep.mubr.bf16.mxu0 0
    %3910 = vmatmul.mubr.bf16.gmra.mrb[0].mxu0 %v3706
    %v3911 = vpop.f32.mrb[0].mxu0
    %v3912 = vadd.f32 0.0, %v3911
    %v3913 = vpop.f32.mrb[0].mxu0
    %v3914 = vpop.f32.mrb[0].mxu0
    %v3915 = vadd.f32 0.0, %v3914
    %v3916 = vpop.f32.mrb[0].mxu0
    %3917 = vmatprep.mubr.bf16.mxu0 0
    %3918 = vmatmul.mubr.bf16.gmra.mrb[0].mxu0 %v3707
    %v3919 = vpop.f32.mrb[0].mxu0
    %v3920 = vadd.f32 0.0, %v3919
    %v3921 = vpop.f32.mrb[0].mxu0
    %v3922 = vpop.f32.mrb[0].mxu0
    %v3923 = vadd.f32 0.0, %v3922
    %v3924 = vpop.f32.mrb[0].mxu0
    %3925 = vmatprep.mubr.bf16.mxu0 0
    %3926 = vmatmul.mubr.bf16.gmra.mrb[0].mxu0 %v3708
    %v3927 = vpop.f32.mrb[0].mxu0
    %v3928 = vadd.f32 0.0, %v3927
    %v3929 = vpop.f32.mrb[0].mxu0
    %v3930 = vpop.f32.mrb[0].mxu0
    %v3931 = vadd.f32 0.0, %v3930
    %v3932 = vpop.f32.mrb[0].mxu0
    %3933 = vdwg.mxu0
    %v3934 = vmax.f32 %v3808, 0.0
    %v3935 = vmax.f32 %v3811, 0.0
    %v3936 = vmax.f32 %v3816, 0.0
    %v3937 = vmax.f32 %v3819, 0.0
    %v3938 = vmax.f32 %v3824, 0.0
    %v3939 = vmax.f32 %v3827, 0.0
    %v3940 = vmax.f32 %v3832, 0.0
    %v3941 = vmax.f32 %v3835, 0.0
    %v3942 = vmax.f32 %v3840, 0.0
    %v3943 = vmax.f32 %v3843, 0.0
    %v3944 = vmax.f32 %v3848, 0.0
    %v3945 = vmax.f32 %v3851, 0.0
    %v3946 = vmax.f32 %v3856, 0.0
    %v3947 = vmax.f32 %v3859, 0.0
    %v3948 = vmax.f32 %v3864, 0.0
    %v3949 = vmax.f32 %v3867, 0.0
    %v3950 = vmax.f32 %v3872, 0.0
    %v3951 = vmax.f32 %v3875, 0.0
    %v3952 = vmax.f32 %v3880, 0.0
    %v3953 = vmax.f32 %v3883, 0.0
    %v3954 = vmax.f32 %v3888, 0.0
    %v3955 = vmax.f32 %v3891, 0.0
    %v3956 = vmax.f32 %v3896, 0.0
    %v3957 = vmax.f32 %v3899, 0.0
    %v3958 = vmax.f32 %v3904, 0.0
    %v3959 = vmax.f32 %v3907, 0.0
    %v3960 = vmax.f32 %v3912, 0.0
    %v3961 = vmax.f32 %v3915, 0.0
    %v3962 = vmax.f32 %v3920, 0.0
    %v3963 = vmax.f32 %v3923, 0.0
    %v3964 = vmax.f32 %v3928, 0.0
    %v3965 = vmax.f32 %v3931, 0.0
    %v3966 = vpack.c.bf16 %v3935, %v3934
    %v3967 = vpack.c.bf16 %v3937, %v3936
    %v3968 = vpack.c.bf16 %v3939, %v3938
    %v3969 = vpack.c.bf16 %v3941, %v3940
    %v3970 = vpack.c.bf16 %v3943, %v3942
    %v3971 = vpack.c.bf16 %v3945, %v3944
    %v3972 = vpack.c.bf16 %v3947, %v3946
    %v3973 = vpack.c.bf16 %v3949, %v3948
    %v3974 = vpack.c.bf16 %v3951, %v3950
    %v3975 = vpack.c.bf16 %v3953, %v3952
    %v3976 = vpack.c.bf16 %v3955, %v3954
    %v3977 = vpack.c.bf16 %v3957, %v3956
    %v3978 = vpack.c.bf16 %v3959, %v3958
    %v3979 = vpack.c.bf16 %v3961, %v3960
    %v3980 = vpack.c.bf16 %v3963, %v3962
    %v3981 = vpack.c.bf16 %v3965, %v3964
    %v3982 = vld [vmem:[#allocation26] sm:$0xf]
    %v3983 = vld [vmem:[#allocation26 + $0x4] sm:$0xf]
    %v3984 = vld [vmem:[#allocation26 + $0x8] sm:$0xf]
    %v3985 = vld [vmem:[#allocation26 + $0xc] sm:$0xf]
    %v3986 = vld [vmem:[#allocation26 + $0x10] sm:$0xf]
    %v3987 = vld [vmem:[#allocation26 + $0x14] sm:$0xf]
    %v3988 = vld [vmem:[#allocation26 + $0x18] sm:$0xf]
    %v3989 = vld [vmem:[#allocation26 + $0x1c] sm:$0xf]
    %v3990 = vld [vmem:[#allocation26 + $0x20] sm:$0xf]
    %v3991 = vld [vmem:[#allocation26 + $0x24] sm:$0xf]
    %v3992 = vld [vmem:[#allocation26 + $0x28] sm:$0xf]
    %v3993 = vld [vmem:[#allocation26 + $0x2c] sm:$0xf]
    %v3994 = vld [vmem:[#allocation26 + $0x30] sm:$0xf]
    %v3995 = vld [vmem:[#allocation26 + $0x34] sm:$0xf]
    %v3996 = vld [vmem:[#allocation26 + $0x38] sm:$0xf]
    %v3997 = vld [vmem:[#allocation26 + $0x3c] sm:$0xf]
    %v4014 = vunpack.c.l.b16 %v3982
    %v4015 = vunpack.c.l.b16 %v3983
    %v4016 = vunpack.c.l.b16 %v3984
    %v4017 = vunpack.c.l.b16 %v3985
    %v4018 = vunpack.c.l.b16 %v3986
    %v4019 = vunpack.c.l.b16 %v3987
    %v4020 = vunpack.c.l.b16 %v3988
    %v4021 = vunpack.c.l.b16 %v3989
    %v4022 = vunpack.c.l.b16 %v3990
    %v4023 = vunpack.c.l.b16 %v3991
    %v4024 = vunpack.c.l.b16 %v3992
    %v4025 = vunpack.c.l.b16 %v3993
    %v4026 = vunpack.c.l.b16 %v3994
    %v4027 = vunpack.c.l.b16 %v3995
    %v4028 = vunpack.c.l.b16 %v3996
    %v4029 = vunpack.c.l.b16 %v3997
    %v4030 = vpack.c.b16 %v4015, %v4014
    %v4031 = vpack.c.b16 %v4017, %v4016
    %v4032 = vpack.c.b16 %v4019, %v4018
    %v4033 = vpack.c.b16 %v4021, %v4020
    %v4034 = vpack.c.b16 %v4023, %v4022
    %v4035 = vpack.c.b16 %v4025, %v4024
    %v4036 = vpack.c.b16 %v4027, %v4026
    %v4037 = vpack.c.b16 %v4029, %v4028
    %4046 = vmatprep.subr.bf16.mxu0 0
    %4047 = vmatpush1.bf16.msra.mxu0 %v4030
    %4048 = vmatprep.subr.bf16.mxu0 0
    %4049 = vmatpush1.bf16.msra.mxu0 %v4031
    %4050 = vmatprep.subr.bf16.mxu0 0
    %4051 = vmatpush1.bf16.msra.mxu0 %v4032
    %4052 = vmatprep.subr.bf16.mxu0 0
    %4053 = vmatpush1.bf16.msra.mxu0 %v4033
    %4054 = vmatprep.subr.bf16.mxu0 0
    %4055 = vmatpush1.bf16.msra.mxu0 %v4034
    %4056 = vmatprep.subr.bf16.mxu0 0
    %4057 = vmatpush1.bf16.msra.mxu0 %v4035
    %4058 = vmatprep.subr.bf16.mxu0 0
    %4059 = vmatpush1.bf16.msra.mxu0 %v4036
    %4060 = vmatprep.subr.bf16.mxu0 0
    %4061 = vmatpush1.bf16.msra.mxu0 %v4037
    %4062 = vmatprep.subr.bf16.mxu0 0
    %4063 = vmatpush1.bf16.msra.mxu0 0
    %4064 = vmatprep.subr.bf16.mxu0 0
    %4065 = vmatpush1.bf16.msra.mxu0 0
    %4066 = vmatprep.subr.bf16.mxu0 0
    %4067 = vmatpush1.bf16.msra.mxu0 0
    %4068 = vmatprep.subr.bf16.mxu0 0
    %4069 = vmatpush1.bf16.msra.mxu0 0
    %4070 = vmatprep.subr.bf16.mxu0 0
    %4071 = vmatpush1.bf16.msra.mxu0 0
    %4072 = vmatprep.subr.bf16.mxu0 0
    %4073 = vmatpush1.bf16.msra.mxu0 0
    %4074 = vmatprep.subr.bf16.mxu0 0
    %4075 = vmatpush1.bf16.msra.mxu0 0
    %4076 = vmatprep.subr.bf16.mxu0 0
    %4077 = vmatpush1.bf16.msra.mxu0 0
    %4078 = vmatprep.mubr.bf16.mxu0 0
    %4079 = vmatmul.mubr.bf16.gmra.mrb[0].mxu0 %v3966
    %v4080 = vpop.f32.mrb[0].mxu0
    %v4081 = vadd.f32 0.0, %v4080
    %v4082 = vpop.f32.mrb[0].mxu0
    %v4083 = vpop.f32.mrb[0].mxu0
    %v4084 = vadd.f32 0.0, %v4083
    %v4085 = vpop.f32.mrb[0].mxu0
    %4086 = vmatprep.mubr.bf16.mxu0 0
    %4087 = vmatmul.mubr.bf16.gmra.mrb[0].mxu0 %v3967
    %v4088 = vpop.f32.mrb[0].mxu0
    %v4089 = vadd.f32 0.0, %v4088
    %v4090 = vpop.f32.mrb[0].mxu0
    %v4091 = vpop.f32.mrb[0].mxu0
    %v4092 = vadd.f32 0.0, %v4091
    %v4093 = vpop.f32.mrb[0].mxu0
    %4094 = vmatprep.mubr.bf16.mxu0 0
    %4095 = vmatmul.mubr.bf16.gmra.mrb[0].mxu0 %v3968
    %v4096 = vpop.f32.mrb[0].mxu0
    %v4097 = vadd.f32 0.0, %v4096
    %v4098 = vpop.f32.mrb[0].mxu0
    %v4099 = vpop.f32.mrb[0].mxu0
    %v4100 = vadd.f32 0.0, %v4099
    %v4101 = vpop.f32.mrb[0].mxu0
    %4102 = vmatprep.mubr.bf16.mxu0 0
    %4103 = vmatmul.mubr.bf16.gmra.mrb[0].mxu0 %v3969
    %v4104 = vpop.f32.mrb[0].mxu0
    %v4105 = vadd.f32 0.0, %v4104
    %v4106 = vpop.f32.mrb[0].mxu0
    %v4107 = vpop.f32.mrb[0].mxu0
    %v4108 = vadd.f32 0.0, %v4107
    %v4109 = vpop.f32.mrb[0].mxu0
    %4110 = vmatprep.mubr.bf16.mxu0 0
    %4111 = vmatmul.mubr.bf16.gmra.mrb[0].mxu0 %v3970
    %v4112 = vpop.f32.mrb[0].mxu0
    %v4113 = vadd.f32 0.0, %v4112
    %v4114 = vpop.f32.mrb[0].mxu0
    %v4115 = vpop.f32.mrb[0].mxu0
    %v4116 = vadd.f32 0.0, %v4115
    %v4117 = vpop.f32.mrb[0].mxu0
    %4118 = vmatprep.mubr.bf16.mxu0 0
    %4119 = vmatmul.mubr.bf16.gmra.mrb[0].mxu0 %v3971
    %v4120 = vpop.f32.mrb[0].mxu0
    %v4121 = vadd.f32 0.0, %v4120
    %v4122 = vpop.f32.mrb[0].mxu0
    %v4123 = vpop.f32.mrb[0].mxu0
    %v4124 = vadd.f32 0.0, %v4123
    %v4125 = vpop.f32.mrb[0].mxu0
    %4126 = vmatprep.mubr.bf16.mxu0 0
    %4127 = vmatmul.mubr.bf16.gmra.mrb[0].mxu0 %v3972
    %v4128 = vpop.f32.mrb[0].mxu0
    %v4129 = vadd.f32 0.0, %v4128
    %v4130 = vpop.f32.mrb[0].mxu0
    %v4131 = vpop.f32.mrb[0].mxu0
    %v4132 = vadd.f32 0.0, %v4131
    %v4133 = vpop.f32.mrb[0].mxu0
    %4134 = vmatprep.mubr.bf16.mxu0 0
    %4135 = vmatmul.mubr.bf16.gmra.mrb[0].mxu0 %v3973
    %v4136 = vpop.f32.mrb[0].mxu0
    %v4137 = vadd.f32 0.0, %v4136
    %v4138 = vpop.f32.mrb[0].mxu0
    %v4139 = vpop.f32.mrb[0].mxu0
    %v4140 = vadd.f32 0.0, %v4139
    %v4141 = vpop.f32.mrb[0].mxu0
    %4142 = vmatprep.mubr.bf16.mxu0 0
    %4143 = vmatmul.mubr.bf16.gmra.mrb[0].mxu0 %v3974
    %v4144 = vpop.f32.mrb[0].mxu0
    %v4145 = vadd.f32 0.0, %v4144
    %v4146 = vpop.f32.mrb[0].mxu0
    %v4147 = vpop.f32.mrb[0].mxu0
    %v4148 = vadd.f32 0.0, %v4147
    %v4149 = vpop.f32.mrb[0].mxu0
    %4150 = vmatprep.mubr.bf16.mxu0 0
    %4151 = vmatmul.mubr.bf16.gmra.mrb[0].mxu0 %v3975
    %v4152 = vpop.f32.mrb[0].mxu0
    %v4153 = vadd.f32 0.0, %v4152
    %v4154 = vpop.f32.mrb[0].mxu0
    %v4155 = vpop.f32.mrb[0].mxu0
    %v4156 = vadd.f32 0.0, %v4155
    %v4157 = vpop.f32.mrb[0].mxu0
    %4158 = vmatprep.mubr.bf16.mxu0 0
    %4159 = vmatmul.mubr.bf16.gmra.mrb[0].mxu0 %v3976
    %v4160 = vpop.f32.mrb[0].mxu0
    %v4161 = vadd.f32 0.0, %v4160
    %v4162 = vpop.f32.mrb[0].mxu0
    %v4163 = vpop.f32.mrb[0].mxu0
    %v4164 = vadd.f32 0.0, %v4163
    %v4165 = vpop.f32.mrb[0].mxu0
    %4166 = vmatprep.mubr.bf16.mxu0 0
    %4167 = vmatmul.mubr.bf16.gmra.mrb[0].mxu0 %v3977
    %v4168 = vpop.f32.mrb[0].mxu0
    %v4169 = vadd.f32 0.0, %v4168
    %v4170 = vpop.f32.mrb[0].mxu0
    %v4171 = vpop.f32.mrb[0].mxu0
    %v4172 = vadd.f32 0.0, %v4171
    %v4173 = vpop.f32.mrb[0].mxu0
    %4174 = vmatprep.mubr.bf16.mxu0 0
    %4175 = vmatmul.mubr.bf16.gmra.mrb[0].mxu0 %v3978
    %v4176 = vpop.f32.mrb[0].mxu0
    %v4177 = vadd.f32 0.0, %v4176
    %v4178 = vpop.f32.mrb[0].mxu0
    %v4179 = vpop.f32.mrb[0].mxu0
    %v4180 = vadd.f32 0.0, %v4179
    %v4181 = vpop.f32.mrb[0].mxu0
    %4182 = vmatprep.mubr.bf16.mxu0 0
    %4183 = vmatmul.mubr.bf16.gmra.mrb[0].mxu0 %v3979
    %v4184 = vpop.f32.mrb[0].mxu0
    %v4185 = vadd.f32 0.0, %v4184
    %v4186 = vpop.f32.mrb[0].mxu0
    %v4187 = vpop.f32.mrb[0].mxu0
    %v4188 = vadd.f32 0.0, %v4187
    %v4189 = vpop.f32.mrb[0].mxu0
    %4190 = vmatprep.mubr.bf16.mxu0 0
    %4191 = vmatmul.mubr.bf16.gmra.mrb[0].mxu0 %v3980
    %v4192 = vpop.f32.mrb[0].mxu0
    %v4193 = vadd.f32 0.0, %v4192
    %v4194 = vpop.f32.mrb[0].mxu0
    %v4195 = vpop.f32.mrb[0].mxu0
    %v4196 = vadd.f32 0.0, %v4195
    %v4197 = vpop.f32.mrb[0].mxu0
    %4198 = vmatprep.mubr.bf16.mxu0 0
    %4199 = vmatmul.mubr.bf16.gmra.mrb[0].mxu0 %v3981
    %v4200 = vpop.f32.mrb[0].mxu0
    %v4201 = vadd.f32 0.0, %v4200
    %v4202 = vpop.f32.mrb[0].mxu0
    %v4203 = vpop.f32.mrb[0].mxu0
    %v4204 = vadd.f32 0.0, %v4203
    %v4205 = vpop.f32.mrb[0].mxu0
    %4206 = vdwg.mxu0
    %4207 = vst [vmem:[#allocation28] sm:$0xff] %v4081
    %4208 = vst [vmem:[#allocation28 + $0x8] sm:$0xff] %v4084
    %4209 = vst [vmem:[#allocation28 + $0x10] sm:$0xff] %v4089
    %4210 = vst [vmem:[#allocation28 + $0x18] sm:$0xff] %v4092
    %4211 = vst [vmem:[#allocation28 + $0x20] sm:$0xff] %v4097
    %4212 = vst [vmem:[#allocation28 + $0x28] sm:$0xff] %v4100
    %4213 = vst [vmem:[#allocation28 + $0x30] sm:$0xff] %v4105
    %4214 = vst [vmem:[#allocation28 + $0x38] sm:$0xff] %v4108
    %4215 = vst [vmem:[#allocation28 + $0x40] sm:$0xff] %v4113
    %4216 = vst [vmem:[#allocation28 + $0x48] sm:$0xff] %v4116
    %4217 = vst [vmem:[#allocation28 + $0x50] sm:$0xff] %v4121
    %4218 = vst [vmem:[#allocation28 + $0x58] sm:$0xff] %v4124
    %4219 = vst [vmem:[#allocation28 + $0x60] sm:$0xff] %v4129
    %4220 = vst [vmem:[#allocation28 + $0x68] sm:$0xff] %v4132
    %4221 = vst [vmem:[#allocation28 + $0x70] sm:$0xff] %v4137
    %4222 = vst [vmem:[#allocation28 + $0x78] sm:$0xff] %v4140
    %4223 = vst [vmem:[#allocation28 + $0x80] sm:$0xff] %v4145
    %4224 = vst [vmem:[#allocation28 + $0x88] sm:$0xff] %v4148
    %4225 = vst [vmem:[#allocation28 + $0x90] sm:$0xff] %v4153
    %4226 = vst [vmem:[#allocation28 + $0x98] sm:$0xff] %v4156
    %4227 = vst [vmem:[#allocation28 + $0xa0] sm:$0xff] %v4161
    %4228 = vst [vmem:[#allocation28 + $0xa8] sm:$0xff] %v4164
    %4229 = vst [vmem:[#allocation28 + $0xb0] sm:$0xff] %v4169
    %4230 = vst [vmem:[#allocation28 + $0xb8] sm:$0xff] %v4172
    %4231 = vst [vmem:[#allocation28 + $0xc0] sm:$0xff] %v4177
    %4232 = vst [vmem:[#allocation28 + $0xc8] sm:$0xff] %v4180
    %4233 = vst [vmem:[#allocation28 + $0xd0] sm:$0xff] %v4185
    %4234 = vst [vmem:[#allocation28 + $0xd8] sm:$0xff] %v4188
    %4235 = vst [vmem:[#allocation28 + $0xe0] sm:$0xff] %v4193
    %4236 = vst [vmem:[#allocation28 + $0xe8] sm:$0xff] %v4196
    %4237 = vst [vmem:[#allocation28 + $0xf0] sm:$0xff] %v4201
    %4238 = vst [vmem:[#allocation28 + $0xf8] sm:$0xff] %v4204
    // Predicated region
    $region130: #{_gin_forward_prepared.1} parent=1 // pred_check
      _
    $region131: #{_gin_forward_prepared.1} parent=1 // pred_check_branch
      %4240 = sbr.rel (0) target = $region133
    $region132: #{_gin_forward_prepared.1} parent=1 // pred_region
      %s4242 = ssub.s32 4096, 4096
      %4243 = vsyncadd [#allocation4], %s4242
      %s4244 = sshll.u32 [#allocation28], 4
      %s4245 = int_to_ptr.vmem [resolvable:$true] %s4244
      %4250 = dma.vmem_to_hbm [thread:$0]  %s4245, 4096, %s16, [#allocation4], 128, 128, 8
    $region133: #{_gin_forward_prepared.1} parent=1 // pred_fallthru
      _
    // Predicated region
    $region134: #{_gin_forward_prepared.1} parent=1 // pred_check
      _
    $region135: #{_gin_forward_prepared.1} parent=1 // pred_check_branch
      %4252 = sbr.rel (0) target = $region137
    $region136: #{_gin_forward_prepared.1} parent=1 // pred_region
      %4253 = dma.done [#allocation4], 4096
    $region137: #{_gin_forward_prepared.1} parent=1 // pred_fallthru
      _
    %4254 = vsyncpa [#allocation3], 1
    %4255 = vsyncpa [#allocation6], 1
    %4256 = vsyncpa [#allocation9], 1
    %4257 = vsyncpa [#allocation12], 1
    %4258 = vsyncpa [#allocation15], 1
    %4259 = vsyncpa [#allocation18], 1
    %4260 = vsyncpa [#allocation21], 1
    %4261 = vsyncpa [#allocation24], 1
    %4262 = vsyncpa [#allocation27], 1
    %4263 = vsyncpa [#allocation4], 1

</llo_original>
